<compile_context>
chip_gen: v6e
topology: v6e:2x2x1
jax: 0.10.0
libtpu: 0.0.40
codegen_flags: <defaults>
</compile_context>

<pallas_src>
import math

import jax
import jax.numpy as jnp
from jax.experimental import pallas as pl
from jax.experimental.pallas import tpu as pltpu

SEQ_LEN = 16
INPUT_DIM = 2
HEADS = 2
EMBED_DIM = 4
HEAD_DIM = EMBED_DIM // HEADS  # 2


def temporal_mhsa_kernel(x_ref, rel_ref, wqkv_ref, bqkv_ref, wo_ref, bo_ref, o_ref):
    # x_ref:    (INPUT_DIM * SEQ_LEN, TB)  VMEM, row index = c * SEQ_LEN + s (batch on lanes)
    # rel_ref:  (SEQ_LEN, 1)               VMEM (broadcasts over lanes/batch)
    # wqkv_ref: (INPUT_DIM, 3*EMBED_DIM)   SMEM (pre-transposed so qkv = x @ W + b)
    # bqkv_ref: (3*EMBED_DIM,)             SMEM
    # wo_ref:   (EMBED_DIM,)               SMEM
    # bo_ref:   (1,)                       SMEM
    # o_ref:    (SEQ_LEN, TB)              VMEM (lane-dense output)
    xs = [x_ref[c * SEQ_LEN:(c + 1) * SEQ_LEN, :] for c in range(INPUT_DIM)]  # each (S, TB)
    rel = rel_ref[...]                                                        # (S, 1)
    nb = xs[0].shape[1]
    scale = 1.0 / math.sqrt(HEAD_DIM)

    def proj(col):
        # One qkv output channel for all S positions x TB samples: VPU FMAs with
        # scalar weights from SMEM.
        acc = xs[0] * wqkv_ref[0, col]
        for c in range(1, INPUT_DIM):
            acc = acc + xs[c] * wqkv_ref[c, col]
        return acc + bqkv_ref[col]

    # Per-head q/k/v channels, each (S, TB).  PyTorch reshape semantics: for head h,
    # qkv columns [h*6+0:2] = q_h, [h*6+2:4] = k_h (+rel), [h*6+4:6] = v_h.
    q, k, v = [], [], []
    for h in range(HEADS):
        base = h * 3 * HEAD_DIM
        q.append([proj(base + d) for d in range(HEAD_DIM)])
        k.append([proj(base + HEAD_DIM + d) + rel for d in range(HEAD_DIM)])
        v.append([proj(base + 2 * HEAD_DIM + d) for d in range(HEAD_DIM)])

    bo = bo_ref[0]
    rows = []
    for i in range(SEQ_LEN):                      # query position (static unroll)
        acc = jnp.zeros((1, nb), jnp.float32)
        for h in range(HEADS):
            # Attention logits for query i: key axis on sublanes, batch on lanes.
            l = q[h][0][i:i + 1, :] * k[h][0]
            for d in range(1, HEAD_DIM):
                l = l + q[h][d][i:i + 1, :] * k[h][d]
            l = l * scale                         # (S, TB)
            m = jnp.max(l, axis=0, keepdims=True)             # sublane reduce
            p = jnp.exp(l - m)                                # EUP
            inv = pl.reciprocal(jnp.sum(p, axis=0, keepdims=True), approx=True)
            for d in range(HEAD_DIM):
                od = jnp.sum(p * v[h][d], axis=0, keepdims=True)   # (1, TB)
                acc = acc + od * inv * wo_ref[h * HEAD_DIM + d]
        rows.append(acc + bo)
    o_ref[...] = jnp.concatenate(rows, axis=0)    # (S, TB) dense store


def temporal_mhsa(x, wqkv, bqkv, rel, wo, bo, *, tb=128):
    """x: (B, S, C); wqkv: (C, 3*E) pre-transposed; bqkv: (3*E,); rel: (S,); wo: (E,); bo: (1,)."""
    B, S, C = x.shape
    assert S == SEQ_LEN and C == INPUT_DIM
    b_pad = pl.cdiv(B, tb) * tb

    # Lane-dense layouts: batch on lanes, flattened (channel, seq) on sublanes.
    x_t = jnp.transpose(x, (2, 1, 0)).reshape(C * S, B)        # row index = c*S + s
    if b_pad != B:
        x_t = jnp.pad(x_t, ((0, 0), (0, b_pad - B)))
    rel2 = rel.reshape(S, 1).astype(jnp.float32)

    out_t = pl.pallas_call(
        temporal_mhsa_kernel,
        out_shape=jax.ShapeDtypeStruct((S, b_pad), jnp.float32),
        grid=(b_pad // tb,),
        in_specs=[
            pl.BlockSpec((C * S, tb), lambda b: (0, b)),
            pl.BlockSpec((S, 1), lambda b: (0, 0)),
            pl.BlockSpec(memory_space=pltpu.MemorySpace.SMEM),
            pl.BlockSpec(memory_space=pltpu.MemorySpace.SMEM),
            pl.BlockSpec(memory_space=pltpu.MemorySpace.SMEM),
            pl.BlockSpec(memory_space=pltpu.MemorySpace.SMEM),
        ],
        out_specs=pl.BlockSpec((S, tb), lambda b: (0, b)),
        compiler_params=pltpu.CompilerParams(
            dimension_semantics=("parallel",),
            vmem_limit_bytes=32 * 1024 * 1024,
        ),
    )(x_t, rel2, wqkv, bqkv, wo, bo)

    # Back to the module's (B, S, 1) layout; drop batch padding.
    return out_t[:, :B].T[:, :, None]


def reference_forward(x, wqkv, bqkv, rel, wo, bo):
    """Plain-JAX replica of the PyTorch forward (for validation)."""
    B, S, _ = x.shape
    qkv = x @ wqkv + bqkv                                        # (B,S,12)
    qkv = qkv.reshape(B, S, HEADS, 3 * HEAD_DIM).transpose(0, 2, 1, 3)
    q, k, v = jnp.split(qkv, 3, axis=-1)                         # each (B,H,S,hd)
    k = k + rel.reshape(1, 1, S, 1)
    logits = jnp.einsum('bhqd,bhkd->bhqk', q, k) / math.sqrt(HEAD_DIM)
    attn = jax.nn.softmax(logits, axis=-1)
    vals = jnp.einsum('bhqk,bhkd->bhqd', attn, v)
    vals = vals.transpose(0, 2, 1, 3).reshape(B, S, EMBED_DIM)
    return vals @ wo.reshape(EMBED_DIM, 1) + bo.reshape(1, 1, 1)


if __name__ == "__main__":
    key = jax.random.PRNGKey(0)
    kx, kw1, kb1, kr, kw2, kb2 = jax.random.split(key, 6)

    B = 2
    x = jax.random.normal(kx, (B, SEQ_LEN, INPUT_DIM), dtype=jnp.float32)

    # Deterministic synthetic parameters (shapes follow the module __init__;
    # wqkv is passed pre-transposed so the kernel computes x @ W + b).
    wqkv = 0.3 * jax.random.normal(kw1, (INPUT_DIM, 3 * EMBED_DIM), dtype=jnp.float32)
    bqkv = 0.1 * jax.random.normal(kb1, (3 * EMBED_DIM,), dtype=jnp.float32)
    rel = jax.random.normal(kr, (SEQ_LEN,), dtype=jnp.float32)   # torch: (1,1,seq_len,1)
    wo = 0.3 * jax.random.normal(kw2, (EMBED_DIM,), dtype=jnp.float32)
    bo = 0.1 * jax.random.normal(kb2, (1,), dtype=jnp.float32)

    out = temporal_mhsa(x, wqkv, bqkv, rel, wo, bo)
    out = jax.block_until_ready(out)

    ref = reference_forward(x, wqkv, bqkv, rel, wo, bo)
    assert out.shape == (B, SEQ_LEN, 1)
    err = float(jnp.max(jnp.abs(out - ref)))
    # approx reciprocal in the softmax denominator -> slightly looser tolerance
    assert err < 5e-3, f"mismatch vs reference: {err}"

    print("KERNEL_OK")
</pallas_src>

<mosaic_0001>
module attributes {stable_mosaic.version = 11 : i64} {
  func.func @temporal_mhsa_kernel(%arg0: i32, %arg1: memref<32x128xf32, #tpu.memory_space<vmem>>, %arg2: memref<16x1xf32, #tpu.memory_space<vmem>>, %arg3: memref<2x12xf32, #tpu.memory_space<smem>>, %arg4: memref<12xf32, #tpu.memory_space<smem>>, %arg5: memref<4xf32, #tpu.memory_space<smem>>, %arg6: memref<1xf32, #tpu.memory_space<smem>>, %arg7: memref<16x128xf32, #tpu.memory_space<vmem>>) attributes {dimension_semantics = [#tpu.dimension_semantics<parallel>], iteration_bounds = array<i64: 1>, scalar_prefetch = 0 : i64, scratch_operands = 0 : i64, tpu.core_type = #tpu.core_type<tc>, window_params = [{transform_indices = @transform_0, window_bounds = array<i64: 32, 128>}, {pipeline_mode = #tpu.pipeline_mode<synchronous>, transform_indices = @transform_1, window_bounds = array<i64: 16, 1>}, {transform_indices = @transform_2, window_bounds = array<i64: 2, 12>}, {transform_indices = @transform_3, window_bounds = array<i64: 12>}, {transform_indices = @transform_4, window_bounds = array<i64: 4>}, {transform_indices = @transform_5, window_bounds = array<i64: 1>}, {transform_indices = @transform_6, window_bounds = array<i64: 16, 128>}]} {
    %c0 = arith.constant 0 : index
    %c0_0 = arith.constant 0 : index
    %0 = vector.load %arg1[%c0, %c0_0] : memref<32x128xf32, #tpu.memory_space<vmem>>, vector<16x128xf32>
    %c16 = arith.constant 16 : index
    %c0_1 = arith.constant 0 : index
    %1 = vector.load %arg1[%c16, %c0_1] : memref<32x128xf32, #tpu.memory_space<vmem>>, vector<16x128xf32>
    %c0_2 = arith.constant 0 : index
    %c0_3 = arith.constant 0 : index
    %2 = vector.load %arg2[%c0_2, %c0_3] : memref<16x1xf32, #tpu.memory_space<vmem>>, vector<16x1xf32>
    %c0_4 = arith.constant 0 : index
    %c0_5 = arith.constant 0 : index
    %3 = memref.load %arg3[%c0_4, %c0_5] : memref<2x12xf32, #tpu.memory_space<smem>>
    %4 = vector.broadcast %3 : f32 to vector<16x128xf32>
    %5 = arith.mulf %0, %4 : vector<16x128xf32>
    %c1 = arith.constant 1 : index
    %c0_6 = arith.constant 0 : index
    %6 = memref.load %arg3[%c1, %c0_6] : memref<2x12xf32, #tpu.memory_space<smem>>
    %7 = vector.broadcast %6 : f32 to vector<16x128xf32>
    %8 = arith.mulf %1, %7 : vector<16x128xf32>
    %9 = arith.addf %5, %8 : vector<16x128xf32>
    %c0_7 = arith.constant 0 : index
    %10 = memref.load %arg4[%c0_7] : memref<12xf32, #tpu.memory_space<smem>>
    %11 = vector.broadcast %10 : f32 to vector<16x128xf32>
    %12 = arith.addf %9, %11 : vector<16x128xf32>
    %c0_8 = arith.constant 0 : index
    %c1_9 = arith.constant 1 : index
    %13 = memref.load %arg3[%c0_8, %c1_9] : memref<2x12xf32, #tpu.memory_space<smem>>
    %14 = vector.broadcast %13 : f32 to vector<16x128xf32>
    %15 = arith.mulf %0, %14 : vector<16x128xf32>
    %c1_10 = arith.constant 1 : index
    %c1_11 = arith.constant 1 : index
    %16 = memref.load %arg3[%c1_10, %c1_11] : memref<2x12xf32, #tpu.memory_space<smem>>
    %17 = vector.broadcast %16 : f32 to vector<16x128xf32>
    %18 = arith.mulf %1, %17 : vector<16x128xf32>
    %19 = arith.addf %15, %18 : vector<16x128xf32>
    %c1_12 = arith.constant 1 : index
    %20 = memref.load %arg4[%c1_12] : memref<12xf32, #tpu.memory_space<smem>>
    %21 = vector.broadcast %20 : f32 to vector<16x128xf32>
    %22 = arith.addf %19, %21 : vector<16x128xf32>
    %c0_13 = arith.constant 0 : index
    %c2 = arith.constant 2 : index
    %23 = memref.load %arg3[%c0_13, %c2] : memref<2x12xf32, #tpu.memory_space<smem>>
    %24 = vector.broadcast %23 : f32 to vector<16x128xf32>
    %25 = arith.mulf %0, %24 : vector<16x128xf32>
    %c1_14 = arith.constant 1 : index
    %c2_15 = arith.constant 2 : index
    %26 = memref.load %arg3[%c1_14, %c2_15] : memref<2x12xf32, #tpu.memory_space<smem>>
    %27 = vector.broadcast %26 : f32 to vector<16x128xf32>
    %28 = arith.mulf %1, %27 : vector<16x128xf32>
    %29 = arith.addf %25, %28 : vector<16x128xf32>
    %c2_16 = arith.constant 2 : index
    %30 = memref.load %arg4[%c2_16] : memref<12xf32, #tpu.memory_space<smem>>
    %31 = vector.broadcast %30 : f32 to vector<16x128xf32>
    %32 = arith.addf %29, %31 : vector<16x128xf32>
    %33 = vector.broadcast %2 : vector<16x1xf32> to vector<16x128xf32>
    %34 = arith.addf %32, %33 : vector<16x128xf32>
    %c0_17 = arith.constant 0 : index
    %c3 = arith.constant 3 : index
    %35 = memref.load %arg3[%c0_17, %c3] : memref<2x12xf32, #tpu.memory_space<smem>>
    %36 = vector.broadcast %35 : f32 to vector<16x128xf32>
    %37 = arith.mulf %0, %36 : vector<16x128xf32>
    %c1_18 = arith.constant 1 : index
    %c3_19 = arith.constant 3 : index
    %38 = memref.load %arg3[%c1_18, %c3_19] : memref<2x12xf32, #tpu.memory_space<smem>>
    %39 = vector.broadcast %38 : f32 to vector<16x128xf32>
    %40 = arith.mulf %1, %39 : vector<16x128xf32>
    %41 = arith.addf %37, %40 : vector<16x128xf32>
    %c3_20 = arith.constant 3 : index
    %42 = memref.load %arg4[%c3_20] : memref<12xf32, #tpu.memory_space<smem>>
    %43 = vector.broadcast %42 : f32 to vector<16x128xf32>
    %44 = arith.addf %41, %43 : vector<16x128xf32>
    %45 = vector.broadcast %2 : vector<16x1xf32> to vector<16x128xf32>
    %46 = arith.addf %44, %45 : vector<16x128xf32>
    %c0_21 = arith.constant 0 : index
    %c4 = arith.constant 4 : index
    %47 = memref.load %arg3[%c0_21, %c4] : memref<2x12xf32, #tpu.memory_space<smem>>
    %48 = vector.broadcast %47 : f32 to vector<16x128xf32>
    %49 = arith.mulf %0, %48 : vector<16x128xf32>
    %c1_22 = arith.constant 1 : index
    %c4_23 = arith.constant 4 : index
    %50 = memref.load %arg3[%c1_22, %c4_23] : memref<2x12xf32, #tpu.memory_space<smem>>
    %51 = vector.broadcast %50 : f32 to vector<16x128xf32>
    %52 = arith.mulf %1, %51 : vector<16x128xf32>
    %53 = arith.addf %49, %52 : vector<16x128xf32>
    %c4_24 = arith.constant 4 : index
    %54 = memref.load %arg4[%c4_24] : memref<12xf32, #tpu.memory_space<smem>>
    %55 = vector.broadcast %54 : f32 to vector<16x128xf32>
    %56 = arith.addf %53, %55 : vector<16x128xf32>
    %c0_25 = arith.constant 0 : index
    %c5 = arith.constant 5 : index
    %57 = memref.load %arg3[%c0_25, %c5] : memref<2x12xf32, #tpu.memory_space<smem>>
    %58 = vector.broadcast %57 : f32 to vector<16x128xf32>
    %59 = arith.mulf %0, %58 : vector<16x128xf32>
    %c1_26 = arith.constant 1 : index
    %c5_27 = arith.constant 5 : index
    %60 = memref.load %arg3[%c1_26, %c5_27] : memref<2x12xf32, #tpu.memory_space<smem>>
    %61 = vector.broadcast %60 : f32 to vector<16x128xf32>
    %62 = arith.mulf %1, %61 : vector<16x128xf32>
    %63 = arith.addf %59, %62 : vector<16x128xf32>
    %c5_28 = arith.constant 5 : index
    %64 = memref.load %arg4[%c5_28] : memref<12xf32, #tpu.memory_space<smem>>
    %65 = vector.broadcast %64 : f32 to vector<16x128xf32>
    %66 = arith.addf %63, %65 : vector<16x128xf32>
    %c0_29 = arith.constant 0 : index
    %c6 = arith.constant 6 : index
    %67 = memref.load %arg3[%c0_29, %c6] : memref<2x12xf32, #tpu.memory_space<smem>>
    %68 = vector.broadcast %67 : f32 to vector<16x128xf32>
    %69 = arith.mulf %0, %68 : vector<16x128xf32>
    %c1_30 = arith.constant 1 : index
    %c6_31 = arith.constant 6 : index
    %70 = memref.load %arg3[%c1_30, %c6_31] : memref<2x12xf32, #tpu.memory_space<smem>>
    %71 = vector.broadcast %70 : f32 to vector<16x128xf32>
    %72 = arith.mulf %1, %71 : vector<16x128xf32>
    %73 = arith.addf %69, %72 : vector<16x128xf32>
    %c6_32 = arith.constant 6 : index
    %74 = memref.load %arg4[%c6_32] : memref<12xf32, #tpu.memory_space<smem>>
    %75 = vector.broadcast %74 : f32 to vector<16x128xf32>
    %76 = arith.addf %73, %75 : vector<16x128xf32>
    %c0_33 = arith.constant 0 : index
    %c7 = arith.constant 7 : index
    %77 = memref.load %arg3[%c0_33, %c7] : memref<2x12xf32, #tpu.memory_space<smem>>
    %78 = vector.broadcast %77 : f32 to vector<16x128xf32>
    %79 = arith.mulf %0, %78 : vector<16x128xf32>
    %c1_34 = arith.constant 1 : index
    %c7_35 = arith.constant 7 : index
    %80 = memref.load %arg3[%c1_34, %c7_35] : memref<2x12xf32, #tpu.memory_space<smem>>
    %81 = vector.broadcast %80 : f32 to vector<16x128xf32>
    %82 = arith.mulf %1, %81 : vector<16x128xf32>
    %83 = arith.addf %79, %82 : vector<16x128xf32>
    %c7_36 = arith.constant 7 : index
    %84 = memref.load %arg4[%c7_36] : memref<12xf32, #tpu.memory_space<smem>>
    %85 = vector.broadcast %84 : f32 to vector<16x128xf32>
    %86 = arith.addf %83, %85 : vector<16x128xf32>
    %c0_37 = arith.constant 0 : index
    %c8 = arith.constant 8 : index
    %87 = memref.load %arg3[%c0_37, %c8] : memref<2x12xf32, #tpu.memory_space<smem>>
    %88 = vector.broadcast %87 : f32 to vector<16x128xf32>
    %89 = arith.mulf %0, %88 : vector<16x128xf32>
    %c1_38 = arith.constant 1 : index
    %c8_39 = arith.constant 8 : index
    %90 = memref.load %arg3[%c1_38, %c8_39] : memref<2x12xf32, #tpu.memory_space<smem>>
    %91 = vector.broadcast %90 : f32 to vector<16x128xf32>
    %92 = arith.mulf %1, %91 : vector<16x128xf32>
    %93 = arith.addf %89, %92 : vector<16x128xf32>
    %c8_40 = arith.constant 8 : index
    %94 = memref.load %arg4[%c8_40] : memref<12xf32, #tpu.memory_space<smem>>
    %95 = vector.broadcast %94 : f32 to vector<16x128xf32>
    %96 = arith.addf %93, %95 : vector<16x128xf32>
    %97 = vector.broadcast %2 : vector<16x1xf32> to vector<16x128xf32>
    %98 = arith.addf %96, %97 : vector<16x128xf32>
    %c0_41 = arith.constant 0 : index
    %c9 = arith.constant 9 : index
    %99 = memref.load %arg3[%c0_41, %c9] : memref<2x12xf32, #tpu.memory_space<smem>>
    %100 = vector.broadcast %99 : f32 to vector<16x128xf32>
    %101 = arith.mulf %0, %100 : vector<16x128xf32>
    %c1_42 = arith.constant 1 : index
    %c9_43 = arith.constant 9 : index
    %102 = memref.load %arg3[%c1_42, %c9_43] : memref<2x12xf32, #tpu.memory_space<smem>>
    %103 = vector.broadcast %102 : f32 to vector<16x128xf32>
    %104 = arith.mulf %1, %103 : vector<16x128xf32>
    %105 = arith.addf %101, %104 : vector<16x128xf32>
    %c9_44 = arith.constant 9 : index
    %106 = memref.load %arg4[%c9_44] : memref<12xf32, #tpu.memory_space<smem>>
    %107 = vector.broadcast %106 : f32 to vector<16x128xf32>
    %108 = arith.addf %105, %107 : vector<16x128xf32>
    %109 = vector.broadcast %2 : vector<16x1xf32> to vector<16x128xf32>
    %110 = arith.addf %108, %109 : vector<16x128xf32>
    %c0_45 = arith.constant 0 : index
    %c10 = arith.constant 10 : index
    %111 = memref.load %arg3[%c0_45, %c10] : memref<2x12xf32, #tpu.memory_space<smem>>
    %112 = vector.broadcast %111 : f32 to vector<16x128xf32>
    %113 = arith.mulf %0, %112 : vector<16x128xf32>
    %c1_46 = arith.constant 1 : index
    %c10_47 = arith.constant 10 : index
    %114 = memref.load %arg3[%c1_46, %c10_47] : memref<2x12xf32, #tpu.memory_space<smem>>
    %115 = vector.broadcast %114 : f32 to vector<16x128xf32>
    %116 = arith.mulf %1, %115 : vector<16x128xf32>
    %117 = arith.addf %113, %116 : vector<16x128xf32>
    %c10_48 = arith.constant 10 : index
    %118 = memref.load %arg4[%c10_48] : memref<12xf32, #tpu.memory_space<smem>>
    %119 = vector.broadcast %118 : f32 to vector<16x128xf32>
    %120 = arith.addf %117, %119 : vector<16x128xf32>
    %c0_49 = arith.constant 0 : index
    %c11 = arith.constant 11 : index
    %121 = memref.load %arg3[%c0_49, %c11] : memref<2x12xf32, #tpu.memory_space<smem>>
    %122 = vector.broadcast %121 : f32 to vector<16x128xf32>
    %123 = arith.mulf %0, %122 : vector<16x128xf32>
    %c1_50 = arith.constant 1 : index
    %c11_51 = arith.constant 11 : index
    %124 = memref.load %arg3[%c1_50, %c11_51] : memref<2x12xf32, #tpu.memory_space<smem>>
    %125 = vector.broadcast %124 : f32 to vector<16x128xf32>
    %126 = arith.mulf %1, %125 : vector<16x128xf32>
    %127 = arith.addf %123, %126 : vector<16x128xf32>
    %c11_52 = arith.constant 11 : index
    %128 = memref.load %arg4[%c11_52] : memref<12xf32, #tpu.memory_space<smem>>
    %129 = vector.broadcast %128 : f32 to vector<16x128xf32>
    %130 = arith.addf %127, %129 : vector<16x128xf32>
    %c0_53 = arith.constant 0 : index
    %131 = memref.load %arg6[%c0_53] : memref<1xf32, #tpu.memory_space<smem>>
    %cst = arith.constant 0.000000e+00 : f32
    %132 = vector.broadcast %cst : f32 to vector<1x128xf32>
    %133 = vector.extract_strided_slice %12 {offsets = [0, 0], sizes = [1, 128], strides = [1, 1]} : vector<16x128xf32> to vector<1x128xf32>
    %134 = vector.broadcast %133 : vector<1x128xf32> to vector<16x128xf32>
    %135 = arith.mulf %134, %34 : vector<16x128xf32>
    %136 = vector.extract_strided_slice %22 {offsets = [0, 0], sizes = [1, 128], strides = [1, 1]} : vector<16x128xf32> to vector<1x128xf32>
    %137 = vector.broadcast %136 : vector<1x128xf32> to vector<16x128xf32>
    %138 = arith.mulf %137, %46 : vector<16x128xf32>
    %139 = arith.addf %135, %138 : vector<16x128xf32>
    %cst_54 = arith.constant 0.707106769 : f32
    %140 = vector.broadcast %cst_54 : f32 to vector<16x128xf32>
    %141 = arith.mulf %139, %140 : vector<16x128xf32>
    %cst_55 = arith.constant dense<0xFF800000> : vector<128xf32>
    %142 = vector.multi_reduction <maximumf>, %141, %cst_55 [0] : vector<16x128xf32> to vector<128xf32>
    %143 = vector.shape_cast %142 : vector<128xf32> to vector<1x128xf32>
    %144 = vector.broadcast %143 : vector<1x128xf32> to vector<16x128xf32>
    %145 = arith.subf %141, %144 : vector<16x128xf32>
    %146 = math.exp %145 : vector<16x128xf32>
    %cst_56 = arith.constant dense<0.000000e+00> : vector<128xf32>
    %147 = vector.multi_reduction <add>, %146, %cst_56 [0] : vector<16x128xf32> to vector<128xf32>
    %148 = vector.shape_cast %147 : vector<128xf32> to vector<1x128xf32>
    %149 = tpu.reciprocal %148 {approx = true} : vector<1x128xf32> -> vector<1x128xf32>
    %150 = arith.mulf %146, %56 : vector<16x128xf32>
    %cst_57 = arith.constant dense<0.000000e+00> : vector<128xf32>
    %151 = vector.multi_reduction <add>, %150, %cst_57 [0] : vector<16x128xf32> to vector<128xf32>
    %152 = vector.shape_cast %151 : vector<128xf32> to vector<1x128xf32>
    %153 = arith.mulf %152, %149 : vector<1x128xf32>
    %c0_58 = arith.constant 0 : index
    %154 = memref.load %arg5[%c0_58] : memref<4xf32, #tpu.memory_space<smem>>
    %155 = vector.broadcast %154 : f32 to vector<1x128xf32>
    %156 = arith.mulf %153, %155 : vector<1x128xf32>
    %157 = arith.addf %132, %156 : vector<1x128xf32>
    %158 = arith.mulf %146, %66 : vector<16x128xf32>
    %cst_59 = arith.constant dense<0.000000e+00> : vector<128xf32>
    %159 = vector.multi_reduction <add>, %158, %cst_59 [0] : vector<16x128xf32> to vector<128xf32>
    %160 = vector.shape_cast %159 : vector<128xf32> to vector<1x128xf32>
    %161 = arith.mulf %160, %149 : vector<1x128xf32>
    %c1_60 = arith.constant 1 : index
    %162 = memref.load %arg5[%c1_60] : memref<4xf32, #tpu.memory_space<smem>>
    %163 = vector.broadcast %162 : f32 to vector<1x128xf32>
    %164 = arith.mulf %161, %163 : vector<1x128xf32>
    %165 = arith.addf %157, %164 : vector<1x128xf32>
    %166 = vector.extract_strided_slice %76 {offsets = [0, 0], sizes = [1, 128], strides = [1, 1]} : vector<16x128xf32> to vector<1x128xf32>
    %167 = vector.broadcast %166 : vector<1x128xf32> to vector<16x128xf32>
    %168 = arith.mulf %167, %98 : vector<16x128xf32>
    %169 = vector.extract_strided_slice %86 {offsets = [0, 0], sizes = [1, 128], strides = [1, 1]} : vector<16x128xf32> to vector<1x128xf32>
    %170 = vector.broadcast %169 : vector<1x128xf32> to vector<16x128xf32>
    %171 = arith.mulf %170, %110 : vector<16x128xf32>
    %172 = arith.addf %168, %171 : vector<16x128xf32>
    %cst_61 = arith.constant 0.707106769 : f32
    %173 = vector.broadcast %cst_61 : f32 to vector<16x128xf32>
    %174 = arith.mulf %172, %173 : vector<16x128xf32>
    %cst_62 = arith.constant dense<0xFF800000> : vector<128xf32>
    %175 = vector.multi_reduction <maximumf>, %174, %cst_62 [0] : vector<16x128xf32> to vector<128xf32>
    %176 = vector.shape_cast %175 : vector<128xf32> to vector<1x128xf32>
    %177 = vector.broadcast %176 : vector<1x128xf32> to vector<16x128xf32>
    %178 = arith.subf %174, %177 : vector<16x128xf32>
    %179 = math.exp %178 : vector<16x128xf32>
    %cst_63 = arith.constant dense<0.000000e+00> : vector<128xf32>
    %180 = vector.multi_reduction <add>, %179, %cst_63 [0] : vector<16x128xf32> to vector<128xf32>
    %181 = vector.shape_cast %180 : vector<128xf32> to vector<1x128xf32>
    %182 = tpu.reciprocal %181 {approx = true} : vector<1x128xf32> -> vector<1x128xf32>
    %183 = arith.mulf %179, %120 : vector<16x128xf32>
    %cst_64 = arith.constant dense<0.000000e+00> : vector<128xf32>
    %184 = vector.multi_reduction <add>, %183, %cst_64 [0] : vector<16x128xf32> to vector<128xf32>
    %185 = vector.shape_cast %184 : vector<128xf32> to vector<1x128xf32>
    %186 = arith.mulf %185, %182 : vector<1x128xf32>
    %c2_65 = arith.constant 2 : index
    %187 = memref.load %arg5[%c2_65] : memref<4xf32, #tpu.memory_space<smem>>
    %188 = vector.broadcast %187 : f32 to vector<1x128xf32>
    %189 = arith.mulf %186, %188 : vector<1x128xf32>
    %190 = arith.addf %165, %189 : vector<1x128xf32>
    %191 = arith.mulf %179, %130 : vector<16x128xf32>
    %cst_66 = arith.constant dense<0.000000e+00> : vector<128xf32>
    %192 = vector.multi_reduction <add>, %191, %cst_66 [0] : vector<16x128xf32> to vector<128xf32>
    %193 = vector.shape_cast %192 : vector<128xf32> to vector<1x128xf32>
    %194 = arith.mulf %193, %182 : vector<1x128xf32>
    %c3_67 = arith.constant 3 : index
    %195 = memref.load %arg5[%c3_67] : memref<4xf32, #tpu.memory_space<smem>>
    %196 = vector.broadcast %195 : f32 to vector<1x128xf32>
    %197 = arith.mulf %194, %196 : vector<1x128xf32>
    %198 = arith.addf %190, %197 : vector<1x128xf32>
    %199 = vector.broadcast %131 : f32 to vector<1x128xf32>
    %200 = arith.addf %198, %199 : vector<1x128xf32>
    %cst_68 = arith.constant 0.000000e+00 : f32
    %201 = vector.broadcast %cst_68 : f32 to vector<1x128xf32>
    %202 = vector.extract_strided_slice %12 {offsets = [1, 0], sizes = [1, 128], strides = [1, 1]} : vector<16x128xf32> to vector<1x128xf32>
    %203 = vector.broadcast %202 : vector<1x128xf32> to vector<16x128xf32>
    %204 = arith.mulf %203, %34 : vector<16x128xf32>
    %205 = vector.extract_strided_slice %22 {offsets = [1, 0], sizes = [1, 128], strides = [1, 1]} : vector<16x128xf32> to vector<1x128xf32>
    %206 = vector.broadcast %205 : vector<1x128xf32> to vector<16x128xf32>
    %207 = arith.mulf %206, %46 : vector<16x128xf32>
    %208 = arith.addf %204, %207 : vector<16x128xf32>
    %cst_69 = arith.constant 0.707106769 : f32
    %209 = vector.broadcast %cst_69 : f32 to vector<16x128xf32>
    %210 = arith.mulf %208, %209 : vector<16x128xf32>
    %cst_70 = arith.constant dense<0xFF800000> : vector<128xf32>
    %211 = vector.multi_reduction <maximumf>, %210, %cst_70 [0] : vector<16x128xf32> to vector<128xf32>
    %212 = vector.shape_cast %211 : vector<128xf32> to vector<1x128xf32>
    %213 = vector.broadcast %212 : vector<1x128xf32> to vector<16x128xf32>
    %214 = arith.subf %210, %213 : vector<16x128xf32>
    %215 = math.exp %214 : vector<16x128xf32>
    %cst_71 = arith.constant dense<0.000000e+00> : vector<128xf32>
    %216 = vector.multi_reduction <add>, %215, %cst_71 [0] : vector<16x128xf32> to vector<128xf32>
    %217 = vector.shape_cast %216 : vector<128xf32> to vector<1x128xf32>
    %218 = tpu.reciprocal %217 {approx = true} : vector<1x128xf32> -> vector<1x128xf32>
    %219 = arith.mulf %215, %56 : vector<16x128xf32>
    %cst_72 = arith.constant dense<0.000000e+00> : vector<128xf32>
    %220 = vector.multi_reduction <add>, %219, %cst_72 [0] : vector<16x128xf32> to vector<128xf32>
    %221 = vector.shape_cast %220 : vector<128xf32> to vector<1x128xf32>
    %222 = arith.mulf %221, %218 : vector<1x128xf32>
    %c0_73 = arith.constant 0 : index
    %223 = memref.load %arg5[%c0_73] : memref<4xf32, #tpu.memory_space<smem>>
    %224 = vector.broadcast %223 : f32 to vector<1x128xf32>
    %225 = arith.mulf %222, %224 : vector<1x128xf32>
    %226 = arith.addf %201, %225 : vector<1x128xf32>
    %227 = arith.mulf %215, %66 : vector<16x128xf32>
    %cst_74 = arith.constant dense<0.000000e+00> : vector<128xf32>
    %228 = vector.multi_reduction <add>, %227, %cst_74 [0] : vector<16x128xf32> to vector<128xf32>
    %229 = vector.shape_cast %228 : vector<128xf32> to vector<1x128xf32>
    %230 = arith.mulf %229, %218 : vector<1x128xf32>
    %c1_75 = arith.constant 1 : index
    %231 = memref.load %arg5[%c1_75] : memref<4xf32, #tpu.memory_space<smem>>
    %232 = vector.broadcast %231 : f32 to vector<1x128xf32>
    %233 = arith.mulf %230, %232 : vector<1x128xf32>
    %234 = arith.addf %226, %233 : vector<1x128xf32>
    %235 = vector.extract_strided_slice %76 {offsets = [1, 0], sizes = [1, 128], strides = [1, 1]} : vector<16x128xf32> to vector<1x128xf32>
    %236 = vector.broadcast %235 : vector<1x128xf32> to vector<16x128xf32>
    %237 = arith.mulf %236, %98 : vector<16x128xf32>
    %238 = vector.extract_strided_slice %86 {offsets = [1, 0], sizes = [1, 128], strides = [1, 1]} : vector<16x128xf32> to vector<1x128xf32>
    %239 = vector.broadcast %238 : vector<1x128xf32> to vector<16x128xf32>
    %240 = arith.mulf %239, %110 : vector<16x128xf32>
    %241 = arith.addf %237, %240 : vector<16x128xf32>
    %cst_76 = arith.constant 0.707106769 : f32
    %242 = vector.broadcast %cst_76 : f32 to vector<16x128xf32>
    %243 = arith.mulf %241, %242 : vector<16x128xf32>
    %cst_77 = arith.constant dense<0xFF800000> : vector<128xf32>
    %244 = vector.multi_reduction <maximumf>, %243, %cst_77 [0] : vector<16x128xf32> to vector<128xf32>
    %245 = vector.shape_cast %244 : vector<128xf32> to vector<1x128xf32>
    %246 = vector.broadcast %245 : vector<1x128xf32> to vector<16x128xf32>
    %247 = arith.subf %243, %246 : vector<16x128xf32>
    %248 = math.exp %247 : vector<16x128xf32>
    %cst_78 = arith.constant dense<0.000000e+00> : vector<128xf32>
    %249 = vector.multi_reduction <add>, %248, %cst_78 [0] : vector<16x128xf32> to vector<128xf32>
    %250 = vector.shape_cast %249 : vector<128xf32> to vector<1x128xf32>
    %251 = tpu.reciprocal %250 {approx = true} : vector<1x128xf32> -> vector<1x128xf32>
    %252 = arith.mulf %248, %120 : vector<16x128xf32>
    %cst_79 = arith.constant dense<0.000000e+00> : vector<128xf32>
    %253 = vector.multi_reduction <add>, %252, %cst_79 [0] : vector<16x128xf32> to vector<128xf32>
    %254 = vector.shape_cast %253 : vector<128xf32> to vector<1x128xf32>
    %255 = arith.mulf %254, %251 : vector<1x128xf32>
    %c2_80 = arith.constant 2 : index
    %256 = memref.load %arg5[%c2_80] : memref<4xf32, #tpu.memory_space<smem>>
    %257 = vector.broadcast %256 : f32 to vector<1x128xf32>
    %258 = arith.mulf %255, %257 : vector<1x128xf32>
    %259 = arith.addf %234, %258 : vector<1x128xf32>
    %260 = arith.mulf %248, %130 : vector<16x128xf32>
    %cst_81 = arith.constant dense<0.000000e+00> : vector<128xf32>
    %261 = vector.multi_reduction <add>, %260, %cst_81 [0] : vector<16x128xf32> to vector<128xf32>
    %262 = vector.shape_cast %261 : vector<128xf32> to vector<1x128xf32>
    %263 = arith.mulf %262, %251 : vector<1x128xf32>
    %c3_82 = arith.constant 3 : index
    %264 = memref.load %arg5[%c3_82] : memref<4xf32, #tpu.memory_space<smem>>
    %265 = vector.broadcast %264 : f32 to vector<1x128xf32>
    %266 = arith.mulf %263, %265 : vector<1x128xf32>
    %267 = arith.addf %259, %266 : vector<1x128xf32>
    %268 = vector.broadcast %131 : f32 to vector<1x128xf32>
    %269 = arith.addf %267, %268 : vector<1x128xf32>
    %cst_83 = arith.constant 0.000000e+00 : f32
    %270 = vector.broadcast %cst_83 : f32 to vector<1x128xf32>
    %271 = vector.extract_strided_slice %12 {offsets = [2, 0], sizes = [1, 128], strides = [1, 1]} : vector<16x128xf32> to vector<1x128xf32>
    %272 = vector.broadcast %271 : vector<1x128xf32> to vector<16x128xf32>
    %273 = arith.mulf %272, %34 : vector<16x128xf32>
    %274 = vector.extract_strided_slice %22 {offsets = [2, 0], sizes = [1, 128], strides = [1, 1]} : vector<16x128xf32> to vector<1x128xf32>
    %275 = vector.broadcast %274 : vector<1x128xf32> to vector<16x128xf32>
    %276 = arith.mulf %275, %46 : vector<16x128xf32>
    %277 = arith.addf %273, %276 : vector<16x128xf32>
    %cst_84 = arith.constant 0.707106769 : f32
    %278 = vector.broadcast %cst_84 : f32 to vector<16x128xf32>
    %279 = arith.mulf %277, %278 : vector<16x128xf32>
    %cst_85 = arith.constant dense<0xFF800000> : vector<128xf32>
    %280 = vector.multi_reduction <maximumf>, %279, %cst_85 [0] : vector<16x128xf32> to vector<128xf32>
    %281 = vector.shape_cast %280 : vector<128xf32> to vector<1x128xf32>
    %282 = vector.broadcast %281 : vector<1x128xf32> to vector<16x128xf32>
    %283 = arith.subf %279, %282 : vector<16x128xf32>
    %284 = math.exp %283 : vector<16x128xf32>
    %cst_86 = arith.constant dense<0.000000e+00> : vector<128xf32>
    %285 = vector.multi_reduction <add>, %284, %cst_86 [0] : vector<16x128xf32> to vector<128xf32>
    %286 = vector.shape_cast %285 : vector<128xf32> to vector<1x128xf32>
    %287 = tpu.reciprocal %286 {approx = true} : vector<1x128xf32> -> vector<1x128xf32>
    %288 = arith.mulf %284, %56 : vector<16x128xf32>
    %cst_87 = arith.constant dense<0.000000e+00> : vector<128xf32>
    %289 = vector.multi_reduction <add>, %288, %cst_87 [0] : vector<16x128xf32> to vector<128xf32>
    %290 = vector.shape_cast %289 : vector<128xf32> to vector<1x128xf32>
    %291 = arith.mulf %290, %287 : vector<1x128xf32>
    %c0_88 = arith.constant 0 : index
    %292 = memref.load %arg5[%c0_88] : memref<4xf32, #tpu.memory_space<smem>>
    %293 = vector.broadcast %292 : f32 to vector<1x128xf32>
    %294 = arith.mulf %291, %293 : vector<1x128xf32>
    %295 = arith.addf %270, %294 : vector<1x128xf32>
    %296 = arith.mulf %284, %66 : vector<16x128xf32>
    %cst_89 = arith.constant dense<0.000000e+00> : vector<128xf32>
    %297 = vector.multi_reduction <add>, %296, %cst_89 [0] : vector<16x128xf32> to vector<128xf32>
    %298 = vector.shape_cast %297 : vector<128xf32> to vector<1x128xf32>
    %299 = arith.mulf %298, %287 : vector<1x128xf32>
    %c1_90 = arith.constant 1 : index
    %300 = memref.load %arg5[%c1_90] : memref<4xf32, #tpu.memory_space<smem>>
    %301 = vector.broadcast %300 : f32 to vector<1x128xf32>
    %302 = arith.mulf %299, %301 : vector<1x128xf32>
    %303 = arith.addf %295, %302 : vector<1x128xf32>
    %304 = vector.extract_strided_slice %76 {offsets = [2, 0], sizes = [1, 128], strides = [1, 1]} : vector<16x128xf32> to vector<1x128xf32>
    %305 = vector.broadcast %304 : vector<1x128xf32> to vector<16x128xf32>
    %306 = arith.mulf %305, %98 : vector<16x128xf32>
    %307 = vector.extract_strided_slice %86 {offsets = [2, 0], sizes = [1, 128], strides = [1, 1]} : vector<16x128xf32> to vector<1x128xf32>
    %308 = vector.broadcast %307 : vector<1x128xf32> to vector<16x128xf32>
    %309 = arith.mulf %308, %110 : vector<16x128xf32>
    %310 = arith.addf %306, %309 : vector<16x128xf32>
    %cst_91 = arith.constant 0.707106769 : f32
    %311 = vector.broadcast %cst_91 : f32 to vector<16x128xf32>
    %312 = arith.mulf %310, %311 : vector<16x128xf32>
    %cst_92 = arith.constant dense<0xFF800000> : vector<128xf32>
    %313 = vector.multi_reduction <maximumf>, %312, %cst_92 [0] : vector<16x128xf32> to vector<128xf32>
    %314 = vector.shape_cast %313 : vector<128xf32> to vector<1x128xf32>
    %315 = vector.broadcast %314 : vector<1x128xf32> to vector<16x128xf32>
    %316 = arith.subf %312, %315 : vector<16x128xf32>
    %317 = math.exp %316 : vector<16x128xf32>
    %cst_93 = arith.constant dense<0.000000e+00> : vector<128xf32>
    %318 = vector.multi_reduction <add>, %317, %cst_93 [0] : vector<16x128xf32> to vector<128xf32>
    %319 = vector.shape_cast %318 : vector<128xf32> to vector<1x128xf32>
    %320 = tpu.reciprocal %319 {approx = true} : vector<1x128xf32> -> vector<1x128xf32>
    %321 = arith.mulf %317, %120 : vector<16x128xf32>
    %cst_94 = arith.constant dense<0.000000e+00> : vector<128xf32>
    %322 = vector.multi_reduction <add>, %321, %cst_94 [0] : vector<16x128xf32> to vector<128xf32>
    %323 = vector.shape_cast %322 : vector<128xf32> to vector<1x128xf32>
    %324 = arith.mulf %323, %320 : vector<1x128xf32>
    %c2_95 = arith.constant 2 : index
    %325 = memref.load %arg5[%c2_95] : memref<4xf32, #tpu.memory_space<smem>>
    %326 = vector.broadcast %325 : f32 to vector<1x128xf32>
    %327 = arith.mulf %324, %326 : vector<1x128xf32>
    %328 = arith.addf %303, %327 : vector<1x128xf32>
    %329 = arith.mulf %317, %130 : vector<16x128xf32>
    %cst_96 = arith.constant dense<0.000000e+00> : vector<128xf32>
    %330 = vector.multi_reduction <add>, %329, %cst_96 [0] : vector<16x128xf32> to vector<128xf32>
    %331 = vector.shape_cast %330 : vector<128xf32> to vector<1x128xf32>
    %332 = arith.mulf %331, %320 : vector<1x128xf32>
    %c3_97 = arith.constant 3 : index
    %333 = memref.load %arg5[%c3_97] : memref<4xf32, #tpu.memory_space<smem>>
    %334 = vector.broadcast %333 : f32 to vector<1x128xf32>
    %335 = arith.mulf %332, %334 : vector<1x128xf32>
    %336 = arith.addf %328, %335 : vector<1x128xf32>
    %337 = vector.broadcast %131 : f32 to vector<1x128xf32>
    %338 = arith.addf %336, %337 : vector<1x128xf32>
    %cst_98 = arith.constant 0.000000e+00 : f32
    %339 = vector.broadcast %cst_98 : f32 to vector<1x128xf32>
    %340 = vector.extract_strided_slice %12 {offsets = [3, 0], sizes = [1, 128], strides = [1, 1]} : vector<16x128xf32> to vector<1x128xf32>
    %341 = vector.broadcast %340 : vector<1x128xf32> to vector<16x128xf32>
    %342 = arith.mulf %341, %34 : vector<16x128xf32>
    %343 = vector.extract_strided_slice %22 {offsets = [3, 0], sizes = [1, 128], strides = [1, 1]} : vector<16x128xf32> to vector<1x128xf32>
    %344 = vector.broadcast %343 : vector<1x128xf32> to vector<16x128xf32>
    %345 = arith.mulf %344, %46 : vector<16x128xf32>
    %346 = arith.addf %342, %345 : vector<16x128xf32>
    %cst_99 = arith.constant 0.707106769 : f32
    %347 = vector.broadcast %cst_99 : f32 to vector<16x128xf32>
    %348 = arith.mulf %346, %347 : vector<16x128xf32>
    %cst_100 = arith.constant dense<0xFF800000> : vector<128xf32>
    %349 = vector.multi_reduction <maximumf>, %348, %cst_100 [0] : vector<16x128xf32> to vector<128xf32>
    %350 = vector.shape_cast %349 : vector<128xf32> to vector<1x128xf32>
    %351 = vector.broadcast %350 : vector<1x128xf32> to vector<16x128xf32>
    %352 = arith.subf %348, %351 : vector<16x128xf32>
    %353 = math.exp %352 : vector<16x128xf32>
    %cst_101 = arith.constant dense<0.000000e+00> : vector<128xf32>
    %354 = vector.multi_reduction <add>, %353, %cst_101 [0] : vector<16x128xf32> to vector<128xf32>
    %355 = vector.shape_cast %354 : vector<128xf32> to vector<1x128xf32>
    %356 = tpu.reciprocal %355 {approx = true} : vector<1x128xf32> -> vector<1x128xf32>
    %357 = arith.mulf %353, %56 : vector<16x128xf32>
    %cst_102 = arith.constant dense<0.000000e+00> : vector<128xf32>
    %358 = vector.multi_reduction <add>, %357, %cst_102 [0] : vector<16x128xf32> to vector<128xf32>
    %359 = vector.shape_cast %358 : vector<128xf32> to vector<1x128xf32>
    %360 = arith.mulf %359, %356 : vector<1x128xf32>
    %c0_103 = arith.constant 0 : index
    %361 = memref.load %arg5[%c0_103] : memref<4xf32, #tpu.memory_space<smem>>
    %362 = vector.broadcast %361 : f32 to vector<1x128xf32>
    %363 = arith.mulf %360, %362 : vector<1x128xf32>
    %364 = arith.addf %339, %363 : vector<1x128xf32>
    %365 = arith.mulf %353, %66 : vector<16x128xf32>
    %cst_104 = arith.constant dense<0.000000e+00> : vector<128xf32>
    %366 = vector.multi_reduction <add>, %365, %cst_104 [0] : vector<16x128xf32> to vector<128xf32>
    %367 = vector.shape_cast %366 : vector<128xf32> to vector<1x128xf32>
    %368 = arith.mulf %367, %356 : vector<1x128xf32>
    %c1_105 = arith.constant 1 : index
    %369 = memref.load %arg5[%c1_105] : memref<4xf32, #tpu.memory_space<smem>>
    %370 = vector.broadcast %369 : f32 to vector<1x128xf32>
    %371 = arith.mulf %368, %370 : vector<1x128xf32>
    %372 = arith.addf %364, %371 : vector<1x128xf32>
    %373 = vector.extract_strided_slice %76 {offsets = [3, 0], sizes = [1, 128], strides = [1, 1]} : vector<16x128xf32> to vector<1x128xf32>
    %374 = vector.broadcast %373 : vector<1x128xf32> to vector<16x128xf32>
    %375 = arith.mulf %374, %98 : vector<16x128xf32>
    %376 = vector.extract_strided_slice %86 {offsets = [3, 0], sizes = [1, 128], strides = [1, 1]} : vector<16x128xf32> to vector<1x128xf32>
    %377 = vector.broadcast %376 : vector<1x128xf32> to vector<16x128xf32>
    %378 = arith.mulf %377, %110 : vector<16x128xf32>
    %379 = arith.addf %375, %378 : vector<16x128xf32>
    %cst_106 = arith.constant 0.707106769 : f32
    %380 = vector.broadcast %cst_106 : f32 to vector<16x128xf32>
    %381 = arith.mulf %379, %380 : vector<16x128xf32>
    %cst_107 = arith.constant dense<0xFF800000> : vector<128xf32>
    %382 = vector.multi_reduction <maximumf>, %381, %cst_107 [0] : vector<16x128xf32> to vector<128xf32>
    %383 = vector.shape_cast %382 : vector<128xf32> to vector<1x128xf32>
    %384 = vector.broadcast %383 : vector<1x128xf32> to vector<16x128xf32>
    %385 = arith.subf %381, %384 : vector<16x128xf32>
    %386 = math.exp %385 : vector<16x128xf32>
    %cst_108 = arith.constant dense<0.000000e+00> : vector<128xf32>
    %387 = vector.multi_reduction <add>, %386, %cst_108 [0] : vector<16x128xf32> to vector<128xf32>
    %388 = vector.shape_cast %387 : vector<128xf32> to vector<1x128xf32>
    %389 = tpu.reciprocal %388 {approx = true} : vector<1x128xf32> -> vector<1x128xf32>
    %390 = arith.mulf %386, %120 : vector<16x128xf32>
    %cst_109 = arith.constant dense<0.000000e+00> : vector<128xf32>
    %391 = vector.multi_reduction <add>, %390, %cst_109 [0] : vector<16x128xf32> to vector<128xf32>
    %392 = vector.shape_cast %391 : vector<128xf32> to vector<1x128xf32>
    %393 = arith.mulf %392, %389 : vector<1x128xf32>
    %c2_110 = arith.constant 2 : index
    %394 = memref.load %arg5[%c2_110] : memref<4xf32, #tpu.memory_space<smem>>
    %395 = vector.broadcast %394 : f32 to vector<1x128xf32>
    %396 = arith.mulf %393, %395 : vector<1x128xf32>
    %397 = arith.addf %372, %396 : vector<1x128xf32>
    %398 = arith.mulf %386, %130 : vector<16x128xf32>
    %cst_111 = arith.constant dense<0.000000e+00> : vector<128xf32>
    %399 = vector.multi_reduction <add>, %398, %cst_111 [0] : vector<16x128xf32> to vector<128xf32>
    %400 = vector.shape_cast %399 : vector<128xf32> to vector<1x128xf32>
    %401 = arith.mulf %400, %389 : vector<1x128xf32>
    %c3_112 = arith.constant 3 : index
    %402 = memref.load %arg5[%c3_112] : memref<4xf32, #tpu.memory_space<smem>>
    %403 = vector.broadcast %402 : f32 to vector<1x128xf32>
    %404 = arith.mulf %401, %403 : vector<1x128xf32>
    %405 = arith.addf %397, %404 : vector<1x128xf32>
    %406 = vector.broadcast %131 : f32 to vector<1x128xf32>
    %407 = arith.addf %405, %406 : vector<1x128xf32>
    %cst_113 = arith.constant 0.000000e+00 : f32
    %408 = vector.broadcast %cst_113 : f32 to vector<1x128xf32>
    %409 = vector.extract_strided_slice %12 {offsets = [4, 0], sizes = [1, 128], strides = [1, 1]} : vector<16x128xf32> to vector<1x128xf32>
    %410 = vector.broadcast %409 : vector<1x128xf32> to vector<16x128xf32>
    %411 = arith.mulf %410, %34 : vector<16x128xf32>
    %412 = vector.extract_strided_slice %22 {offsets = [4, 0], sizes = [1, 128], strides = [1, 1]} : vector<16x128xf32> to vector<1x128xf32>
    %413 = vector.broadcast %412 : vector<1x128xf32> to vector<16x128xf32>
    %414 = arith.mulf %413, %46 : vector<16x128xf32>
    %415 = arith.addf %411, %414 : vector<16x128xf32>
    %cst_114 = arith.constant 0.707106769 : f32
    %416 = vector.broadcast %cst_114 : f32 to vector<16x128xf32>
    %417 = arith.mulf %415, %416 : vector<16x128xf32>
    %cst_115 = arith.constant dense<0xFF800000> : vector<128xf32>
    %418 = vector.multi_reduction <maximumf>, %417, %cst_115 [0] : vector<16x128xf32> to vector<128xf32>
    %419 = vector.shape_cast %418 : vector<128xf32> to vector<1x128xf32>
    %420 = vector.broadcast %419 : vector<1x128xf32> to vector<16x128xf32>
    %421 = arith.subf %417, %420 : vector<16x128xf32>
    %422 = math.exp %421 : vector<16x128xf32>
    %cst_116 = arith.constant dense<0.000000e+00> : vector<128xf32>
    %423 = vector.multi_reduction <add>, %422, %cst_116 [0] : vector<16x128xf32> to vector<128xf32>
    %424 = vector.shape_cast %423 : vector<128xf32> to vector<1x128xf32>
    %425 = tpu.reciprocal %424 {approx = true} : vector<1x128xf32> -> vector<1x128xf32>
    %426 = arith.mulf %422, %56 : vector<16x128xf32>
    %cst_117 = arith.constant dense<0.000000e+00> : vector<128xf32>
    %427 = vector.multi_reduction <add>, %426, %cst_117 [0] : vector<16x128xf32> to vector<128xf32>
    %428 = vector.shape_cast %427 : vector<128xf32> to vector<1x128xf32>
    %429 = arith.mulf %428, %425 : vector<1x128xf32>
    %c0_118 = arith.constant 0 : index
    %430 = memref.load %arg5[%c0_118] : memref<4xf32, #tpu.memory_space<smem>>
    %431 = vector.broadcast %430 : f32 to vector<1x128xf32>
    %432 = arith.mulf %429, %431 : vector<1x128xf32>
    %433 = arith.addf %408, %432 : vector<1x128xf32>
    %434 = arith.mulf %422, %66 : vector<16x128xf32>
    %cst_119 = arith.constant dense<0.000000e+00> : vector<128xf32>
    %435 = vector.multi_reduction <add>, %434, %cst_119 [0] : vector<16x128xf32> to vector<128xf32>
    %436 = vector.shape_cast %435 : vector<128xf32> to vector<1x128xf32>
    %437 = arith.mulf %436, %425 : vector<1x128xf32>
    %c1_120 = arith.constant 1 : index
    %438 = memref.load %arg5[%c1_120] : memref<4xf32, #tpu.memory_space<smem>>
    %439 = vector.broadcast %438 : f32 to vector<1x128xf32>
    %440 = arith.mulf %437, %439 : vector<1x128xf32>
    %441 = arith.addf %433, %440 : vector<1x128xf32>
    %442 = vector.extract_strided_slice %76 {offsets = [4, 0], sizes = [1, 128], strides = [1, 1]} : vector<16x128xf32> to vector<1x128xf32>
    %443 = vector.broadcast %442 : vector<1x128xf32> to vector<16x128xf32>
    %444 = arith.mulf %443, %98 : vector<16x128xf32>
    %445 = vector.extract_strided_slice %86 {offsets = [4, 0], sizes = [1, 128], strides = [1, 1]} : vector<16x128xf32> to vector<1x128xf32>
    %446 = vector.broadcast %445 : vector<1x128xf32> to vector<16x128xf32>
    %447 = arith.mulf %446, %110 : vector<16x128xf32>
    %448 = arith.addf %444, %447 : vector<16x128xf32>
    %cst_121 = arith.constant 0.707106769 : f32
    %449 = vector.broadcast %cst_121 : f32 to vector<16x128xf32>
    %450 = arith.mulf %448, %449 : vector<16x128xf32>
    %cst_122 = arith.constant dense<0xFF800000> : vector<128xf32>
    %451 = vector.multi_reduction <maximumf>, %450, %cst_122 [0] : vector<16x128xf32> to vector<128xf32>
    %452 = vector.shape_cast %451 : vector<128xf32> to vector<1x128xf32>
    %453 = vector.broadcast %452 : vector<1x128xf32> to vector<16x128xf32>
    %454 = arith.subf %450, %453 : vector<16x128xf32>
    %455 = math.exp %454 : vector<16x128xf32>
    %cst_123 = arith.constant dense<0.000000e+00> : vector<128xf32>
    %456 = vector.multi_reduction <add>, %455, %cst_123 [0] : vector<16x128xf32> to vector<128xf32>
    %457 = vector.shape_cast %456 : vector<128xf32> to vector<1x128xf32>
    %458 = tpu.reciprocal %457 {approx = true} : vector<1x128xf32> -> vector<1x128xf32>
    %459 = arith.mulf %455, %120 : vector<16x128xf32>
    %cst_124 = arith.constant dense<0.000000e+00> : vector<128xf32>
    %460 = vector.multi_reduction <add>, %459, %cst_124 [0] : vector<16x128xf32> to vector<128xf32>
    %461 = vector.shape_cast %460 : vector<128xf32> to vector<1x128xf32>
    %462 = arith.mulf %461, %458 : vector<1x128xf32>
    %c2_125 = arith.constant 2 : index
    %463 = memref.load %arg5[%c2_125] : memref<4xf32, #tpu.memory_space<smem>>
    %464 = vector.broadcast %463 : f32 to vector<1x128xf32>
    %465 = arith.mulf %462, %464 : vector<1x128xf32>
    %466 = arith.addf %441, %465 : vector<1x128xf32>
    %467 = arith.mulf %455, %130 : vector<16x128xf32>
    %cst_126 = arith.constant dense<0.000000e+00> : vector<128xf32>
    %468 = vector.multi_reduction <add>, %467, %cst_126 [0] : vector<16x128xf32> to vector<128xf32>
    %469 = vector.shape_cast %468 : vector<128xf32> to vector<1x128xf32>
    %470 = arith.mulf %469, %458 : vector<1x128xf32>
    %c3_127 = arith.constant 3 : index
    %471 = memref.load %arg5[%c3_127] : memref<4xf32, #tpu.memory_space<smem>>
    %472 = vector.broadcast %471 : f32 to vector<1x128xf32>
    %473 = arith.mulf %470, %472 : vector<1x128xf32>
    %474 = arith.addf %466, %473 : vector<1x128xf32>
    %475 = vector.broadcast %131 : f32 to vector<1x128xf32>
    %476 = arith.addf %474, %475 : vector<1x128xf32>
    %cst_128 = arith.constant 0.000000e+00 : f32
    %477 = vector.broadcast %cst_128 : f32 to vector<1x128xf32>
    %478 = vector.extract_strided_slice %12 {offsets = [5, 0], sizes = [1, 128], strides = [1, 1]} : vector<16x128xf32> to vector<1x128xf32>
    %479 = vector.broadcast %478 : vector<1x128xf32> to vector<16x128xf32>
    %480 = arith.mulf %479, %34 : vector<16x128xf32>
    %481 = vector.extract_strided_slice %22 {offsets = [5, 0], sizes = [1, 128], strides = [1, 1]} : vector<16x128xf32> to vector<1x128xf32>
    %482 = vector.broadcast %481 : vector<1x128xf32> to vector<16x128xf32>
    %483 = arith.mulf %482, %46 : vector<16x128xf32>
    %484 = arith.addf %480, %483 : vector<16x128xf32>
    %cst_129 = arith.constant 0.707106769 : f32
    %485 = vector.broadcast %cst_129 : f32 to vector<16x128xf32>
    %486 = arith.mulf %484, %485 : vector<16x128xf32>
    %cst_130 = arith.constant dense<0xFF800000> : vector<128xf32>
    %487 = vector.multi_reduction <maximumf>, %486, %cst_130 [0] : vector<16x128xf32> to vector<128xf32>
    %488 = vector.shape_cast %487 : vector<128xf32> to vector<1x128xf32>
    %489 = vector.broadcast %488 : vector<1x128xf32> to vector<16x128xf32>
    %490 = arith.subf %486, %489 : vector<16x128xf32>
    %491 = math.exp %490 : vector<16x128xf32>
    %cst_131 = arith.constant dense<0.000000e+00> : vector<128xf32>
    %492 = vector.multi_reduction <add>, %491, %cst_131 [0] : vector<16x128xf32> to vector<128xf32>
    %493 = vector.shape_cast %492 : vector<128xf32> to vector<1x128xf32>
    %494 = tpu.reciprocal %493 {approx = true} : vector<1x128xf32> -> vector<1x128xf32>
    %495 = arith.mulf %491, %56 : vector<16x128xf32>
    %cst_132 = arith.constant dense<0.000000e+00> : vector<128xf32>
    %496 = vector.multi_reduction <add>, %495, %cst_132 [0] : vector<16x128xf32> to vector<128xf32>
    %497 = vector.shape_cast %496 : vector<128xf32> to vector<1x128xf32>
    %498 = arith.mulf %497, %494 : vector<1x128xf32>
    %c0_133 = arith.constant 0 : index
    %499 = memref.load %arg5[%c0_133] : memref<4xf32, #tpu.memory_space<smem>>
    %500 = vector.broadcast %499 : f32 to vector<1x128xf32>
    %501 = arith.mulf %498, %500 : vector<1x128xf32>
    %502 = arith.addf %477, %501 : vector<1x128xf32>
    %503 = arith.mulf %491, %66 : vector<16x128xf32>
    %cst_134 = arith.constant dense<0.000000e+00> : vector<128xf32>
    %504 = vector.multi_reduction <add>, %503, %cst_134 [0] : vector<16x128xf32> to vector<128xf32>
    %505 = vector.shape_cast %504 : vector<128xf32> to vector<1x128xf32>
    %506 = arith.mulf %505, %494 : vector<1x128xf32>
    %c1_135 = arith.constant 1 : index
    %507 = memref.load %arg5[%c1_135] : memref<4xf32, #tpu.memory_space<smem>>
    %508 = vector.broadcast %507 : f32 to vector<1x128xf32>
    %509 = arith.mulf %506, %508 : vector<1x128xf32>
    %510 = arith.addf %502, %509 : vector<1x128xf32>
    %511 = vector.extract_strided_slice %76 {offsets = [5, 0], sizes = [1, 128], strides = [1, 1]} : vector<16x128xf32> to vector<1x128xf32>
    %512 = vector.broadcast %511 : vector<1x128xf32> to vector<16x128xf32>
    %513 = arith.mulf %512, %98 : vector<16x128xf32>
    %514 = vector.extract_strided_slice %86 {offsets = [5, 0], sizes = [1, 128], strides = [1, 1]} : vector<16x128xf32> to vector<1x128xf32>
    %515 = vector.broadcast %514 : vector<1x128xf32> to vector<16x128xf32>
    %516 = arith.mulf %515, %110 : vector<16x128xf32>
    %517 = arith.addf %513, %516 : vector<16x128xf32>
    %cst_136 = arith.constant 0.707106769 : f32
    %518 = vector.broadcast %cst_136 : f32 to vector<16x128xf32>
    %519 = arith.mulf %517, %518 : vector<16x128xf32>
    %cst_137 = arith.constant dense<0xFF800000> : vector<128xf32>
    %520 = vector.multi_reduction <maximumf>, %519, %cst_137 [0] : vector<16x128xf32> to vector<128xf32>
    %521 = vector.shape_cast %520 : vector<128xf32> to vector<1x128xf32>
    %522 = vector.broadcast %521 : vector<1x128xf32> to vector<16x128xf32>
    %523 = arith.subf %519, %522 : vector<16x128xf32>
    %524 = math.exp %523 : vector<16x128xf32>
    %cst_138 = arith.constant dense<0.000000e+00> : vector<128xf32>
    %525 = vector.multi_reduction <add>, %524, %cst_138 [0] : vector<16x128xf32> to vector<128xf32>
    %526 = vector.shape_cast %525 : vector<128xf32> to vector<1x128xf32>
    %527 = tpu.reciprocal %526 {approx = true} : vector<1x128xf32> -> vector<1x128xf32>
    %528 = arith.mulf %524, %120 : vector<16x128xf32>
    %cst_139 = arith.constant dense<0.000000e+00> : vector<128xf32>
    %529 = vector.multi_reduction <add>, %528, %cst_139 [0] : vector<16x128xf32> to vector<128xf32>
    %530 = vector.shape_cast %529 : vector<128xf32> to vector<1x128xf32>
    %531 = arith.mulf %530, %527 : vector<1x128xf32>
    %c2_140 = arith.constant 2 : index
    %532 = memref.load %arg5[%c2_140] : memref<4xf32, #tpu.memory_space<smem>>
    %533 = vector.broadcast %532 : f32 to vector<1x128xf32>
    %534 = arith.mulf %531, %533 : vector<1x128xf32>
    %535 = arith.addf %510, %534 : vector<1x128xf32>
    %536 = arith.mulf %524, %130 : vector<16x128xf32>
    %cst_141 = arith.constant dense<0.000000e+00> : vector<128xf32>
    %537 = vector.multi_reduction <add>, %536, %cst_141 [0] : vector<16x128xf32> to vector<128xf32>
    %538 = vector.shape_cast %537 : vector<128xf32> to vector<1x128xf32>
    %539 = arith.mulf %538, %527 : vector<1x128xf32>
    %c3_142 = arith.constant 3 : index
    %540 = memref.load %arg5[%c3_142] : memref<4xf32, #tpu.memory_space<smem>>
    %541 = vector.broadcast %540 : f32 to vector<1x128xf32>
    %542 = arith.mulf %539, %541 : vector<1x128xf32>
    %543 = arith.addf %535, %542 : vector<1x128xf32>
    %544 = vector.broadcast %131 : f32 to vector<1x128xf32>
    %545 = arith.addf %543, %544 : vector<1x128xf32>
    %cst_143 = arith.constant 0.000000e+00 : f32
    %546 = vector.broadcast %cst_143 : f32 to vector<1x128xf32>
    %547 = vector.extract_strided_slice %12 {offsets = [6, 0], sizes = [1, 128], strides = [1, 1]} : vector<16x128xf32> to vector<1x128xf32>
    %548 = vector.broadcast %547 : vector<1x128xf32> to vector<16x128xf32>
    %549 = arith.mulf %548, %34 : vector<16x128xf32>
    %550 = vector.extract_strided_slice %22 {offsets = [6, 0], sizes = [1, 128], strides = [1, 1]} : vector<16x128xf32> to vector<1x128xf32>
    %551 = vector.broadcast %550 : vector<1x128xf32> to vector<16x128xf32>
    %552 = arith.mulf %551, %46 : vector<16x128xf32>
    %553 = arith.addf %549, %552 : vector<16x128xf32>
    %cst_144 = arith.constant 0.707106769 : f32
    %554 = vector.broadcast %cst_144 : f32 to vector<16x128xf32>
    %555 = arith.mulf %553, %554 : vector<16x128xf32>
    %cst_145 = arith.constant dense<0xFF800000> : vector<128xf32>
    %556 = vector.multi_reduction <maximumf>, %555, %cst_145 [0] : vector<16x128xf32> to vector<128xf32>
    %557 = vector.shape_cast %556 : vector<128xf32> to vector<1x128xf32>
    %558 = vector.broadcast %557 : vector<1x128xf32> to vector<16x128xf32>
    %559 = arith.subf %555, %558 : vector<16x128xf32>
    %560 = math.exp %559 : vector<16x128xf32>
    %cst_146 = arith.constant dense<0.000000e+00> : vector<128xf32>
    %561 = vector.multi_reduction <add>, %560, %cst_146 [0] : vector<16x128xf32> to vector<128xf32>
    %562 = vector.shape_cast %561 : vector<128xf32> to vector<1x128xf32>
    %563 = tpu.reciprocal %562 {approx = true} : vector<1x128xf32> -> vector<1x128xf32>
    %564 = arith.mulf %560, %56 : vector<16x128xf32>
    %cst_147 = arith.constant dense<0.000000e+00> : vector<128xf32>
    %565 = vector.multi_reduction <add>, %564, %cst_147 [0] : vector<16x128xf32> to vector<128xf32>
    %566 = vector.shape_cast %565 : vector<128xf32> to vector<1x128xf32>
    %567 = arith.mulf %566, %563 : vector<1x128xf32>
    %c0_148 = arith.constant 0 : index
    %568 = memref.load %arg5[%c0_148] : memref<4xf32, #tpu.memory_space<smem>>
    %569 = vector.broadcast %568 : f32 to vector<1x128xf32>
    %570 = arith.mulf %567, %569 : vector<1x128xf32>
    %571 = arith.addf %546, %570 : vector<1x128xf32>
    %572 = arith.mulf %560, %66 : vector<16x128xf32>
    %cst_149 = arith.constant dense<0.000000e+00> : vector<128xf32>
    %573 = vector.multi_reduction <add>, %572, %cst_149 [0] : vector<16x128xf32> to vector<128xf32>
    %574 = vector.shape_cast %573 : vector<128xf32> to vector<1x128xf32>
    %575 = arith.mulf %574, %563 : vector<1x128xf32>
    %c1_150 = arith.constant 1 : index
    %576 = memref.load %arg5[%c1_150] : memref<4xf32, #tpu.memory_space<smem>>
    %577 = vector.broadcast %576 : f32 to vector<1x128xf32>
    %578 = arith.mulf %575, %577 : vector<1x128xf32>
    %579 = arith.addf %571, %578 : vector<1x128xf32>
    %580 = vector.extract_strided_slice %76 {offsets = [6, 0], sizes = [1, 128], strides = [1, 1]} : vector<16x128xf32> to vector<1x128xf32>
    %581 = vector.broadcast %580 : vector<1x128xf32> to vector<16x128xf32>
    %582 = arith.mulf %581, %98 : vector<16x128xf32>
    %583 = vector.extract_strided_slice %86 {offsets = [6, 0], sizes = [1, 128], strides = [1, 1]} : vector<16x128xf32> to vector<1x128xf32>
    %584 = vector.broadcast %583 : vector<1x128xf32> to vector<16x128xf32>
    %585 = arith.mulf %584, %110 : vector<16x128xf32>
    %586 = arith.addf %582, %585 : vector<16x128xf32>
    %cst_151 = arith.constant 0.707106769 : f32
    %587 = vector.broadcast %cst_151 : f32 to vector<16x128xf32>
    %588 = arith.mulf %586, %587 : vector<16x128xf32>
    %cst_152 = arith.constant dense<0xFF800000> : vector<128xf32>
    %589 = vector.multi_reduction <maximumf>, %588, %cst_152 [0] : vector<16x128xf32> to vector<128xf32>
    %590 = vector.shape_cast %589 : vector<128xf32> to vector<1x128xf32>
    %591 = vector.broadcast %590 : vector<1x128xf32> to vector<16x128xf32>
    %592 = arith.subf %588, %591 : vector<16x128xf32>
    %593 = math.exp %592 : vector<16x128xf32>
    %cst_153 = arith.constant dense<0.000000e+00> : vector<128xf32>
    %594 = vector.multi_reduction <add>, %593, %cst_153 [0] : vector<16x128xf32> to vector<128xf32>
    %595 = vector.shape_cast %594 : vector<128xf32> to vector<1x128xf32>
    %596 = tpu.reciprocal %595 {approx = true} : vector<1x128xf32> -> vector<1x128xf32>
    %597 = arith.mulf %593, %120 : vector<16x128xf32>
    %cst_154 = arith.constant dense<0.000000e+00> : vector<128xf32>
    %598 = vector.multi_reduction <add>, %597, %cst_154 [0] : vector<16x128xf32> to vector<128xf32>
    %599 = vector.shape_cast %598 : vector<128xf32> to vector<1x128xf32>
    %600 = arith.mulf %599, %596 : vector<1x128xf32>
    %c2_155 = arith.constant 2 : index
    %601 = memref.load %arg5[%c2_155] : memref<4xf32, #tpu.memory_space<smem>>
    %602 = vector.broadcast %601 : f32 to vector<1x128xf32>
    %603 = arith.mulf %600, %602 : vector<1x128xf32>
    %604 = arith.addf %579, %603 : vector<1x128xf32>
    %605 = arith.mulf %593, %130 : vector<16x128xf32>
    %cst_156 = arith.constant dense<0.000000e+00> : vector<128xf32>
    %606 = vector.multi_reduction <add>, %605, %cst_156 [0] : vector<16x128xf32> to vector<128xf32>
    %607 = vector.shape_cast %606 : vector<128xf32> to vector<1x128xf32>
    %608 = arith.mulf %607, %596 : vector<1x128xf32>
    %c3_157 = arith.constant 3 : index
    %609 = memref.load %arg5[%c3_157] : memref<4xf32, #tpu.memory_space<smem>>
    %610 = vector.broadcast %609 : f32 to vector<1x128xf32>
    %611 = arith.mulf %608, %610 : vector<1x128xf32>
    %612 = arith.addf %604, %611 : vector<1x128xf32>
    %613 = vector.broadcast %131 : f32 to vector<1x128xf32>
    %614 = arith.addf %612, %613 : vector<1x128xf32>
    %cst_158 = arith.constant 0.000000e+00 : f32
    %615 = vector.broadcast %cst_158 : f32 to vector<1x128xf32>
    %616 = vector.extract_strided_slice %12 {offsets = [7, 0], sizes = [1, 128], strides = [1, 1]} : vector<16x128xf32> to vector<1x128xf32>
    %617 = vector.broadcast %616 : vector<1x128xf32> to vector<16x128xf32>
    %618 = arith.mulf %617, %34 : vector<16x128xf32>
    %619 = vector.extract_strided_slice %22 {offsets = [7, 0], sizes = [1, 128], strides = [1, 1]} : vector<16x128xf32> to vector<1x128xf32>
    %620 = vector.broadcast %619 : vector<1x128xf32> to vector<16x128xf32>
    %621 = arith.mulf %620, %46 : vector<16x128xf32>
    %622 = arith.addf %618, %621 : vector<16x128xf32>
    %cst_159 = arith.constant 0.707106769 : f32
    %623 = vector.broadcast %cst_159 : f32 to vector<16x128xf32>
    %624 = arith.mulf %622, %623 : vector<16x128xf32>
    %cst_160 = arith.constant dense<0xFF800000> : vector<128xf32>
    %625 = vector.multi_reduction <maximumf>, %624, %cst_160 [0] : vector<16x128xf32> to vector<128xf32>
    %626 = vector.shape_cast %625 : vector<128xf32> to vector<1x128xf32>
    %627 = vector.broadcast %626 : vector<1x128xf32> to vector<16x128xf32>
    %628 = arith.subf %624, %627 : vector<16x128xf32>
    %629 = math.exp %628 : vector<16x128xf32>
    %cst_161 = arith.constant dense<0.000000e+00> : vector<128xf32>
    %630 = vector.multi_reduction <add>, %629, %cst_161 [0] : vector<16x128xf32> to vector<128xf32>
    %631 = vector.shape_cast %630 : vector<128xf32> to vector<1x128xf32>
    %632 = tpu.reciprocal %631 {approx = true} : vector<1x128xf32> -> vector<1x128xf32>
    %633 = arith.mulf %629, %56 : vector<16x128xf32>
    %cst_162 = arith.constant dense<0.000000e+00> : vector<128xf32>
    %634 = vector.multi_reduction <add>, %633, %cst_162 [0] : vector<16x128xf32> to vector<128xf32>
    %635 = vector.shape_cast %634 : vector<128xf32> to vector<1x128xf32>
    %636 = arith.mulf %635, %632 : vector<1x128xf32>
    %c0_163 = arith.constant 0 : index
    %637 = memref.load %arg5[%c0_163] : memref<4xf32, #tpu.memory_space<smem>>
    %638 = vector.broadcast %637 : f32 to vector<1x128xf32>
    %639 = arith.mulf %636, %638 : vector<1x128xf32>
    %640 = arith.addf %615, %639 : vector<1x128xf32>
    %641 = arith.mulf %629, %66 : vector<16x128xf32>
    %cst_164 = arith.constant dense<0.000000e+00> : vector<128xf32>
    %642 = vector.multi_reduction <add>, %641, %cst_164 [0] : vector<16x128xf32> to vector<128xf32>
    %643 = vector.shape_cast %642 : vector<128xf32> to vector<1x128xf32>
    %644 = arith.mulf %643, %632 : vector<1x128xf32>
    %c1_165 = arith.constant 1 : index
    %645 = memref.load %arg5[%c1_165] : memref<4xf32, #tpu.memory_space<smem>>
    %646 = vector.broadcast %645 : f32 to vector<1x128xf32>
    %647 = arith.mulf %644, %646 : vector<1x128xf32>
    %648 = arith.addf %640, %647 : vector<1x128xf32>
    %649 = vector.extract_strided_slice %76 {offsets = [7, 0], sizes = [1, 128], strides = [1, 1]} : vector<16x128xf32> to vector<1x128xf32>
    %650 = vector.broadcast %649 : vector<1x128xf32> to vector<16x128xf32>
    %651 = arith.mulf %650, %98 : vector<16x128xf32>
    %652 = vector.extract_strided_slice %86 {offsets = [7, 0], sizes = [1, 128], strides = [1, 1]} : vector<16x128xf32> to vector<1x128xf32>
    %653 = vector.broadcast %652 : vector<1x128xf32> to vector<16x128xf32>
    %654 = arith.mulf %653, %110 : vector<16x128xf32>
    %655 = arith.addf %651, %654 : vector<16x128xf32>
    %cst_166 = arith.constant 0.707106769 : f32
    %656 = vector.broadcast %cst_166 : f32 to vector<16x128xf32>
    %657 = arith.mulf %655, %656 : vector<16x128xf32>
    %cst_167 = arith.constant dense<0xFF800000> : vector<128xf32>
    %658 = vector.multi_reduction <maximumf>, %657, %cst_167 [0] : vector<16x128xf32> to vector<128xf32>
    %659 = vector.shape_cast %658 : vector<128xf32> to vector<1x128xf32>
    %660 = vector.broadcast %659 : vector<1x128xf32> to vector<16x128xf32>
    %661 = arith.subf %657, %660 : vector<16x128xf32>
    %662 = math.exp %661 : vector<16x128xf32>
    %cst_168 = arith.constant dense<0.000000e+00> : vector<128xf32>
    %663 = vector.multi_reduction <add>, %662, %cst_168 [0] : vector<16x128xf32> to vector<128xf32>
    %664 = vector.shape_cast %663 : vector<128xf32> to vector<1x128xf32>
    %665 = tpu.reciprocal %664 {approx = true} : vector<1x128xf32> -> vector<1x128xf32>
    %666 = arith.mulf %662, %120 : vector<16x128xf32>
    %cst_169 = arith.constant dense<0.000000e+00> : vector<128xf32>
    %667 = vector.multi_reduction <add>, %666, %cst_169 [0] : vector<16x128xf32> to vector<128xf32>
    %668 = vector.shape_cast %667 : vector<128xf32> to vector<1x128xf32>
    %669 = arith.mulf %668, %665 : vector<1x128xf32>
    %c2_170 = arith.constant 2 : index
    %670 = memref.load %arg5[%c2_170] : memref<4xf32, #tpu.memory_space<smem>>
    %671 = vector.broadcast %670 : f32 to vector<1x128xf32>
    %672 = arith.mulf %669, %671 : vector<1x128xf32>
    %673 = arith.addf %648, %672 : vector<1x128xf32>
    %674 = arith.mulf %662, %130 : vector<16x128xf32>
    %cst_171 = arith.constant dense<0.000000e+00> : vector<128xf32>
    %675 = vector.multi_reduction <add>, %674, %cst_171 [0] : vector<16x128xf32> to vector<128xf32>
    %676 = vector.shape_cast %675 : vector<128xf32> to vector<1x128xf32>
    %677 = arith.mulf %676, %665 : vector<1x128xf32>
    %c3_172 = arith.constant 3 : index
    %678 = memref.load %arg5[%c3_172] : memref<4xf32, #tpu.memory_space<smem>>
    %679 = vector.broadcast %678 : f32 to vector<1x128xf32>
    %680 = arith.mulf %677, %679 : vector<1x128xf32>
    %681 = arith.addf %673, %680 : vector<1x128xf32>
    %682 = vector.broadcast %131 : f32 to vector<1x128xf32>
    %683 = arith.addf %681, %682 : vector<1x128xf32>
    %cst_173 = arith.constant 0.000000e+00 : f32
    %684 = vector.broadcast %cst_173 : f32 to vector<1x128xf32>
    %685 = vector.extract_strided_slice %12 {offsets = [8, 0], sizes = [1, 128], strides = [1, 1]} : vector<16x128xf32> to vector<1x128xf32>
    %686 = vector.broadcast %685 : vector<1x128xf32> to vector<16x128xf32>
    %687 = arith.mulf %686, %34 : vector<16x128xf32>
    %688 = vector.extract_strided_slice %22 {offsets = [8, 0], sizes = [1, 128], strides = [1, 1]} : vector<16x128xf32> to vector<1x128xf32>
    %689 = vector.broadcast %688 : vector<1x128xf32> to vector<16x128xf32>
    %690 = arith.mulf %689, %46 : vector<16x128xf32>
    %691 = arith.addf %687, %690 : vector<16x128xf32>
    %cst_174 = arith.constant 0.707106769 : f32
    %692 = vector.broadcast %cst_174 : f32 to vector<16x128xf32>
    %693 = arith.mulf %691, %692 : vector<16x128xf32>
    %cst_175 = arith.constant dense<0xFF800000> : vector<128xf32>
    %694 = vector.multi_reduction <maximumf>, %693, %cst_175 [0] : vector<16x128xf32> to vector<128xf32>
    %695 = vector.shape_cast %694 : vector<128xf32> to vector<1x128xf32>
    %696 = vector.broadcast %695 : vector<1x128xf32> to vector<16x128xf32>
    %697 = arith.subf %693, %696 : vector<16x128xf32>
    %698 = math.exp %697 : vector<16x128xf32>
    %cst_176 = arith.constant dense<0.000000e+00> : vector<128xf32>
    %699 = vector.multi_reduction <add>, %698, %cst_176 [0] : vector<16x128xf32> to vector<128xf32>
    %700 = vector.shape_cast %699 : vector<128xf32> to vector<1x128xf32>
    %701 = tpu.reciprocal %700 {approx = true} : vector<1x128xf32> -> vector<1x128xf32>
    %702 = arith.mulf %698, %56 : vector<16x128xf32>
    %cst_177 = arith.constant dense<0.000000e+00> : vector<128xf32>
    %703 = vector.multi_reduction <add>, %702, %cst_177 [0] : vector<16x128xf32> to vector<128xf32>
    %704 = vector.shape_cast %703 : vector<128xf32> to vector<1x128xf32>
    %705 = arith.mulf %704, %701 : vector<1x128xf32>
    %c0_178 = arith.constant 0 : index
    %706 = memref.load %arg5[%c0_178] : memref<4xf32, #tpu.memory_space<smem>>
    %707 = vector.broadcast %706 : f32 to vector<1x128xf32>
    %708 = arith.mulf %705, %707 : vector<1x128xf32>
    %709 = arith.addf %684, %708 : vector<1x128xf32>
    %710 = arith.mulf %698, %66 : vector<16x128xf32>
    %cst_179 = arith.constant dense<0.000000e+00> : vector<128xf32>
    %711 = vector.multi_reduction <add>, %710, %cst_179 [0] : vector<16x128xf32> to vector<128xf32>
    %712 = vector.shape_cast %711 : vector<128xf32> to vector<1x128xf32>
    %713 = arith.mulf %712, %701 : vector<1x128xf32>
    %c1_180 = arith.constant 1 : index
    %714 = memref.load %arg5[%c1_180] : memref<4xf32, #tpu.memory_space<smem>>
    %715 = vector.broadcast %714 : f32 to vector<1x128xf32>
    %716 = arith.mulf %713, %715 : vector<1x128xf32>
    %717 = arith.addf %709, %716 : vector<1x128xf32>
    %718 = vector.extract_strided_slice %76 {offsets = [8, 0], sizes = [1, 128], strides = [1, 1]} : vector<16x128xf32> to vector<1x128xf32>
    %719 = vector.broadcast %718 : vector<1x128xf32> to vector<16x128xf32>
    %720 = arith.mulf %719, %98 : vector<16x128xf32>
    %721 = vector.extract_strided_slice %86 {offsets = [8, 0], sizes = [1, 128], strides = [1, 1]} : vector<16x128xf32> to vector<1x128xf32>
    %722 = vector.broadcast %721 : vector<1x128xf32> to vector<16x128xf32>
    %723 = arith.mulf %722, %110 : vector<16x128xf32>
    %724 = arith.addf %720, %723 : vector<16x128xf32>
    %cst_181 = arith.constant 0.707106769 : f32
    %725 = vector.broadcast %cst_181 : f32 to vector<16x128xf32>
    %726 = arith.mulf %724, %725 : vector<16x128xf32>
    %cst_182 = arith.constant dense<0xFF800000> : vector<128xf32>
    %727 = vector.multi_reduction <maximumf>, %726, %cst_182 [0] : vector<16x128xf32> to vector<128xf32>
    %728 = vector.shape_cast %727 : vector<128xf32> to vector<1x128xf32>
    %729 = vector.broadcast %728 : vector<1x128xf32> to vector<16x128xf32>
    %730 = arith.subf %726, %729 : vector<16x128xf32>
    %731 = math.exp %730 : vector<16x128xf32>
    %cst_183 = arith.constant dense<0.000000e+00> : vector<128xf32>
    %732 = vector.multi_reduction <add>, %731, %cst_183 [0] : vector<16x128xf32> to vector<128xf32>
    %733 = vector.shape_cast %732 : vector<128xf32> to vector<1x128xf32>
    %734 = tpu.reciprocal %733 {approx = true} : vector<1x128xf32> -> vector<1x128xf32>
    %735 = arith.mulf %731, %120 : vector<16x128xf32>
    %cst_184 = arith.constant dense<0.000000e+00> : vector<128xf32>
    %736 = vector.multi_reduction <add>, %735, %cst_184 [0] : vector<16x128xf32> to vector<128xf32>
    %737 = vector.shape_cast %736 : vector<128xf32> to vector<1x128xf32>
    %738 = arith.mulf %737, %734 : vector<1x128xf32>
    %c2_185 = arith.constant 2 : index
    %739 = memref.load %arg5[%c2_185] : memref<4xf32, #tpu.memory_space<smem>>
    %740 = vector.broadcast %739 : f32 to vector<1x128xf32>
    %741 = arith.mulf %738, %740 : vector<1x128xf32>
    %742 = arith.addf %717, %741 : vector<1x128xf32>
    %743 = arith.mulf %731, %130 : vector<16x128xf32>
    %cst_186 = arith.constant dense<0.000000e+00> : vector<128xf32>
    %744 = vector.multi_reduction <add>, %743, %cst_186 [0] : vector<16x128xf32> to vector<128xf32>
    %745 = vector.shape_cast %744 : vector<128xf32> to vector<1x128xf32>
    %746 = arith.mulf %745, %734 : vector<1x128xf32>
    %c3_187 = arith.constant 3 : index
    %747 = memref.load %arg5[%c3_187] : memref<4xf32, #tpu.memory_space<smem>>
    %748 = vector.broadcast %747 : f32 to vector<1x128xf32>
    %749 = arith.mulf %746, %748 : vector<1x128xf32>
    %750 = arith.addf %742, %749 : vector<1x128xf32>
    %751 = vector.broadcast %131 : f32 to vector<1x128xf32>
    %752 = arith.addf %750, %751 : vector<1x128xf32>
    %cst_188 = arith.constant 0.000000e+00 : f32
    %753 = vector.broadcast %cst_188 : f32 to vector<1x128xf32>
    %754 = vector.extract_strided_slice %12 {offsets = [9, 0], sizes = [1, 128], strides = [1, 1]} : vector<16x128xf32> to vector<1x128xf32>
    %755 = vector.broadcast %754 : vector<1x128xf32> to vector<16x128xf32>
    %756 = arith.mulf %755, %34 : vector<16x128xf32>
    %757 = vector.extract_strided_slice %22 {offsets = [9, 0], sizes = [1, 128], strides = [1, 1]} : vector<16x128xf32> to vector<1x128xf32>
    %758 = vector.broadcast %757 : vector<1x128xf32> to vector<16x128xf32>
    %759 = arith.mulf %758, %46 : vector<16x128xf32>
    %760 = arith.addf %756, %759 : vector<16x128xf32>
    %cst_189 = arith.constant 0.707106769 : f32
    %761 = vector.broadcast %cst_189 : f32 to vector<16x128xf32>
    %762 = arith.mulf %760, %761 : vector<16x128xf32>
    %cst_190 = arith.constant dense<0xFF800000> : vector<128xf32>
    %763 = vector.multi_reduction <maximumf>, %762, %cst_190 [0] : vector<16x128xf32> to vector<128xf32>
    %764 = vector.shape_cast %763 : vector<128xf32> to vector<1x128xf32>
    %765 = vector.broadcast %764 : vector<1x128xf32> to vector<16x128xf32>
    %766 = arith.subf %762, %765 : vector<16x128xf32>
    %767 = math.exp %766 : vector<16x128xf32>
    %cst_191 = arith.constant dense<0.000000e+00> : vector<128xf32>
    %768 = vector.multi_reduction <add>, %767, %cst_191 [0] : vector<16x128xf32> to vector<128xf32>
    %769 = vector.shape_cast %768 : vector<128xf32> to vector<1x128xf32>
    %770 = tpu.reciprocal %769 {approx = true} : vector<1x128xf32> -> vector<1x128xf32>
    %771 = arith.mulf %767, %56 : vector<16x128xf32>
    %cst_192 = arith.constant dense<0.000000e+00> : vector<128xf32>
    %772 = vector.multi_reduction <add>, %771, %cst_192 [0] : vector<16x128xf32> to vector<128xf32>
    %773 = vector.shape_cast %772 : vector<128xf32> to vector<1x128xf32>
    %774 = arith.mulf %773, %770 : vector<1x128xf32>
    %c0_193 = arith.constant 0 : index
    %775 = memref.load %arg5[%c0_193] : memref<4xf32, #tpu.memory_space<smem>>
    %776 = vector.broadcast %775 : f32 to vector<1x128xf32>
    %777 = arith.mulf %774, %776 : vector<1x128xf32>
    %778 = arith.addf %753, %777 : vector<1x128xf32>
    %779 = arith.mulf %767, %66 : vector<16x128xf32>
    %cst_194 = arith.constant dense<0.000000e+00> : vector<128xf32>
    %780 = vector.multi_reduction <add>, %779, %cst_194 [0] : vector<16x128xf32> to vector<128xf32>
    %781 = vector.shape_cast %780 : vector<128xf32> to vector<1x128xf32>
    %782 = arith.mulf %781, %770 : vector<1x128xf32>
    %c1_195 = arith.constant 1 : index
    %783 = memref.load %arg5[%c1_195] : memref<4xf32, #tpu.memory_space<smem>>
    %784 = vector.broadcast %783 : f32 to vector<1x128xf32>
    %785 = arith.mulf %782, %784 : vector<1x128xf32>
    %786 = arith.addf %778, %785 : vector<1x128xf32>
    %787 = vector.extract_strided_slice %76 {offsets = [9, 0], sizes = [1, 128], strides = [1, 1]} : vector<16x128xf32> to vector<1x128xf32>
    %788 = vector.broadcast %787 : vector<1x128xf32> to vector<16x128xf32>
    %789 = arith.mulf %788, %98 : vector<16x128xf32>
    %790 = vector.extract_strided_slice %86 {offsets = [9, 0], sizes = [1, 128], strides = [1, 1]} : vector<16x128xf32> to vector<1x128xf32>
    %791 = vector.broadcast %790 : vector<1x128xf32> to vector<16x128xf32>
    %792 = arith.mulf %791, %110 : vector<16x128xf32>
    %793 = arith.addf %789, %792 : vector<16x128xf32>
    %cst_196 = arith.constant 0.707106769 : f32
    %794 = vector.broadcast %cst_196 : f32 to vector<16x128xf32>
    %795 = arith.mulf %793, %794 : vector<16x128xf32>
    %cst_197 = arith.constant dense<0xFF800000> : vector<128xf32>
    %796 = vector.multi_reduction <maximumf>, %795, %cst_197 [0] : vector<16x128xf32> to vector<128xf32>
    %797 = vector.shape_cast %796 : vector<128xf32> to vector<1x128xf32>
    %798 = vector.broadcast %797 : vector<1x128xf32> to vector<16x128xf32>
    %799 = arith.subf %795, %798 : vector<16x128xf32>
    %800 = math.exp %799 : vector<16x128xf32>
    %cst_198 = arith.constant dense<0.000000e+00> : vector<128xf32>
    %801 = vector.multi_reduction <add>, %800, %cst_198 [0] : vector<16x128xf32> to vector<128xf32>
    %802 = vector.shape_cast %801 : vector<128xf32> to vector<1x128xf32>
    %803 = tpu.reciprocal %802 {approx = true} : vector<1x128xf32> -> vector<1x128xf32>
    %804 = arith.mulf %800, %120 : vector<16x128xf32>
    %cst_199 = arith.constant dense<0.000000e+00> : vector<128xf32>
    %805 = vector.multi_reduction <add>, %804, %cst_199 [0] : vector<16x128xf32> to vector<128xf32>
    %806 = vector.shape_cast %805 : vector<128xf32> to vector<1x128xf32>
    %807 = arith.mulf %806, %803 : vector<1x128xf32>
    %c2_200 = arith.constant 2 : index
    %808 = memref.load %arg5[%c2_200] : memref<4xf32, #tpu.memory_space<smem>>
    %809 = vector.broadcast %808 : f32 to vector<1x128xf32>
    %810 = arith.mulf %807, %809 : vector<1x128xf32>
    %811 = arith.addf %786, %810 : vector<1x128xf32>
    %812 = arith.mulf %800, %130 : vector<16x128xf32>
    %cst_201 = arith.constant dense<0.000000e+00> : vector<128xf32>
    %813 = vector.multi_reduction <add>, %812, %cst_201 [0] : vector<16x128xf32> to vector<128xf32>
    %814 = vector.shape_cast %813 : vector<128xf32> to vector<1x128xf32>
    %815 = arith.mulf %814, %803 : vector<1x128xf32>
    %c3_202 = arith.constant 3 : index
    %816 = memref.load %arg5[%c3_202] : memref<4xf32, #tpu.memory_space<smem>>
    %817 = vector.broadcast %816 : f32 to vector<1x128xf32>
    %818 = arith.mulf %815, %817 : vector<1x128xf32>
    %819 = arith.addf %811, %818 : vector<1x128xf32>
    %820 = vector.broadcast %131 : f32 to vector<1x128xf32>
    %821 = arith.addf %819, %820 : vector<1x128xf32>
    %cst_203 = arith.constant 0.000000e+00 : f32
    %822 = vector.broadcast %cst_203 : f32 to vector<1x128xf32>
    %823 = vector.extract_strided_slice %12 {offsets = [10, 0], sizes = [1, 128], strides = [1, 1]} : vector<16x128xf32> to vector<1x128xf32>
    %824 = vector.broadcast %823 : vector<1x128xf32> to vector<16x128xf32>
    %825 = arith.mulf %824, %34 : vector<16x128xf32>
    %826 = vector.extract_strided_slice %22 {offsets = [10, 0], sizes = [1, 128], strides = [1, 1]} : vector<16x128xf32> to vector<1x128xf32>
    %827 = vector.broadcast %826 : vector<1x128xf32> to vector<16x128xf32>
    %828 = arith.mulf %827, %46 : vector<16x128xf32>
    %829 = arith.addf %825, %828 : vector<16x128xf32>
    %cst_204 = arith.constant 0.707106769 : f32
    %830 = vector.broadcast %cst_204 : f32 to vector<16x128xf32>
    %831 = arith.mulf %829, %830 : vector<16x128xf32>
    %cst_205 = arith.constant dense<0xFF800000> : vector<128xf32>
    %832 = vector.multi_reduction <maximumf>, %831, %cst_205 [0] : vector<16x128xf32> to vector<128xf32>
    %833 = vector.shape_cast %832 : vector<128xf32> to vector<1x128xf32>
    %834 = vector.broadcast %833 : vector<1x128xf32> to vector<16x128xf32>
    %835 = arith.subf %831, %834 : vector<16x128xf32>
    %836 = math.exp %835 : vector<16x128xf32>
    %cst_206 = arith.constant dense<0.000000e+00> : vector<128xf32>
    %837 = vector.multi_reduction <add>, %836, %cst_206 [0] : vector<16x128xf32> to vector<128xf32>
    %838 = vector.shape_cast %837 : vector<128xf32> to vector<1x128xf32>
    %839 = tpu.reciprocal %838 {approx = true} : vector<1x128xf32> -> vector<1x128xf32>
    %840 = arith.mulf %836, %56 : vector<16x128xf32>
    %cst_207 = arith.constant dense<0.000000e+00> : vector<128xf32>
    %841 = vector.multi_reduction <add>, %840, %cst_207 [0] : vector<16x128xf32> to vector<128xf32>
    %842 = vector.shape_cast %841 : vector<128xf32> to vector<1x128xf32>
    %843 = arith.mulf %842, %839 : vector<1x128xf32>
    %c0_208 = arith.constant 0 : index
    %844 = memref.load %arg5[%c0_208] : memref<4xf32, #tpu.memory_space<smem>>
    %845 = vector.broadcast %844 : f32 to vector<1x128xf32>
    %846 = arith.mulf %843, %845 : vector<1x128xf32>
    %847 = arith.addf %822, %846 : vector<1x128xf32>
    %848 = arith.mulf %836, %66 : vector<16x128xf32>
    %cst_209 = arith.constant dense<0.000000e+00> : vector<128xf32>
    %849 = vector.multi_reduction <add>, %848, %cst_209 [0] : vector<16x128xf32> to vector<128xf32>
    %850 = vector.shape_cast %849 : vector<128xf32> to vector<1x128xf32>
    %851 = arith.mulf %850, %839 : vector<1x128xf32>
    %c1_210 = arith.constant 1 : index
    %852 = memref.load %arg5[%c1_210] : memref<4xf32, #tpu.memory_space<smem>>
    %853 = vector.broadcast %852 : f32 to vector<1x128xf32>
    %854 = arith.mulf %851, %853 : vector<1x128xf32>
    %855 = arith.addf %847, %854 : vector<1x128xf32>
    %856 = vector.extract_strided_slice %76 {offsets = [10, 0], sizes = [1, 128], strides = [1, 1]} : vector<16x128xf32> to vector<1x128xf32>
    %857 = vector.broadcast %856 : vector<1x128xf32> to vector<16x128xf32>
    %858 = arith.mulf %857, %98 : vector<16x128xf32>
    %859 = vector.extract_strided_slice %86 {offsets = [10, 0], sizes = [1, 128], strides = [1, 1]} : vector<16x128xf32> to vector<1x128xf32>
    %860 = vector.broadcast %859 : vector<1x128xf32> to vector<16x128xf32>
    %861 = arith.mulf %860, %110 : vector<16x128xf32>
    %862 = arith.addf %858, %861 : vector<16x128xf32>
    %cst_211 = arith.constant 0.707106769 : f32
    %863 = vector.broadcast %cst_211 : f32 to vector<16x128xf32>
    %864 = arith.mulf %862, %863 : vector<16x128xf32>
    %cst_212 = arith.constant dense<0xFF800000> : vector<128xf32>
    %865 = vector.multi_reduction <maximumf>, %864, %cst_212 [0] : vector<16x128xf32> to vector<128xf32>
    %866 = vector.shape_cast %865 : vector<128xf32> to vector<1x128xf32>
    %867 = vector.broadcast %866 : vector<1x128xf32> to vector<16x128xf32>
    %868 = arith.subf %864, %867 : vector<16x128xf32>
    %869 = math.exp %868 : vector<16x128xf32>
    %cst_213 = arith.constant dense<0.000000e+00> : vector<128xf32>
    %870 = vector.multi_reduction <add>, %869, %cst_213 [0] : vector<16x128xf32> to vector<128xf32>
    %871 = vector.shape_cast %870 : vector<128xf32> to vector<1x128xf32>
    %872 = tpu.reciprocal %871 {approx = true} : vector<1x128xf32> -> vector<1x128xf32>
    %873 = arith.mulf %869, %120 : vector<16x128xf32>
    %cst_214 = arith.constant dense<0.000000e+00> : vector<128xf32>
    %874 = vector.multi_reduction <add>, %873, %cst_214 [0] : vector<16x128xf32> to vector<128xf32>
    %875 = vector.shape_cast %874 : vector<128xf32> to vector<1x128xf32>
    %876 = arith.mulf %875, %872 : vector<1x128xf32>
    %c2_215 = arith.constant 2 : index
    %877 = memref.load %arg5[%c2_215] : memref<4xf32, #tpu.memory_space<smem>>
    %878 = vector.broadcast %877 : f32 to vector<1x128xf32>
    %879 = arith.mulf %876, %878 : vector<1x128xf32>
    %880 = arith.addf %855, %879 : vector<1x128xf32>
    %881 = arith.mulf %869, %130 : vector<16x128xf32>
    %cst_216 = arith.constant dense<0.000000e+00> : vector<128xf32>
    %882 = vector.multi_reduction <add>, %881, %cst_216 [0] : vector<16x128xf32> to vector<128xf32>
    %883 = vector.shape_cast %882 : vector<128xf32> to vector<1x128xf32>
    %884 = arith.mulf %883, %872 : vector<1x128xf32>
    %c3_217 = arith.constant 3 : index
    %885 = memref.load %arg5[%c3_217] : memref<4xf32, #tpu.memory_space<smem>>
    %886 = vector.broadcast %885 : f32 to vector<1x128xf32>
    %887 = arith.mulf %884, %886 : vector<1x128xf32>
    %888 = arith.addf %880, %887 : vector<1x128xf32>
    %889 = vector.broadcast %131 : f32 to vector<1x128xf32>
    %890 = arith.addf %888, %889 : vector<1x128xf32>
    %cst_218 = arith.constant 0.000000e+00 : f32
    %891 = vector.broadcast %cst_218 : f32 to vector<1x128xf32>
    %892 = vector.extract_strided_slice %12 {offsets = [11, 0], sizes = [1, 128], strides = [1, 1]} : vector<16x128xf32> to vector<1x128xf32>
    %893 = vector.broadcast %892 : vector<1x128xf32> to vector<16x128xf32>
    %894 = arith.mulf %893, %34 : vector<16x128xf32>
    %895 = vector.extract_strided_slice %22 {offsets = [11, 0], sizes = [1, 128], strides = [1, 1]} : vector<16x128xf32> to vector<1x128xf32>
    %896 = vector.broadcast %895 : vector<1x128xf32> to vector<16x128xf32>
    %897 = arith.mulf %896, %46 : vector<16x128xf32>
    %898 = arith.addf %894, %897 : vector<16x128xf32>
    %cst_219 = arith.constant 0.707106769 : f32
    %899 = vector.broadcast %cst_219 : f32 to vector<16x128xf32>
    %900 = arith.mulf %898, %899 : vector<16x128xf32>
    %cst_220 = arith.constant dense<0xFF800000> : vector<128xf32>
    %901 = vector.multi_reduction <maximumf>, %900, %cst_220 [0] : vector<16x128xf32> to vector<128xf32>
    %902 = vector.shape_cast %901 : vector<128xf32> to vector<1x128xf32>
    %903 = vector.broadcast %902 : vector<1x128xf32> to vector<16x128xf32>
    %904 = arith.subf %900, %903 : vector<16x128xf32>
    %905 = math.exp %904 : vector<16x128xf32>
    %cst_221 = arith.constant dense<0.000000e+00> : vector<128xf32>
    %906 = vector.multi_reduction <add>, %905, %cst_221 [0] : vector<16x128xf32> to vector<128xf32>
    %907 = vector.shape_cast %906 : vector<128xf32> to vector<1x128xf32>
    %908 = tpu.reciprocal %907 {approx = true} : vector<1x128xf32> -> vector<1x128xf32>
    %909 = arith.mulf %905, %56 : vector<16x128xf32>
    %cst_222 = arith.constant dense<0.000000e+00> : vector<128xf32>
    %910 = vector.multi_reduction <add>, %909, %cst_222 [0] : vector<16x128xf32> to vector<128xf32>
    %911 = vector.shape_cast %910 : vector<128xf32> to vector<1x128xf32>
    %912 = arith.mulf %911, %908 : vector<1x128xf32>
    %c0_223 = arith.constant 0 : index
    %913 = memref.load %arg5[%c0_223] : memref<4xf32, #tpu.memory_space<smem>>
    %914 = vector.broadcast %913 : f32 to vector<1x128xf32>
    %915 = arith.mulf %912, %914 : vector<1x128xf32>
    %916 = arith.addf %891, %915 : vector<1x128xf32>
    %917 = arith.mulf %905, %66 : vector<16x128xf32>
    %cst_224 = arith.constant dense<0.000000e+00> : vector<128xf32>
    %918 = vector.multi_reduction <add>, %917, %cst_224 [0] : vector<16x128xf32> to vector<128xf32>
    %919 = vector.shape_cast %918 : vector<128xf32> to vector<1x128xf32>
    %920 = arith.mulf %919, %908 : vector<1x128xf32>
    %c1_225 = arith.constant 1 : index
    %921 = memref.load %arg5[%c1_225] : memref<4xf32, #tpu.memory_space<smem>>
    %922 = vector.broadcast %921 : f32 to vector<1x128xf32>
    %923 = arith.mulf %920, %922 : vector<1x128xf32>
    %924 = arith.addf %916, %923 : vector<1x128xf32>
    %925 = vector.extract_strided_slice %76 {offsets = [11, 0], sizes = [1, 128], strides = [1, 1]} : vector<16x128xf32> to vector<1x128xf32>
    %926 = vector.broadcast %925 : vector<1x128xf32> to vector<16x128xf32>
    %927 = arith.mulf %926, %98 : vector<16x128xf32>
    %928 = vector.extract_strided_slice %86 {offsets = [11, 0], sizes = [1, 128], strides = [1, 1]} : vector<16x128xf32> to vector<1x128xf32>
    %929 = vector.broadcast %928 : vector<1x128xf32> to vector<16x128xf32>
    %930 = arith.mulf %929, %110 : vector<16x128xf32>
    %931 = arith.addf %927, %930 : vector<16x128xf32>
    %cst_226 = arith.constant 0.707106769 : f32
    %932 = vector.broadcast %cst_226 : f32 to vector<16x128xf32>
    %933 = arith.mulf %931, %932 : vector<16x128xf32>
    %cst_227 = arith.constant dense<0xFF800000> : vector<128xf32>
    %934 = vector.multi_reduction <maximumf>, %933, %cst_227 [0] : vector<16x128xf32> to vector<128xf32>
    %935 = vector.shape_cast %934 : vector<128xf32> to vector<1x128xf32>
    %936 = vector.broadcast %935 : vector<1x128xf32> to vector<16x128xf32>
    %937 = arith.subf %933, %936 : vector<16x128xf32>
    %938 = math.exp %937 : vector<16x128xf32>
    %cst_228 = arith.constant dense<0.000000e+00> : vector<128xf32>
    %939 = vector.multi_reduction <add>, %938, %cst_228 [0] : vector<16x128xf32> to vector<128xf32>
    %940 = vector.shape_cast %939 : vector<128xf32> to vector<1x128xf32>
    %941 = tpu.reciprocal %940 {approx = true} : vector<1x128xf32> -> vector<1x128xf32>
    %942 = arith.mulf %938, %120 : vector<16x128xf32>
    %cst_229 = arith.constant dense<0.000000e+00> : vector<128xf32>
    %943 = vector.multi_reduction <add>, %942, %cst_229 [0] : vector<16x128xf32> to vector<128xf32>
    %944 = vector.shape_cast %943 : vector<128xf32> to vector<1x128xf32>
    %945 = arith.mulf %944, %941 : vector<1x128xf32>
    %c2_230 = arith.constant 2 : index
    %946 = memref.load %arg5[%c2_230] : memref<4xf32, #tpu.memory_space<smem>>
    %947 = vector.broadcast %946 : f32 to vector<1x128xf32>
    %948 = arith.mulf %945, %947 : vector<1x128xf32>
    %949 = arith.addf %924, %948 : vector<1x128xf32>
    %950 = arith.mulf %938, %130 : vector<16x128xf32>
    %cst_231 = arith.constant dense<0.000000e+00> : vector<128xf32>
    %951 = vector.multi_reduction <add>, %950, %cst_231 [0] : vector<16x128xf32> to vector<128xf32>
    %952 = vector.shape_cast %951 : vector<128xf32> to vector<1x128xf32>
    %953 = arith.mulf %952, %941 : vector<1x128xf32>
    %c3_232 = arith.constant 3 : index
    %954 = memref.load %arg5[%c3_232] : memref<4xf32, #tpu.memory_space<smem>>
    %955 = vector.broadcast %954 : f32 to vector<1x128xf32>
    %956 = arith.mulf %953, %955 : vector<1x128xf32>
    %957 = arith.addf %949, %956 : vector<1x128xf32>
    %958 = vector.broadcast %131 : f32 to vector<1x128xf32>
    %959 = arith.addf %957, %958 : vector<1x128xf32>
    %cst_233 = arith.constant 0.000000e+00 : f32
    %960 = vector.broadcast %cst_233 : f32 to vector<1x128xf32>
    %961 = vector.extract_strided_slice %12 {offsets = [12, 0], sizes = [1, 128], strides = [1, 1]} : vector<16x128xf32> to vector<1x128xf32>
    %962 = vector.broadcast %961 : vector<1x128xf32> to vector<16x128xf32>
    %963 = arith.mulf %962, %34 : vector<16x128xf32>
    %964 = vector.extract_strided_slice %22 {offsets = [12, 0], sizes = [1, 128], strides = [1, 1]} : vector<16x128xf32> to vector<1x128xf32>
    %965 = vector.broadcast %964 : vector<1x128xf32> to vector<16x128xf32>
    %966 = arith.mulf %965, %46 : vector<16x128xf32>
    %967 = arith.addf %963, %966 : vector<16x128xf32>
    %cst_234 = arith.constant 0.707106769 : f32
    %968 = vector.broadcast %cst_234 : f32 to vector<16x128xf32>
    %969 = arith.mulf %967, %968 : vector<16x128xf32>
    %cst_235 = arith.constant dense<0xFF800000> : vector<128xf32>
    %970 = vector.multi_reduction <maximumf>, %969, %cst_235 [0] : vector<16x128xf32> to vector<128xf32>
    %971 = vector.shape_cast %970 : vector<128xf32> to vector<1x128xf32>
    %972 = vector.broadcast %971 : vector<1x128xf32> to vector<16x128xf32>
    %973 = arith.subf %969, %972 : vector<16x128xf32>
    %974 = math.exp %973 : vector<16x128xf32>
    %cst_236 = arith.constant dense<0.000000e+00> : vector<128xf32>
    %975 = vector.multi_reduction <add>, %974, %cst_236 [0] : vector<16x128xf32> to vector<128xf32>
    %976 = vector.shape_cast %975 : vector<128xf32> to vector<1x128xf32>
    %977 = tpu.reciprocal %976 {approx = true} : vector<1x128xf32> -> vector<1x128xf32>
    %978 = arith.mulf %974, %56 : vector<16x128xf32>
    %cst_237 = arith.constant dense<0.000000e+00> : vector<128xf32>
    %979 = vector.multi_reduction <add>, %978, %cst_237 [0] : vector<16x128xf32> to vector<128xf32>
    %980 = vector.shape_cast %979 : vector<128xf32> to vector<1x128xf32>
    %981 = arith.mulf %980, %977 : vector<1x128xf32>
    %c0_238 = arith.constant 0 : index
    %982 = memref.load %arg5[%c0_238] : memref<4xf32, #tpu.memory_space<smem>>
    %983 = vector.broadcast %982 : f32 to vector<1x128xf32>
    %984 = arith.mulf %981, %983 : vector<1x128xf32>
    %985 = arith.addf %960, %984 : vector<1x128xf32>
    %986 = arith.mulf %974, %66 : vector<16x128xf32>
    %cst_239 = arith.constant dense<0.000000e+00> : vector<128xf32>
    %987 = vector.multi_reduction <add>, %986, %cst_239 [0] : vector<16x128xf32> to vector<128xf32>
    %988 = vector.shape_cast %987 : vector<128xf32> to vector<1x128xf32>
    %989 = arith.mulf %988, %977 : vector<1x128xf32>
    %c1_240 = arith.constant 1 : index
    %990 = memref.load %arg5[%c1_240] : memref<4xf32, #tpu.memory_space<smem>>
    %991 = vector.broadcast %990 : f32 to vector<1x128xf32>
    %992 = arith.mulf %989, %991 : vector<1x128xf32>
    %993 = arith.addf %985, %992 : vector<1x128xf32>
    %994 = vector.extract_strided_slice %76 {offsets = [12, 0], sizes = [1, 128], strides = [1, 1]} : vector<16x128xf32> to vector<1x128xf32>
    %995 = vector.broadcast %994 : vector<1x128xf32> to vector<16x128xf32>
    %996 = arith.mulf %995, %98 : vector<16x128xf32>
    %997 = vector.extract_strided_slice %86 {offsets = [12, 0], sizes = [1, 128], strides = [1, 1]} : vector<16x128xf32> to vector<1x128xf32>
    %998 = vector.broadcast %997 : vector<1x128xf32> to vector<16x128xf32>
    %999 = arith.mulf %998, %110 : vector<16x128xf32>
    %1000 = arith.addf %996, %999 : vector<16x128xf32>
    %cst_241 = arith.constant 0.707106769 : f32
    %1001 = vector.broadcast %cst_241 : f32 to vector<16x128xf32>
    %1002 = arith.mulf %1000, %1001 : vector<16x128xf32>
    %cst_242 = arith.constant dense<0xFF800000> : vector<128xf32>
    %1003 = vector.multi_reduction <maximumf>, %1002, %cst_242 [0] : vector<16x128xf32> to vector<128xf32>
    %1004 = vector.shape_cast %1003 : vector<128xf32> to vector<1x128xf32>
    %1005 = vector.broadcast %1004 : vector<1x128xf32> to vector<16x128xf32>
    %1006 = arith.subf %1002, %1005 : vector<16x128xf32>
    %1007 = math.exp %1006 : vector<16x128xf32>
    %cst_243 = arith.constant dense<0.000000e+00> : vector<128xf32>
    %1008 = vector.multi_reduction <add>, %1007, %cst_243 [0] : vector<16x128xf32> to vector<128xf32>
    %1009 = vector.shape_cast %1008 : vector<128xf32> to vector<1x128xf32>
    %1010 = tpu.reciprocal %1009 {approx = true} : vector<1x128xf32> -> vector<1x128xf32>
    %1011 = arith.mulf %1007, %120 : vector<16x128xf32>
    %cst_244 = arith.constant dense<0.000000e+00> : vector<128xf32>
    %1012 = vector.multi_reduction <add>, %1011, %cst_244 [0] : vector<16x128xf32> to vector<128xf32>
    %1013 = vector.shape_cast %1012 : vector<128xf32> to vector<1x128xf32>
    %1014 = arith.mulf %1013, %1010 : vector<1x128xf32>
    %c2_245 = arith.constant 2 : index
    %1015 = memref.load %arg5[%c2_245] : memref<4xf32, #tpu.memory_space<smem>>
    %1016 = vector.broadcast %1015 : f32 to vector<1x128xf32>
    %1017 = arith.mulf %1014, %1016 : vector<1x128xf32>
    %1018 = arith.addf %993, %1017 : vector<1x128xf32>
    %1019 = arith.mulf %1007, %130 : vector<16x128xf32>
    %cst_246 = arith.constant dense<0.000000e+00> : vector<128xf32>
    %1020 = vector.multi_reduction <add>, %1019, %cst_246 [0] : vector<16x128xf32> to vector<128xf32>
    %1021 = vector.shape_cast %1020 : vector<128xf32> to vector<1x128xf32>
    %1022 = arith.mulf %1021, %1010 : vector<1x128xf32>
    %c3_247 = arith.constant 3 : index
    %1023 = memref.load %arg5[%c3_247] : memref<4xf32, #tpu.memory_space<smem>>
    %1024 = vector.broadcast %1023 : f32 to vector<1x128xf32>
    %1025 = arith.mulf %1022, %1024 : vector<1x128xf32>
    %1026 = arith.addf %1018, %1025 : vector<1x128xf32>
    %1027 = vector.broadcast %131 : f32 to vector<1x128xf32>
    %1028 = arith.addf %1026, %1027 : vector<1x128xf32>
    %cst_248 = arith.constant 0.000000e+00 : f32
    %1029 = vector.broadcast %cst_248 : f32 to vector<1x128xf32>
    %1030 = vector.extract_strided_slice %12 {offsets = [13, 0], sizes = [1, 128], strides = [1, 1]} : vector<16x128xf32> to vector<1x128xf32>
    %1031 = vector.broadcast %1030 : vector<1x128xf32> to vector<16x128xf32>
    %1032 = arith.mulf %1031, %34 : vector<16x128xf32>
    %1033 = vector.extract_strided_slice %22 {offsets = [13, 0], sizes = [1, 128], strides = [1, 1]} : vector<16x128xf32> to vector<1x128xf32>
    %1034 = vector.broadcast %1033 : vector<1x128xf32> to vector<16x128xf32>
    %1035 = arith.mulf %1034, %46 : vector<16x128xf32>
    %1036 = arith.addf %1032, %1035 : vector<16x128xf32>
    %cst_249 = arith.constant 0.707106769 : f32
    %1037 = vector.broadcast %cst_249 : f32 to vector<16x128xf32>
    %1038 = arith.mulf %1036, %1037 : vector<16x128xf32>
    %cst_250 = arith.constant dense<0xFF800000> : vector<128xf32>
    %1039 = vector.multi_reduction <maximumf>, %1038, %cst_250 [0] : vector<16x128xf32> to vector<128xf32>
    %1040 = vector.shape_cast %1039 : vector<128xf32> to vector<1x128xf32>
    %1041 = vector.broadcast %1040 : vector<1x128xf32> to vector<16x128xf32>
    %1042 = arith.subf %1038, %1041 : vector<16x128xf32>
    %1043 = math.exp %1042 : vector<16x128xf32>
    %cst_251 = arith.constant dense<0.000000e+00> : vector<128xf32>
    %1044 = vector.multi_reduction <add>, %1043, %cst_251 [0] : vector<16x128xf32> to vector<128xf32>
    %1045 = vector.shape_cast %1044 : vector<128xf32> to vector<1x128xf32>
    %1046 = tpu.reciprocal %1045 {approx = true} : vector<1x128xf32> -> vector<1x128xf32>
    %1047 = arith.mulf %1043, %56 : vector<16x128xf32>
    %cst_252 = arith.constant dense<0.000000e+00> : vector<128xf32>
    %1048 = vector.multi_reduction <add>, %1047, %cst_252 [0] : vector<16x128xf32> to vector<128xf32>
    %1049 = vector.shape_cast %1048 : vector<128xf32> to vector<1x128xf32>
    %1050 = arith.mulf %1049, %1046 : vector<1x128xf32>
    %c0_253 = arith.constant 0 : index
    %1051 = memref.load %arg5[%c0_253] : memref<4xf32, #tpu.memory_space<smem>>
    %1052 = vector.broadcast %1051 : f32 to vector<1x128xf32>
    %1053 = arith.mulf %1050, %1052 : vector<1x128xf32>
    %1054 = arith.addf %1029, %1053 : vector<1x128xf32>
    %1055 = arith.mulf %1043, %66 : vector<16x128xf32>
    %cst_254 = arith.constant dense<0.000000e+00> : vector<128xf32>
    %1056 = vector.multi_reduction <add>, %1055, %cst_254 [0] : vector<16x128xf32> to vector<128xf32>
    %1057 = vector.shape_cast %1056 : vector<128xf32> to vector<1x128xf32>
    %1058 = arith.mulf %1057, %1046 : vector<1x128xf32>
    %c1_255 = arith.constant 1 : index
    %1059 = memref.load %arg5[%c1_255] : memref<4xf32, #tpu.memory_space<smem>>
    %1060 = vector.broadcast %1059 : f32 to vector<1x128xf32>
    %1061 = arith.mulf %1058, %1060 : vector<1x128xf32>
    %1062 = arith.addf %1054, %1061 : vector<1x128xf32>
    %1063 = vector.extract_strided_slice %76 {offsets = [13, 0], sizes = [1, 128], strides = [1, 1]} : vector<16x128xf32> to vector<1x128xf32>
    %1064 = vector.broadcast %1063 : vector<1x128xf32> to vector<16x128xf32>
    %1065 = arith.mulf %1064, %98 : vector<16x128xf32>
    %1066 = vector.extract_strided_slice %86 {offsets = [13, 0], sizes = [1, 128], strides = [1, 1]} : vector<16x128xf32> to vector<1x128xf32>
    %1067 = vector.broadcast %1066 : vector<1x128xf32> to vector<16x128xf32>
    %1068 = arith.mulf %1067, %110 : vector<16x128xf32>
    %1069 = arith.addf %1065, %1068 : vector<16x128xf32>
    %cst_256 = arith.constant 0.707106769 : f32
    %1070 = vector.broadcast %cst_256 : f32 to vector<16x128xf32>
    %1071 = arith.mulf %1069, %1070 : vector<16x128xf32>
    %cst_257 = arith.constant dense<0xFF800000> : vector<128xf32>
    %1072 = vector.multi_reduction <maximumf>, %1071, %cst_257 [0] : vector<16x128xf32> to vector<128xf32>
    %1073 = vector.shape_cast %1072 : vector<128xf32> to vector<1x128xf32>
    %1074 = vector.broadcast %1073 : vector<1x128xf32> to vector<16x128xf32>
    %1075 = arith.subf %1071, %1074 : vector<16x128xf32>
    %1076 = math.exp %1075 : vector<16x128xf32>
    %cst_258 = arith.constant dense<0.000000e+00> : vector<128xf32>
    %1077 = vector.multi_reduction <add>, %1076, %cst_258 [0] : vector<16x128xf32> to vector<128xf32>
    %1078 = vector.shape_cast %1077 : vector<128xf32> to vector<1x128xf32>
    %1079 = tpu.reciprocal %1078 {approx = true} : vector<1x128xf32> -> vector<1x128xf32>
    %1080 = arith.mulf %1076, %120 : vector<16x128xf32>
    %cst_259 = arith.constant dense<0.000000e+00> : vector<128xf32>
    %1081 = vector.multi_reduction <add>, %1080, %cst_259 [0] : vector<16x128xf32> to vector<128xf32>
    %1082 = vector.shape_cast %1081 : vector<128xf32> to vector<1x128xf32>
    %1083 = arith.mulf %1082, %1079 : vector<1x128xf32>
    %c2_260 = arith.constant 2 : index
    %1084 = memref.load %arg5[%c2_260] : memref<4xf32, #tpu.memory_space<smem>>
    %1085 = vector.broadcast %1084 : f32 to vector<1x128xf32>
    %1086 = arith.mulf %1083, %1085 : vector<1x128xf32>
    %1087 = arith.addf %1062, %1086 : vector<1x128xf32>
    %1088 = arith.mulf %1076, %130 : vector<16x128xf32>
    %cst_261 = arith.constant dense<0.000000e+00> : vector<128xf32>
    %1089 = vector.multi_reduction <add>, %1088, %cst_261 [0] : vector<16x128xf32> to vector<128xf32>
    %1090 = vector.shape_cast %1089 : vector<128xf32> to vector<1x128xf32>
    %1091 = arith.mulf %1090, %1079 : vector<1x128xf32>
    %c3_262 = arith.constant 3 : index
    %1092 = memref.load %arg5[%c3_262] : memref<4xf32, #tpu.memory_space<smem>>
    %1093 = vector.broadcast %1092 : f32 to vector<1x128xf32>
    %1094 = arith.mulf %1091, %1093 : vector<1x128xf32>
    %1095 = arith.addf %1087, %1094 : vector<1x128xf32>
    %1096 = vector.broadcast %131 : f32 to vector<1x128xf32>
    %1097 = arith.addf %1095, %1096 : vector<1x128xf32>
    %cst_263 = arith.constant 0.000000e+00 : f32
    %1098 = vector.broadcast %cst_263 : f32 to vector<1x128xf32>
    %1099 = vector.extract_strided_slice %12 {offsets = [14, 0], sizes = [1, 128], strides = [1, 1]} : vector<16x128xf32> to vector<1x128xf32>
    %1100 = vector.broadcast %1099 : vector<1x128xf32> to vector<16x128xf32>
    %1101 = arith.mulf %1100, %34 : vector<16x128xf32>
    %1102 = vector.extract_strided_slice %22 {offsets = [14, 0], sizes = [1, 128], strides = [1, 1]} : vector<16x128xf32> to vector<1x128xf32>
    %1103 = vector.broadcast %1102 : vector<1x128xf32> to vector<16x128xf32>
    %1104 = arith.mulf %1103, %46 : vector<16x128xf32>
    %1105 = arith.addf %1101, %1104 : vector<16x128xf32>
    %cst_264 = arith.constant 0.707106769 : f32
    %1106 = vector.broadcast %cst_264 : f32 to vector<16x128xf32>
    %1107 = arith.mulf %1105, %1106 : vector<16x128xf32>
    %cst_265 = arith.constant dense<0xFF800000> : vector<128xf32>
    %1108 = vector.multi_reduction <maximumf>, %1107, %cst_265 [0] : vector<16x128xf32> to vector<128xf32>
    %1109 = vector.shape_cast %1108 : vector<128xf32> to vector<1x128xf32>
    %1110 = vector.broadcast %1109 : vector<1x128xf32> to vector<16x128xf32>
    %1111 = arith.subf %1107, %1110 : vector<16x128xf32>
    %1112 = math.exp %1111 : vector<16x128xf32>
    %cst_266 = arith.constant dense<0.000000e+00> : vector<128xf32>
    %1113 = vector.multi_reduction <add>, %1112, %cst_266 [0] : vector<16x128xf32> to vector<128xf32>
    %1114 = vector.shape_cast %1113 : vector<128xf32> to vector<1x128xf32>
    %1115 = tpu.reciprocal %1114 {approx = true} : vector<1x128xf32> -> vector<1x128xf32>
    %1116 = arith.mulf %1112, %56 : vector<16x128xf32>
    %cst_267 = arith.constant dense<0.000000e+00> : vector<128xf32>
    %1117 = vector.multi_reduction <add>, %1116, %cst_267 [0] : vector<16x128xf32> to vector<128xf32>
    %1118 = vector.shape_cast %1117 : vector<128xf32> to vector<1x128xf32>
    %1119 = arith.mulf %1118, %1115 : vector<1x128xf32>
    %c0_268 = arith.constant 0 : index
    %1120 = memref.load %arg5[%c0_268] : memref<4xf32, #tpu.memory_space<smem>>
    %1121 = vector.broadcast %1120 : f32 to vector<1x128xf32>
    %1122 = arith.mulf %1119, %1121 : vector<1x128xf32>
    %1123 = arith.addf %1098, %1122 : vector<1x128xf32>
    %1124 = arith.mulf %1112, %66 : vector<16x128xf32>
    %cst_269 = arith.constant dense<0.000000e+00> : vector<128xf32>
    %1125 = vector.multi_reduction <add>, %1124, %cst_269 [0] : vector<16x128xf32> to vector<128xf32>
    %1126 = vector.shape_cast %1125 : vector<128xf32> to vector<1x128xf32>
    %1127 = arith.mulf %1126, %1115 : vector<1x128xf32>
    %c1_270 = arith.constant 1 : index
    %1128 = memref.load %arg5[%c1_270] : memref<4xf32, #tpu.memory_space<smem>>
    %1129 = vector.broadcast %1128 : f32 to vector<1x128xf32>
    %1130 = arith.mulf %1127, %1129 : vector<1x128xf32>
    %1131 = arith.addf %1123, %1130 : vector<1x128xf32>
    %1132 = vector.extract_strided_slice %76 {offsets = [14, 0], sizes = [1, 128], strides = [1, 1]} : vector<16x128xf32> to vector<1x128xf32>
    %1133 = vector.broadcast %1132 : vector<1x128xf32> to vector<16x128xf32>
    %1134 = arith.mulf %1133, %98 : vector<16x128xf32>
    %1135 = vector.extract_strided_slice %86 {offsets = [14, 0], sizes = [1, 128], strides = [1, 1]} : vector<16x128xf32> to vector<1x128xf32>
    %1136 = vector.broadcast %1135 : vector<1x128xf32> to vector<16x128xf32>
    %1137 = arith.mulf %1136, %110 : vector<16x128xf32>
    %1138 = arith.addf %1134, %1137 : vector<16x128xf32>
    %cst_271 = arith.constant 0.707106769 : f32
    %1139 = vector.broadcast %cst_271 : f32 to vector<16x128xf32>
    %1140 = arith.mulf %1138, %1139 : vector<16x128xf32>
    %cst_272 = arith.constant dense<0xFF800000> : vector<128xf32>
    %1141 = vector.multi_reduction <maximumf>, %1140, %cst_272 [0] : vector<16x128xf32> to vector<128xf32>
    %1142 = vector.shape_cast %1141 : vector<128xf32> to vector<1x128xf32>
    %1143 = vector.broadcast %1142 : vector<1x128xf32> to vector<16x128xf32>
    %1144 = arith.subf %1140, %1143 : vector<16x128xf32>
    %1145 = math.exp %1144 : vector<16x128xf32>
    %cst_273 = arith.constant dense<0.000000e+00> : vector<128xf32>
    %1146 = vector.multi_reduction <add>, %1145, %cst_273 [0] : vector<16x128xf32> to vector<128xf32>
    %1147 = vector.shape_cast %1146 : vector<128xf32> to vector<1x128xf32>
    %1148 = tpu.reciprocal %1147 {approx = true} : vector<1x128xf32> -> vector<1x128xf32>
    %1149 = arith.mulf %1145, %120 : vector<16x128xf32>
    %cst_274 = arith.constant dense<0.000000e+00> : vector<128xf32>
    %1150 = vector.multi_reduction <add>, %1149, %cst_274 [0] : vector<16x128xf32> to vector<128xf32>
    %1151 = vector.shape_cast %1150 : vector<128xf32> to vector<1x128xf32>
    %1152 = arith.mulf %1151, %1148 : vector<1x128xf32>
    %c2_275 = arith.constant 2 : index
    %1153 = memref.load %arg5[%c2_275] : memref<4xf32, #tpu.memory_space<smem>>
    %1154 = vector.broadcast %1153 : f32 to vector<1x128xf32>
    %1155 = arith.mulf %1152, %1154 : vector<1x128xf32>
    %1156 = arith.addf %1131, %1155 : vector<1x128xf32>
    %1157 = arith.mulf %1145, %130 : vector<16x128xf32>
    %cst_276 = arith.constant dense<0.000000e+00> : vector<128xf32>
    %1158 = vector.multi_reduction <add>, %1157, %cst_276 [0] : vector<16x128xf32> to vector<128xf32>
    %1159 = vector.shape_cast %1158 : vector<128xf32> to vector<1x128xf32>
    %1160 = arith.mulf %1159, %1148 : vector<1x128xf32>
    %c3_277 = arith.constant 3 : index
    %1161 = memref.load %arg5[%c3_277] : memref<4xf32, #tpu.memory_space<smem>>
    %1162 = vector.broadcast %1161 : f32 to vector<1x128xf32>
    %1163 = arith.mulf %1160, %1162 : vector<1x128xf32>
    %1164 = arith.addf %1156, %1163 : vector<1x128xf32>
    %1165 = vector.broadcast %131 : f32 to vector<1x128xf32>
    %1166 = arith.addf %1164, %1165 : vector<1x128xf32>
    %cst_278 = arith.constant 0.000000e+00 : f32
    %1167 = vector.broadcast %cst_278 : f32 to vector<1x128xf32>
    %1168 = vector.extract_strided_slice %12 {offsets = [15, 0], sizes = [1, 128], strides = [1, 1]} : vector<16x128xf32> to vector<1x128xf32>
    %1169 = vector.broadcast %1168 : vector<1x128xf32> to vector<16x128xf32>
    %1170 = arith.mulf %1169, %34 : vector<16x128xf32>
    %1171 = vector.extract_strided_slice %22 {offsets = [15, 0], sizes = [1, 128], strides = [1, 1]} : vector<16x128xf32> to vector<1x128xf32>
    %1172 = vector.broadcast %1171 : vector<1x128xf32> to vector<16x128xf32>
    %1173 = arith.mulf %1172, %46 : vector<16x128xf32>
    %1174 = arith.addf %1170, %1173 : vector<16x128xf32>
    %cst_279 = arith.constant 0.707106769 : f32
    %1175 = vector.broadcast %cst_279 : f32 to vector<16x128xf32>
    %1176 = arith.mulf %1174, %1175 : vector<16x128xf32>
    %cst_280 = arith.constant dense<0xFF800000> : vector<128xf32>
    %1177 = vector.multi_reduction <maximumf>, %1176, %cst_280 [0] : vector<16x128xf32> to vector<128xf32>
    %1178 = vector.shape_cast %1177 : vector<128xf32> to vector<1x128xf32>
    %1179 = vector.broadcast %1178 : vector<1x128xf32> to vector<16x128xf32>
    %1180 = arith.subf %1176, %1179 : vector<16x128xf32>
    %1181 = math.exp %1180 : vector<16x128xf32>
    %cst_281 = arith.constant dense<0.000000e+00> : vector<128xf32>
    %1182 = vector.multi_reduction <add>, %1181, %cst_281 [0] : vector<16x128xf32> to vector<128xf32>
    %1183 = vector.shape_cast %1182 : vector<128xf32> to vector<1x128xf32>
    %1184 = tpu.reciprocal %1183 {approx = true} : vector<1x128xf32> -> vector<1x128xf32>
    %1185 = arith.mulf %1181, %56 : vector<16x128xf32>
    %cst_282 = arith.constant dense<0.000000e+00> : vector<128xf32>
    %1186 = vector.multi_reduction <add>, %1185, %cst_282 [0] : vector<16x128xf32> to vector<128xf32>
    %1187 = vector.shape_cast %1186 : vector<128xf32> to vector<1x128xf32>
    %1188 = arith.mulf %1187, %1184 : vector<1x128xf32>
    %c0_283 = arith.constant 0 : index
    %1189 = memref.load %arg5[%c0_283] : memref<4xf32, #tpu.memory_space<smem>>
    %1190 = vector.broadcast %1189 : f32 to vector<1x128xf32>
    %1191 = arith.mulf %1188, %1190 : vector<1x128xf32>
    %1192 = arith.addf %1167, %1191 : vector<1x128xf32>
    %1193 = arith.mulf %1181, %66 : vector<16x128xf32>
    %cst_284 = arith.constant dense<0.000000e+00> : vector<128xf32>
    %1194 = vector.multi_reduction <add>, %1193, %cst_284 [0] : vector<16x128xf32> to vector<128xf32>
    %1195 = vector.shape_cast %1194 : vector<128xf32> to vector<1x128xf32>
    %1196 = arith.mulf %1195, %1184 : vector<1x128xf32>
    %c1_285 = arith.constant 1 : index
    %1197 = memref.load %arg5[%c1_285] : memref<4xf32, #tpu.memory_space<smem>>
    %1198 = vector.broadcast %1197 : f32 to vector<1x128xf32>
    %1199 = arith.mulf %1196, %1198 : vector<1x128xf32>
    %1200 = arith.addf %1192, %1199 : vector<1x128xf32>
    %1201 = vector.extract_strided_slice %76 {offsets = [15, 0], sizes = [1, 128], strides = [1, 1]} : vector<16x128xf32> to vector<1x128xf32>
    %1202 = vector.broadcast %1201 : vector<1x128xf32> to vector<16x128xf32>
    %1203 = arith.mulf %1202, %98 : vector<16x128xf32>
    %1204 = vector.extract_strided_slice %86 {offsets = [15, 0], sizes = [1, 128], strides = [1, 1]} : vector<16x128xf32> to vector<1x128xf32>
    %1205 = vector.broadcast %1204 : vector<1x128xf32> to vector<16x128xf32>
    %1206 = arith.mulf %1205, %110 : vector<16x128xf32>
    %1207 = arith.addf %1203, %1206 : vector<16x128xf32>
    %cst_286 = arith.constant 0.707106769 : f32
    %1208 = vector.broadcast %cst_286 : f32 to vector<16x128xf32>
    %1209 = arith.mulf %1207, %1208 : vector<16x128xf32>
    %cst_287 = arith.constant dense<0xFF800000> : vector<128xf32>
    %1210 = vector.multi_reduction <maximumf>, %1209, %cst_287 [0] : vector<16x128xf32> to vector<128xf32>
    %1211 = vector.shape_cast %1210 : vector<128xf32> to vector<1x128xf32>
    %1212 = vector.broadcast %1211 : vector<1x128xf32> to vector<16x128xf32>
    %1213 = arith.subf %1209, %1212 : vector<16x128xf32>
    %1214 = math.exp %1213 : vector<16x128xf32>
    %cst_288 = arith.constant dense<0.000000e+00> : vector<128xf32>
    %1215 = vector.multi_reduction <add>, %1214, %cst_288 [0] : vector<16x128xf32> to vector<128xf32>
    %1216 = vector.shape_cast %1215 : vector<128xf32> to vector<1x128xf32>
    %1217 = tpu.reciprocal %1216 {approx = true} : vector<1x128xf32> -> vector<1x128xf32>
    %1218 = arith.mulf %1214, %120 : vector<16x128xf32>
    %cst_289 = arith.constant dense<0.000000e+00> : vector<128xf32>
    %1219 = vector.multi_reduction <add>, %1218, %cst_289 [0] : vector<16x128xf32> to vector<128xf32>
    %1220 = vector.shape_cast %1219 : vector<128xf32> to vector<1x128xf32>
    %1221 = arith.mulf %1220, %1217 : vector<1x128xf32>
    %c2_290 = arith.constant 2 : index
    %1222 = memref.load %arg5[%c2_290] : memref<4xf32, #tpu.memory_space<smem>>
    %1223 = vector.broadcast %1222 : f32 to vector<1x128xf32>
    %1224 = arith.mulf %1221, %1223 : vector<1x128xf32>
    %1225 = arith.addf %1200, %1224 : vector<1x128xf32>
    %1226 = arith.mulf %1214, %130 : vector<16x128xf32>
    %cst_291 = arith.constant dense<0.000000e+00> : vector<128xf32>
    %1227 = vector.multi_reduction <add>, %1226, %cst_291 [0] : vector<16x128xf32> to vector<128xf32>
    %1228 = vector.shape_cast %1227 : vector<128xf32> to vector<1x128xf32>
    %1229 = arith.mulf %1228, %1217 : vector<1x128xf32>
    %c3_292 = arith.constant 3 : index
    %1230 = memref.load %arg5[%c3_292] : memref<4xf32, #tpu.memory_space<smem>>
    %1231 = vector.broadcast %1230 : f32 to vector<1x128xf32>
    %1232 = arith.mulf %1229, %1231 : vector<1x128xf32>
    %1233 = arith.addf %1225, %1232 : vector<1x128xf32>
    %1234 = vector.broadcast %131 : f32 to vector<1x128xf32>
    %1235 = arith.addf %1233, %1234 : vector<1x128xf32>
    %1236 = tpu.concatenate %200, %269, %338, %407, %476, %545, %614, %683, %752, %821, %890, %959, %1028, %1097, %1166, %1235 in 0 : vector<1x128xf32>, vector<1x128xf32>, vector<1x128xf32>, vector<1x128xf32>, vector<1x128xf32>, vector<1x128xf32>, vector<1x128xf32>, vector<1x128xf32>, vector<1x128xf32>, vector<1x128xf32>, vector<1x128xf32>, vector<1x128xf32>, vector<1x128xf32>, vector<1x128xf32>, vector<1x128xf32>, vector<1x128xf32> -> vector<16x128xf32>
    %c0_293 = arith.constant 0 : index
    %c0_294 = arith.constant 0 : index
    %1237 = vector.load %arg7[%c0_293, %c0_294] : memref<16x128xf32, #tpu.memory_space<vmem>>, vector<16x128xf32>
    tpu.vector_store %arg7[%c0_293, %c0_294], %1236 {strides = array<i32>} : memref<16x128xf32, #tpu.memory_space<vmem>>, vector<16x128xf32>,
    return
  }
  func.func @transform_0(%arg0: i32) -> (i32, i32) {
    %c0_i32 = arith.constant 0 : i32
    %c0_i32_0 = arith.constant 0 : i32
    return %c0_i32, %arg0 : i32, i32
  }
  func.func @transform_1(%arg0: i32) -> (i32, i32) {
    %c0_i32 = arith.constant 0 : i32
    %c0_i32_0 = arith.constant 0 : i32
    %c0_i32_1 = arith.constant 0 : i32
    return %c0_i32, %c0_i32_0 : i32, i32
  }
  func.func @transform_2(%arg0: i32) -> (i32, i32) {
    %c0_i32 = arith.constant 0 : i32
    %c0_i32_0 = arith.constant 0 : i32
    %c0_i32_1 = arith.constant 0 : i32
    return %c0_i32, %c0_i32_0 : i32, i32
  }
  func.func @transform_3(%arg0: i32) -> i32 {
    %c0_i32 = arith.constant 0 : i32
    %c0_i32_0 = arith.constant 0 : i32
    return %c0_i32 : i32
  }
  func.func @transform_4(%arg0: i32) -> i32 {
    %c0_i32 = arith.constant 0 : i32
    %c0_i32_0 = arith.constant 0 : i32
    return %c0_i32 : i32
  }
  func.func @transform_5(%arg0: i32) -> i32 {
    %c0_i32 = arith.constant 0 : i32
    %c0_i32_0 = arith.constant 0 : i32
    return %c0_i32 : i32
  }
  func.func @transform_6(%arg0: i32) -> (i32, i32) {
    %c0_i32 = arith.constant 0 : i32
    %c0_i32_0 = arith.constant 0 : i32
    return %c0_i32, %arg0 : i32, i32
  }
}

</mosaic_0001>

<llo_original>
// kernel: tpu_custom_call.1
$region0: #{tpu_custom_call.1}
  #allocation0 [shape = 'u32[]', space=smem, size = 0x4, offset = 0x4, fixed_abs, tag = 'smem constant byte address 0x4 - core index']
  #allocation1 [shape = 'u32[144,128]{1,0:T(1,128)}', space=vmem, size = 0x12000, scoped, tag = 'internal scratch']
  #allocation2 [shape = 'f32[1]{0:T(128)S(6)}', space=smem, size = 0x200, scoped, tag = 'scoped memory for tpu_custom_call.1']
  %s0 = inlined_call_operand.hbm [shape: f32[32,128], index: 0, kind: input, shape index: {}]
  %s1 = inlined_call_operand.vmem [shape: f32[16,1], index: 1, kind: input, shape index: {}]
  %s2 = inlined_call_operand.vmem [shape: f32[2,12], index: 2, kind: input, shape index: {}]
  %s3 = inlined_call_operand.vmem [shape: f32[12], index: 3, kind: input, shape index: {}]
  %s4 = inlined_call_operand.vmem [shape: f32[4], index: 4, kind: input, shape index: {}]
  %s5 = inlined_call_operand.<no memory space> [shape: f32[1], index: 5, kind: input, shape index: {}]
  %s6 = inlined_call_operand.hbm [shape: f32[16,128], index: 6, kind: output, shape index: {}]
  %s7 = sld [smem:[#allocation0]]
  $region50: #{tpu_custom_call.1} parent=0
    _
  %s9 = ssub.s32 1, %s7
  %s10 = scalar_select 0, %s9, %s7
  %11 = sst [smem:[#allocation2]] %s5
  $region1: #{tpu_custom_call.1} parent=0
    #allocation3 [shape = 'u8[16384]{0}', space=vmem, size = 0x4000, scoped, tag = 'input window, operand 0, single buffered']
    #allocation4 [shape = 's32[1]{0}', space=sflag, size = 0x4, scoped, tag = 'scoped memory for tpu_custom_call.1']
    #allocation5 [shape = 's32[1]{0}', space=sflag, size = 0x4, scoped, tag = 'scoped memory for tpu_custom_call.1']
    #allocation6 [shape = 's32[1]{0}', space=sflag, size = 0x4, scoped, tag = 'scoped memory for tpu_custom_call.1']
    #allocation7 [shape = 'u8[1024]{0}', space=smem, size = 0x400, scoped, tag = 'input window, operand 2, single buffered']
    #allocation8 [shape = 'u8[512]{0}', space=smem, size = 0x200, scoped, tag = 'input window, operand 3, single buffered']
    #allocation9 [shape = 's32[1]{0}', space=sflag, size = 0x4, scoped, tag = 'scoped memory for tpu_custom_call.1']
    #allocation10 [shape = 'u8[512]{0}', space=smem, size = 0x200, scoped, tag = 'input window, operand 4, single buffered']
    #allocation11 [shape = 'u8[8192]{0}', space=vmem, size = 0x2000, scoped, tag = 'output window, operand 0, single buffered']
    %12 = vsyncpa [#allocation4], 0
    %13 = vsyncpa [#allocation6], 0
    %14 = vsyncpa [#allocation9], 0
    %15 = vsyncpa [#allocation5], 0
    // Predicated region
    $region2: #{tpu_custom_call.1} parent=1 // pred_check
      _
    $region3: #{tpu_custom_call.1} parent=1 // pred_check_branch
      %17 = sbr.rel (0) target = $region5
    $region4: #{tpu_custom_call.1} parent=1 // pred_region
      %s19 = ssub.s32 512, 512
      %20 = vsyncadd [#allocation4], %s19
      %s21 = sshll.u32 [#allocation3], 4
      %s22 = int_to_ptr.vmem [resolvable:$true] %s21
      %27 = dma.hbm_to_vmem [thread:$0]  %s0, 512, %s22, [#allocation4], 128, 128, 8
    $region5: #{tpu_custom_call.1} parent=1 // pred_fallthru
      _
    // Predicated region
    $region6: #{tpu_custom_call.1} parent=1 // pred_check
      _
    $region7: #{tpu_custom_call.1} parent=1 // pred_check_branch
      %29 = sbr.rel (0) target = $region9
    $region8: #{tpu_custom_call.1} parent=1 // pred_region
      _
    $region9: #{tpu_custom_call.1} parent=1 // pred_fallthru
      _
    // Predicated region
    $region10: #{tpu_custom_call.1} parent=1 // pred_check
      _
    $region11: #{tpu_custom_call.1} parent=1 // pred_check_branch
      %31 = sbr.rel (0) target = $region13
    $region12: #{tpu_custom_call.1} parent=1 // pred_region
      %s33 = ssub.s32 32, 32
      %34 = vsyncadd [#allocation6], %s33
      %s36 = sshll.u32 %s2, 4
      %s37 = int_to_ptr.vmem [resolvable:$true] %s36
      %39 = dma.vmem_to_smem %s37, 32, [#allocation7], [#allocation6]
    $region13: #{tpu_custom_call.1} parent=1 // pred_fallthru
      _
    // Predicated region
    $region14: #{tpu_custom_call.1} parent=1 // pred_check
      _
    $region15: #{tpu_custom_call.1} parent=1 // pred_check_branch
      %41 = sbr.rel (0) target = $region17
    $region16: #{tpu_custom_call.1} parent=1 // pred_region
      %s43 = ssub.s32 16, 16
      %44 = vsyncadd [#allocation9], %s43
      %s46 = sshll.u32 %s3, 4
      %s47 = int_to_ptr.vmem [resolvable:$true] %s46
      %49 = dma.vmem_to_smem %s47, 16, [#allocation8], [#allocation9]
    $region17: #{tpu_custom_call.1} parent=1 // pred_fallthru
      _
    // Predicated region
    $region18: #{tpu_custom_call.1} parent=1 // pred_check
      _
    $region19: #{tpu_custom_call.1} parent=1 // pred_check_branch
      %51 = sbr.rel (0) target = $region21
    $region20: #{tpu_custom_call.1} parent=1 // pred_region
      %s53 = ssub.s32 16, 16
      %54 = vsyncadd [#allocation9], %s53
      %s56 = sshll.u32 %s4, 4
      %s57 = int_to_ptr.vmem [resolvable:$true] %s56
      %59 = dma.vmem_to_smem %s57, 16, [#allocation10], [#allocation9]
    $region21: #{tpu_custom_call.1} parent=1 // pred_fallthru
      _
    // Predicated region
    $region22: #{tpu_custom_call.1} parent=1 // pred_check
      _
    $region23: #{tpu_custom_call.1} parent=1 // pred_check_branch
      %61 = sbr.rel (0) target = $region25
    $region24: #{tpu_custom_call.1} parent=1 // pred_region
      _
    $region25: #{tpu_custom_call.1} parent=1 // pred_fallthru
      _
    // Predicated region
    $region26: #{tpu_custom_call.1} parent=1 // pred_check
      _
    $region27: #{tpu_custom_call.1} parent=1 // pred_check_branch
      %63 = sbr.rel (0) target = $region29
    $region28: #{tpu_custom_call.1} parent=1 // pred_region
      %64 = dma.done [#allocation4], 512
    $region29: #{tpu_custom_call.1} parent=1 // pred_fallthru
      _
    // Predicated region
    $region30: #{tpu_custom_call.1} parent=1 // pred_check
      _
    $region31: #{tpu_custom_call.1} parent=1 // pred_check_branch
      %66 = sbr.rel (0) target = $region33
    $region32: #{tpu_custom_call.1} parent=1 // pred_region
      %67 = dma.done [#allocation6], 32
    $region33: #{tpu_custom_call.1} parent=1 // pred_fallthru
      _
    // Predicated region
    $region34: #{tpu_custom_call.1} parent=1 // pred_check
      _
    $region35: #{tpu_custom_call.1} parent=1 // pred_check_branch
      %69 = sbr.rel (0) target = $region37
    $region36: #{tpu_custom_call.1} parent=1 // pred_region
      %70 = dma.done [#allocation9], 16
    $region37: #{tpu_custom_call.1} parent=1 // pred_fallthru
      _
    // Predicated region
    $region38: #{tpu_custom_call.1} parent=1 // pred_check
      _
    $region39: #{tpu_custom_call.1} parent=1 // pred_check_branch
      %72 = sbr.rel (0) target = $region41
    $region40: #{tpu_custom_call.1} parent=1 // pred_region
      %73 = dma.done [#allocation9], 16
    $region41: #{tpu_custom_call.1} parent=1 // pred_fallthru
      _
    %74 = sfence
    %v75 = vld [vmem:[#allocation3] sm:$0xff]
    %v76 = vld [vmem:[#allocation3 + $0x8] sm:$0xff]
    %v77 = vld [vmem:[#allocation3 + $0x10] sm:$0xff]
    %v78 = vld [vmem:[#allocation3 + $0x18] sm:$0xff]
    %v79 = vld [vmem:[%s1] sm:$0xff]
    %v80 = vld [vmem:[%s1 + $0x8] sm:$0xff]
    %s81 = sld [smem:[#allocation7]]
    %v82 = vstv %s81
    %v83 = vmul.f32 %v75, %v82
    %v84 = vmul.f32 %v76, %v82
    %s85 = sld [smem:[#allocation7 + $0x80]]
    %v86 = vstv %s85
    %v87 = vmul.f32 %v77, %v86
    %v88 = vmul.f32 %v78, %v86
    %v89 = vadd.f32 %v83, %v87
    %v90 = vadd.f32 %v84, %v88
    %s91 = sld [smem:[#allocation8]]
    %v92 = vstv %s91
    %v93 = vadd.f32 %v89, %v92
    %v94 = vadd.f32 %v90, %v92
    %s95 = sld [smem:[#allocation7 + $0x1]]
    %v96 = vstv %s95
    %v97 = vmul.f32 %v75, %v96
    %v98 = vmul.f32 %v76, %v96
    %s99 = sld [smem:[#allocation7 + $0x81]]
    %v100 = vstv %s99
    %v101 = vmul.f32 %v77, %v100
    %v102 = vmul.f32 %v78, %v100
    %v103 = vadd.f32 %v97, %v101
    %v104 = vadd.f32 %v98, %v102
    %s105 = sld [smem:[#allocation8 + $0x1]]
    %v106 = vstv %s105
    %v107 = vadd.f32 %v103, %v106
    %v108 = vadd.f32 %v104, %v106
    %s109 = sld [smem:[#allocation7 + $0x2]]
    %v110 = vstv %s109
    %v111 = vmul.f32 %v75, %v110
    %v112 = vmul.f32 %v76, %v110
    %s113 = sld [smem:[#allocation7 + $0x82]]
    %v114 = vstv %s113
    %v115 = vmul.f32 %v77, %v114
    %v116 = vmul.f32 %v78, %v114
    %v117 = vadd.f32 %v111, %v115
    %v118 = vadd.f32 %v112, %v116
    %s119 = sld [smem:[#allocation8 + $0x2]]
    %v120 = vstv %s119
    %v121 = vadd.f32 %v117, %v120
    %v122 = vadd.f32 %v118, %v120
    %124 = vset.pattern.permute.xlu0 0
    %125 = vperm.xlu0 %124, %v79
    %v126 = vpop.permute.xlu0 %125
    %129 = vset.pattern.permute.xlu0 0
    %130 = vperm.xlu0 %129, %v80
    %v131 = vpop.permute.xlu0 %130
    %v133 = vadd.f32 %v121, %v126
    %v134 = vadd.f32 %v122, %v131
    %s135 = sld [smem:[#allocation7 + $0x3]]
    %v136 = vstv %s135
    %v137 = vmul.f32 %v75, %v136
    %v138 = vmul.f32 %v76, %v136
    %s139 = sld [smem:[#allocation7 + $0x83]]
    %v140 = vstv %s139
    %v141 = vmul.f32 %v77, %v140
    %v142 = vmul.f32 %v78, %v140
    %v143 = vadd.f32 %v137, %v141
    %v144 = vadd.f32 %v138, %v142
    %s145 = sld [smem:[#allocation8 + $0x3]]
    %v146 = vstv %s145
    %v147 = vadd.f32 %v143, %v146
    %v148 = vadd.f32 %v144, %v146
    %v149 = vadd.f32 %v147, %v126
    %v150 = vadd.f32 %v148, %v131
    %s151 = sld [smem:[#allocation7 + $0x4]]
    %v152 = vstv %s151
    %v153 = vmul.f32 %v75, %v152
    %v154 = vmul.f32 %v76, %v152
    %s155 = sld [smem:[#allocation7 + $0x84]]
    %v156 = vstv %s155
    %v157 = vmul.f32 %v77, %v156
    %v158 = vmul.f32 %v78, %v156
    %v159 = vadd.f32 %v153, %v157
    %v160 = vadd.f32 %v154, %v158
    %s161 = sld [smem:[#allocation8 + $0x4]]
    %v162 = vstv %s161
    %v163 = vadd.f32 %v159, %v162
    %v164 = vadd.f32 %v160, %v162
    %s165 = sld [smem:[#allocation7 + $0x5]]
    %v166 = vstv %s165
    %v167 = vmul.f32 %v75, %v166
    %v168 = vmul.f32 %v76, %v166
    %s169 = sld [smem:[#allocation7 + $0x85]]
    %v170 = vstv %s169
    %v171 = vmul.f32 %v77, %v170
    %v172 = vmul.f32 %v78, %v170
    %v173 = vadd.f32 %v167, %v171
    %v174 = vadd.f32 %v168, %v172
    %s175 = sld [smem:[#allocation8 + $0x5]]
    %v176 = vstv %s175
    %v177 = vadd.f32 %v173, %v176
    %v178 = vadd.f32 %v174, %v176
    %s179 = sld [smem:[#allocation7 + $0x6]]
    %v180 = vstv %s179
    %v181 = vmul.f32 %v75, %v180
    %v182 = vmul.f32 %v76, %v180
    %s183 = sld [smem:[#allocation7 + $0x86]]
    %v184 = vstv %s183
    %v185 = vmul.f32 %v77, %v184
    %v186 = vmul.f32 %v78, %v184
    %v187 = vadd.f32 %v181, %v185
    %v188 = vadd.f32 %v182, %v186
    %s189 = sld [smem:[#allocation8 + $0x6]]
    %v190 = vstv %s189
    %v191 = vadd.f32 %v187, %v190
    %v192 = vadd.f32 %v188, %v190
    %s193 = sld [smem:[#allocation7 + $0x7]]
    %v194 = vstv %s193
    %v195 = vmul.f32 %v75, %v194
    %v196 = vmul.f32 %v76, %v194
    %s197 = sld [smem:[#allocation7 + $0x87]]
    %v198 = vstv %s197
    %v199 = vmul.f32 %v77, %v198
    %v200 = vmul.f32 %v78, %v198
    %v201 = vadd.f32 %v195, %v199
    %v202 = vadd.f32 %v196, %v200
    %s203 = sld [smem:[#allocation8 + $0x7]]
    %v204 = vstv %s203
    %v205 = vadd.f32 %v201, %v204
    %v206 = vadd.f32 %v202, %v204
    %s207 = sld [smem:[#allocation7 + $0x8]]
    %v208 = vstv %s207
    %v209 = vmul.f32 %v75, %v208
    %v210 = vmul.f32 %v76, %v208
    %s211 = sld [smem:[#allocation7 + $0x88]]
    %v212 = vstv %s211
    %v213 = vmul.f32 %v77, %v212
    %v214 = vmul.f32 %v78, %v212
    %v215 = vadd.f32 %v209, %v213
    %v216 = vadd.f32 %v210, %v214
    %s217 = sld [smem:[#allocation8 + $0x8]]
    %v218 = vstv %s217
    %v219 = vadd.f32 %v215, %v218
    %v220 = vadd.f32 %v216, %v218
    %v221 = vadd.f32 %v219, %v126
    %v222 = vadd.f32 %v220, %v131
    %s223 = sld [smem:[#allocation7 + $0x9]]
    %v224 = vstv %s223
    %v225 = vmul.f32 %v75, %v224
    %v226 = vmul.f32 %v76, %v224
    %s227 = sld [smem:[#allocation7 + $0x89]]
    %v228 = vstv %s227
    %v229 = vmul.f32 %v77, %v228
    %v230 = vmul.f32 %v78, %v228
    %v231 = vadd.f32 %v225, %v229
    %v232 = vadd.f32 %v226, %v230
    %s233 = sld [smem:[#allocation8 + $0x9]]
    %v234 = vstv %s233
    %v235 = vadd.f32 %v231, %v234
    %v236 = vadd.f32 %v232, %v234
    %v237 = vadd.f32 %v235, %v126
    %v238 = vadd.f32 %v236, %v131
    %s239 = sld [smem:[#allocation7 + $0xa]]
    %v240 = vstv %s239
    %v241 = vmul.f32 %v75, %v240
    %v242 = vmul.f32 %v76, %v240
    %s243 = sld [smem:[#allocation7 + $0x8a]]
    %v244 = vstv %s243
    %v245 = vmul.f32 %v77, %v244
    %v246 = vmul.f32 %v78, %v244
    %v247 = vadd.f32 %v241, %v245
    %v248 = vadd.f32 %v242, %v246
    %s249 = sld [smem:[#allocation8 + $0xa]]
    %v250 = vstv %s249
    %v251 = vadd.f32 %v247, %v250
    %v252 = vadd.f32 %v248, %v250
    %s253 = sld [smem:[#allocation7 + $0xb]]
    %v254 = vstv %s253
    %v255 = vmul.f32 %v75, %v254
    %v256 = vmul.f32 %v76, %v254
    %s257 = sld [smem:[#allocation7 + $0x8b]]
    %v258 = vstv %s257
    %v259 = vmul.f32 %v77, %v258
    %v260 = vmul.f32 %v78, %v258
    %v261 = vadd.f32 %v255, %v259
    %v262 = vadd.f32 %v256, %v260
    %s263 = sld [smem:[#allocation8 + $0xb]]
    %v264 = vstv %s263
    %v265 = vadd.f32 %v261, %v264
    %v266 = vadd.f32 %v262, %v264
    %s267 = sld [smem:[#allocation2]]
    %v268 = vlaneseq
    %v269 = vshrl.u32 %v268, 7
    %v270 = vsub.s32 0, %v269
    %v271 = vrot.slane %v93, %v270
    %v272 = vmul.f32 %v271, %v133
    %v273 = vmul.f32 %v271, %v134
    %v274 = vlaneseq
    %v275 = vshrl.u32 %v274, 7
    %v276 = vsub.s32 0, %v275
    %v277 = vrot.slane %v107, %v276
    %v278 = vmul.f32 %v277, %v149
    %v279 = vmul.f32 %v277, %v150
    %v280 = vadd.f32 %v272, %v278
    %v281 = vadd.f32 %v273, %v279
    %v282 = vmul.f32 %v280, 0.70710677
    %v283 = vmul.f32 %v281, 0.70710677
    %v284 = vmax.f32 %v282, %v283
    %v285 = vrot.slane %v284, 4
    %v286 = vmax.f32 %v284, %v285
    %v287 = vrot.slane %v286, 2
    %v288 = vmax.f32 %v286, %v287
    %v289 = vrot.slane %v288, 1
    %v290 = vmax.f32 %v288, %v289
    %v291 = vsub.f32 %v282, %v290
    %v292 = vsub.f32 %v283, %v290
    %v293 = vmul.f32 %v291, 1.442695
    %v294 = vpow.pop %v293
    %v295 = vmul.f32 %v292, 1.442695
    %v296 = vpow.pop %v295
    %v297 = vadd.f32 %v294, %v296
    %v298 = vrot.slane %v297, 4
    %v299 = vadd.f32 %v297, %v298
    %v300 = vrot.slane %v299, 2
    %v301 = vadd.f32 %v299, %v300
    %v302 = vrot.slane %v301, 1
    %v303 = vadd.f32 %v301, %v302
    %v304 = vrcp.pop %v303
    %v305 = vmul.f32 %v294, %v163
    %v306 = vmul.f32 %v296, %v164
    %v307 = vadd.f32 %v305, %v306
    %v308 = vrot.slane %v307, 4
    %v309 = vadd.f32 %v307, %v308
    %v310 = vrot.slane %v309, 2
    %v311 = vadd.f32 %v309, %v310
    %v312 = vrot.slane %v311, 1
    %v313 = vadd.f32 %v311, %v312
    %v314 = vmul.f32 %v313, %v304
    %s315 = sld [smem:[#allocation10]]
    %v316 = vstv %s315
    %v317 = vmul.f32 %v314, %v316
    %v318 = vadd.f32 %v317, 0.0
    %v319 = vmul.f32 %v294, %v177
    %v320 = vmul.f32 %v296, %v178
    %v321 = vadd.f32 %v319, %v320
    %v322 = vrot.slane %v321, 4
    %v323 = vadd.f32 %v321, %v322
    %v324 = vrot.slane %v323, 2
    %v325 = vadd.f32 %v323, %v324
    %v326 = vrot.slane %v325, 1
    %v327 = vadd.f32 %v325, %v326
    %v328 = vmul.f32 %v327, %v304
    %s329 = sld [smem:[#allocation10 + $0x1]]
    %v330 = vstv %s329
    %v331 = vmul.f32 %v328, %v330
    %v332 = vadd.f32 %v318, %v331
    %v333 = vlaneseq
    %v334 = vshrl.u32 %v333, 7
    %v335 = vsub.s32 0, %v334
    %v336 = vrot.slane %v191, %v335
    %v337 = vmul.f32 %v336, %v221
    %v338 = vmul.f32 %v336, %v222
    %v339 = vlaneseq
    %v340 = vshrl.u32 %v339, 7
    %v341 = vsub.s32 0, %v340
    %v342 = vrot.slane %v205, %v341
    %v343 = vmul.f32 %v342, %v237
    %v344 = vmul.f32 %v342, %v238
    %v345 = vadd.f32 %v337, %v343
    %v346 = vadd.f32 %v338, %v344
    %v347 = vmul.f32 %v345, 0.70710677
    %v348 = vmul.f32 %v346, 0.70710677
    %v349 = vmax.f32 %v347, %v348
    %v350 = vrot.slane %v349, 4
    %v351 = vmax.f32 %v349, %v350
    %v352 = vrot.slane %v351, 2
    %v353 = vmax.f32 %v351, %v352
    %v354 = vrot.slane %v353, 1
    %v355 = vmax.f32 %v353, %v354
    %v356 = vsub.f32 %v347, %v355
    %v357 = vsub.f32 %v348, %v355
    %v358 = vmul.f32 %v356, 1.442695
    %v359 = vpow.pop %v358
    %v360 = vmul.f32 %v357, 1.442695
    %v361 = vpow.pop %v360
    %v362 = vadd.f32 %v359, %v361
    %v363 = vrot.slane %v362, 4
    %v364 = vadd.f32 %v362, %v363
    %v365 = vrot.slane %v364, 2
    %v366 = vadd.f32 %v364, %v365
    %v367 = vrot.slane %v366, 1
    %v368 = vadd.f32 %v366, %v367
    %v369 = vrcp.pop %v368
    %v370 = vmul.f32 %v359, %v251
    %v371 = vmul.f32 %v361, %v252
    %v372 = vadd.f32 %v370, %v371
    %v373 = vrot.slane %v372, 4
    %v374 = vadd.f32 %v372, %v373
    %v375 = vrot.slane %v374, 2
    %v376 = vadd.f32 %v374, %v375
    %v377 = vrot.slane %v376, 1
    %v378 = vadd.f32 %v376, %v377
    %v379 = vmul.f32 %v378, %v369
    %s380 = sld [smem:[#allocation10 + $0x2]]
    %v381 = vstv %s380
    %v382 = vmul.f32 %v379, %v381
    %v383 = vadd.f32 %v332, %v382
    %v384 = vmul.f32 %v359, %v265
    %v385 = vmul.f32 %v361, %v266
    %v386 = vadd.f32 %v384, %v385
    %v387 = vrot.slane %v386, 4
    %v388 = vadd.f32 %v386, %v387
    %v389 = vrot.slane %v388, 2
    %v390 = vadd.f32 %v388, %v389
    %v391 = vrot.slane %v390, 1
    %v392 = vadd.f32 %v390, %v391
    %v393 = vmul.f32 %v392, %v369
    %s394 = sld [smem:[#allocation10 + $0x3]]
    %v395 = vstv %s394
    %v396 = vmul.f32 %v393, %v395
    %v397 = vadd.f32 %v383, %v396
    %v398 = vstv %s267
    %v399 = vadd.f32 %v397, %v398
    %v400 = vlaneseq
    %v401 = vshrl.u32 %v400, 7
    %v402 = vsub.s32 1, %v401
    %v403 = vrot.slane %v93, %v402
    %v404 = vmul.f32 %v403, %v133
    %v405 = vmul.f32 %v403, %v134
    %v406 = vlaneseq
    %v407 = vshrl.u32 %v406, 7
    %v408 = vsub.s32 1, %v407
    %v409 = vrot.slane %v107, %v408
    %v410 = vmul.f32 %v409, %v149
    %v411 = vmul.f32 %v409, %v150
    %v412 = vadd.f32 %v404, %v410
    %v413 = vadd.f32 %v405, %v411
    %v414 = vmul.f32 %v412, 0.70710677
    %v415 = vmul.f32 %v413, 0.70710677
    %v416 = vmax.f32 %v414, %v415
    %v417 = vrot.slane %v416, 4
    %v418 = vmax.f32 %v416, %v417
    %v419 = vrot.slane %v418, 2
    %v420 = vmax.f32 %v418, %v419
    %v421 = vrot.slane %v420, 1
    %v422 = vmax.f32 %v420, %v421
    %v423 = vsub.f32 %v414, %v422
    %v424 = vsub.f32 %v415, %v422
    %v425 = vmul.f32 %v423, 1.442695
    %v426 = vpow.pop %v425
    %v427 = vmul.f32 %v424, 1.442695
    %v428 = vpow.pop %v427
    %v429 = vadd.f32 %v426, %v428
    %v430 = vrot.slane %v429, 4
    %v431 = vadd.f32 %v429, %v430
    %v432 = vrot.slane %v431, 2
    %v433 = vadd.f32 %v431, %v432
    %v434 = vrot.slane %v433, 1
    %v435 = vadd.f32 %v433, %v434
    %v436 = vrcp.pop %v435
    %v437 = vmul.f32 %v426, %v163
    %v438 = vmul.f32 %v428, %v164
    %v439 = vadd.f32 %v437, %v438
    %v440 = vrot.slane %v439, 4
    %v441 = vadd.f32 %v439, %v440
    %v442 = vrot.slane %v441, 2
    %v443 = vadd.f32 %v441, %v442
    %v444 = vrot.slane %v443, 1
    %v445 = vadd.f32 %v443, %v444
    %v446 = vmul.f32 %v445, %v436
    %v447 = vmul.f32 %v446, %v316
    %v448 = vadd.f32 %v447, 0.0
    %v449 = vmul.f32 %v426, %v177
    %v450 = vmul.f32 %v428, %v178
    %v451 = vadd.f32 %v449, %v450
    %v452 = vrot.slane %v451, 4
    %v453 = vadd.f32 %v451, %v452
    %v454 = vrot.slane %v453, 2
    %v455 = vadd.f32 %v453, %v454
    %v456 = vrot.slane %v455, 1
    %v457 = vadd.f32 %v455, %v456
    %v458 = vmul.f32 %v457, %v436
    %v459 = vmul.f32 %v458, %v330
    %v460 = vadd.f32 %v448, %v459
    %v461 = vlaneseq
    %v462 = vshrl.u32 %v461, 7
    %v463 = vsub.s32 1, %v462
    %v464 = vrot.slane %v191, %v463
    %v465 = vmul.f32 %v464, %v221
    %v466 = vmul.f32 %v464, %v222
    %v467 = vlaneseq
    %v468 = vshrl.u32 %v467, 7
    %v469 = vsub.s32 1, %v468
    %v470 = vrot.slane %v205, %v469
    %v471 = vmul.f32 %v470, %v237
    %v472 = vmul.f32 %v470, %v238
    %v473 = vadd.f32 %v465, %v471
    %v474 = vadd.f32 %v466, %v472
    %v475 = vmul.f32 %v473, 0.70710677
    %v476 = vmul.f32 %v474, 0.70710677
    %v477 = vmax.f32 %v475, %v476
    %v478 = vrot.slane %v477, 4
    %v479 = vmax.f32 %v477, %v478
    %v480 = vrot.slane %v479, 2
    %v481 = vmax.f32 %v479, %v480
    %v482 = vrot.slane %v481, 1
    %v483 = vmax.f32 %v481, %v482
    %v484 = vsub.f32 %v475, %v483
    %v485 = vsub.f32 %v476, %v483
    %v486 = vmul.f32 %v484, 1.442695
    %v487 = vpow.pop %v486
    %v488 = vmul.f32 %v485, 1.442695
    %v489 = vpow.pop %v488
    %v490 = vadd.f32 %v487, %v489
    %v491 = vrot.slane %v490, 4
    %v492 = vadd.f32 %v490, %v491
    %v493 = vrot.slane %v492, 2
    %v494 = vadd.f32 %v492, %v493
    %v495 = vrot.slane %v494, 1
    %v496 = vadd.f32 %v494, %v495
    %v497 = vrcp.pop %v496
    %v498 = vmul.f32 %v487, %v251
    %v499 = vmul.f32 %v489, %v252
    %v500 = vadd.f32 %v498, %v499
    %v501 = vrot.slane %v500, 4
    %v502 = vadd.f32 %v500, %v501
    %v503 = vrot.slane %v502, 2
    %v504 = vadd.f32 %v502, %v503
    %v505 = vrot.slane %v504, 1
    %v506 = vadd.f32 %v504, %v505
    %v507 = vmul.f32 %v506, %v497
    %v508 = vmul.f32 %v507, %v381
    %v509 = vadd.f32 %v460, %v508
    %v510 = vmul.f32 %v487, %v265
    %v511 = vmul.f32 %v489, %v266
    %v512 = vadd.f32 %v510, %v511
    %v513 = vrot.slane %v512, 4
    %v514 = vadd.f32 %v512, %v513
    %v515 = vrot.slane %v514, 2
    %v516 = vadd.f32 %v514, %v515
    %v517 = vrot.slane %v516, 1
    %v518 = vadd.f32 %v516, %v517
    %v519 = vmul.f32 %v518, %v497
    %v520 = vmul.f32 %v519, %v395
    %v521 = vadd.f32 %v509, %v520
    %v522 = vadd.f32 %v521, %v398
    %v523 = vlaneseq
    %v524 = vshrl.u32 %v523, 7
    %v525 = vsub.s32 2, %v524
    %v526 = vrot.slane %v93, %v525
    %v527 = vmul.f32 %v526, %v133
    %v528 = vmul.f32 %v526, %v134
    %v529 = vlaneseq
    %v530 = vshrl.u32 %v529, 7
    %v531 = vsub.s32 2, %v530
    %v532 = vrot.slane %v107, %v531
    %v533 = vmul.f32 %v532, %v149
    %v534 = vmul.f32 %v532, %v150
    %v535 = vadd.f32 %v527, %v533
    %v536 = vadd.f32 %v528, %v534
    %v537 = vmul.f32 %v535, 0.70710677
    %v538 = vmul.f32 %v536, 0.70710677
    %v539 = vmax.f32 %v537, %v538
    %v540 = vrot.slane %v539, 4
    %v541 = vmax.f32 %v539, %v540
    %v542 = vrot.slane %v541, 2
    %v543 = vmax.f32 %v541, %v542
    %v544 = vrot.slane %v543, 1
    %v545 = vmax.f32 %v543, %v544
    %v546 = vsub.f32 %v537, %v545
    %v547 = vsub.f32 %v538, %v545
    %v548 = vmul.f32 %v546, 1.442695
    %v549 = vpow.pop %v548
    %v550 = vmul.f32 %v547, 1.442695
    %v551 = vpow.pop %v550
    %v552 = vadd.f32 %v549, %v551
    %v553 = vrot.slane %v552, 4
    %v554 = vadd.f32 %v552, %v553
    %v555 = vrot.slane %v554, 2
    %v556 = vadd.f32 %v554, %v555
    %v557 = vrot.slane %v556, 1
    %v558 = vadd.f32 %v556, %v557
    %v559 = vrcp.pop %v558
    %v560 = vmul.f32 %v549, %v163
    %v561 = vmul.f32 %v551, %v164
    %v562 = vadd.f32 %v560, %v561
    %v563 = vrot.slane %v562, 4
    %v564 = vadd.f32 %v562, %v563
    %v565 = vrot.slane %v564, 2
    %v566 = vadd.f32 %v564, %v565
    %v567 = vrot.slane %v566, 1
    %v568 = vadd.f32 %v566, %v567
    %v569 = vmul.f32 %v568, %v559
    %v570 = vmul.f32 %v569, %v316
    %v571 = vadd.f32 %v570, 0.0
    %v572 = vmul.f32 %v549, %v177
    %v573 = vmul.f32 %v551, %v178
    %v574 = vadd.f32 %v572, %v573
    %v575 = vrot.slane %v574, 4
    %v576 = vadd.f32 %v574, %v575
    %v577 = vrot.slane %v576, 2
    %v578 = vadd.f32 %v576, %v577
    %v579 = vrot.slane %v578, 1
    %v580 = vadd.f32 %v578, %v579
    %v581 = vmul.f32 %v580, %v559
    %v582 = vmul.f32 %v581, %v330
    %v583 = vadd.f32 %v571, %v582
    %v584 = vlaneseq
    %v585 = vshrl.u32 %v584, 7
    %v586 = vsub.s32 2, %v585
    %v587 = vrot.slane %v191, %v586
    %v588 = vmul.f32 %v587, %v221
    %v589 = vmul.f32 %v587, %v222
    %v590 = vlaneseq
    %v591 = vshrl.u32 %v590, 7
    %v592 = vsub.s32 2, %v591
    %v593 = vrot.slane %v205, %v592
    %v594 = vmul.f32 %v593, %v237
    %v595 = vmul.f32 %v593, %v238
    %v596 = vadd.f32 %v588, %v594
    %v597 = vadd.f32 %v589, %v595
    %v598 = vmul.f32 %v596, 0.70710677
    %v599 = vmul.f32 %v597, 0.70710677
    %v600 = vmax.f32 %v598, %v599
    %v601 = vrot.slane %v600, 4
    %v602 = vmax.f32 %v600, %v601
    %v603 = vrot.slane %v602, 2
    %v604 = vmax.f32 %v602, %v603
    %v605 = vrot.slane %v604, 1
    %v606 = vmax.f32 %v604, %v605
    %v607 = vsub.f32 %v598, %v606
    %v608 = vsub.f32 %v599, %v606
    %v609 = vmul.f32 %v607, 1.442695
    %v610 = vpow.pop %v609
    %v611 = vmul.f32 %v608, 1.442695
    %v612 = vpow.pop %v611
    %v613 = vadd.f32 %v610, %v612
    %v614 = vrot.slane %v613, 4
    %v615 = vadd.f32 %v613, %v614
    %v616 = vrot.slane %v615, 2
    %v617 = vadd.f32 %v615, %v616
    %v618 = vrot.slane %v617, 1
    %v619 = vadd.f32 %v617, %v618
    %v620 = vrcp.pop %v619
    %v621 = vmul.f32 %v610, %v251
    %v622 = vmul.f32 %v612, %v252
    %v623 = vadd.f32 %v621, %v622
    %v624 = vrot.slane %v623, 4
    %v625 = vadd.f32 %v623, %v624
    %v626 = vrot.slane %v625, 2
    %v627 = vadd.f32 %v625, %v626
    %v628 = vrot.slane %v627, 1
    %v629 = vadd.f32 %v627, %v628
    %v630 = vmul.f32 %v629, %v620
    %v631 = vmul.f32 %v630, %v381
    %v632 = vadd.f32 %v583, %v631
    %v633 = vmul.f32 %v610, %v265
    %v634 = vmul.f32 %v612, %v266
    %v635 = vadd.f32 %v633, %v634
    %v636 = vrot.slane %v635, 4
    %v637 = vadd.f32 %v635, %v636
    %v638 = vrot.slane %v637, 2
    %v639 = vadd.f32 %v637, %v638
    %v640 = vrot.slane %v639, 1
    %v641 = vadd.f32 %v639, %v640
    %v642 = vmul.f32 %v641, %v620
    %v643 = vmul.f32 %v642, %v395
    %v644 = vadd.f32 %v632, %v643
    %v645 = vadd.f32 %v644, %v398
    %v646 = vlaneseq
    %v647 = vshrl.u32 %v646, 7
    %v648 = vsub.s32 3, %v647
    %v649 = vrot.slane %v93, %v648
    %v650 = vmul.f32 %v649, %v133
    %v651 = vmul.f32 %v649, %v134
    %v652 = vlaneseq
    %v653 = vshrl.u32 %v652, 7
    %v654 = vsub.s32 3, %v653
    %v655 = vrot.slane %v107, %v654
    %v656 = vmul.f32 %v655, %v149
    %v657 = vmul.f32 %v655, %v150
    %v658 = vadd.f32 %v650, %v656
    %v659 = vadd.f32 %v651, %v657
    %v660 = vmul.f32 %v658, 0.70710677
    %v661 = vmul.f32 %v659, 0.70710677
    %v662 = vmax.f32 %v660, %v661
    %v663 = vrot.slane %v662, 4
    %v664 = vmax.f32 %v662, %v663
    %v665 = vrot.slane %v664, 2
    %v666 = vmax.f32 %v664, %v665
    %v667 = vrot.slane %v666, 1
    %v668 = vmax.f32 %v666, %v667
    %v669 = vsub.f32 %v660, %v668
    %v670 = vsub.f32 %v661, %v668
    %v671 = vmul.f32 %v669, 1.442695
    %v672 = vpow.pop %v671
    %v673 = vmul.f32 %v670, 1.442695
    %v674 = vpow.pop %v673
    %v675 = vadd.f32 %v672, %v674
    %v676 = vrot.slane %v675, 4
    %v677 = vadd.f32 %v675, %v676
    %v678 = vrot.slane %v677, 2
    %v679 = vadd.f32 %v677, %v678
    %v680 = vrot.slane %v679, 1
    %v681 = vadd.f32 %v679, %v680
    %v682 = vrcp.pop %v681
    %v683 = vmul.f32 %v672, %v163
    %v684 = vmul.f32 %v674, %v164
    %v685 = vadd.f32 %v683, %v684
    %v686 = vrot.slane %v685, 4
    %v687 = vadd.f32 %v685, %v686
    %v688 = vrot.slane %v687, 2
    %v689 = vadd.f32 %v687, %v688
    %v690 = vrot.slane %v689, 1
    %v691 = vadd.f32 %v689, %v690
    %v692 = vmul.f32 %v691, %v682
    %v693 = vmul.f32 %v692, %v316
    %v694 = vadd.f32 %v693, 0.0
    %v695 = vmul.f32 %v672, %v177
    %v696 = vmul.f32 %v674, %v178
    %v697 = vadd.f32 %v695, %v696
    %v698 = vrot.slane %v697, 4
    %v699 = vadd.f32 %v697, %v698
    %v700 = vrot.slane %v699, 2
    %v701 = vadd.f32 %v699, %v700
    %v702 = vrot.slane %v701, 1
    %v703 = vadd.f32 %v701, %v702
    %v704 = vmul.f32 %v703, %v682
    %v705 = vmul.f32 %v704, %v330
    %v706 = vadd.f32 %v694, %v705
    %v707 = vlaneseq
    %v708 = vshrl.u32 %v707, 7
    %v709 = vsub.s32 3, %v708
    %v710 = vrot.slane %v191, %v709
    %v711 = vmul.f32 %v710, %v221
    %v712 = vmul.f32 %v710, %v222
    %v713 = vlaneseq
    %v714 = vshrl.u32 %v713, 7
    %v715 = vsub.s32 3, %v714
    %v716 = vrot.slane %v205, %v715
    %v717 = vmul.f32 %v716, %v237
    %v718 = vmul.f32 %v716, %v238
    %v719 = vadd.f32 %v711, %v717
    %v720 = vadd.f32 %v712, %v718
    %v721 = vmul.f32 %v719, 0.70710677
    %v722 = vmul.f32 %v720, 0.70710677
    %v723 = vmax.f32 %v721, %v722
    %v724 = vrot.slane %v723, 4
    %v725 = vmax.f32 %v723, %v724
    %v726 = vrot.slane %v725, 2
    %v727 = vmax.f32 %v725, %v726
    %v728 = vrot.slane %v727, 1
    %v729 = vmax.f32 %v727, %v728
    %v730 = vsub.f32 %v721, %v729
    %v731 = vsub.f32 %v722, %v729
    %v732 = vmul.f32 %v730, 1.442695
    %v733 = vpow.pop %v732
    %v734 = vmul.f32 %v731, 1.442695
    %v735 = vpow.pop %v734
    %v736 = vadd.f32 %v733, %v735
    %v737 = vrot.slane %v736, 4
    %v738 = vadd.f32 %v736, %v737
    %v739 = vrot.slane %v738, 2
    %v740 = vadd.f32 %v738, %v739
    %v741 = vrot.slane %v740, 1
    %v742 = vadd.f32 %v740, %v741
    %v743 = vrcp.pop %v742
    %v744 = vmul.f32 %v733, %v251
    %v745 = vmul.f32 %v735, %v252
    %v746 = vadd.f32 %v744, %v745
    %v747 = vrot.slane %v746, 4
    %v748 = vadd.f32 %v746, %v747
    %v749 = vrot.slane %v748, 2
    %v750 = vadd.f32 %v748, %v749
    %v751 = vrot.slane %v750, 1
    %v752 = vadd.f32 %v750, %v751
    %v753 = vmul.f32 %v752, %v743
    %v754 = vmul.f32 %v753, %v381
    %v755 = vadd.f32 %v706, %v754
    %v756 = vmul.f32 %v733, %v265
    %v757 = vmul.f32 %v735, %v266
    %v758 = vadd.f32 %v756, %v757
    %v759 = vrot.slane %v758, 4
    %v760 = vadd.f32 %v758, %v759
    %v761 = vrot.slane %v760, 2
    %v762 = vadd.f32 %v760, %v761
    %v763 = vrot.slane %v762, 1
    %v764 = vadd.f32 %v762, %v763
    %v765 = vmul.f32 %v764, %v743
    %v766 = vmul.f32 %v765, %v395
    %v767 = vadd.f32 %v755, %v766
    %v768 = vadd.f32 %v767, %v398
    %v769 = vlaneseq
    %v770 = vshrl.u32 %v769, 7
    %v771 = vsub.s32 4, %v770
    %v772 = vrot.slane %v93, %v771
    %v773 = vmul.f32 %v772, %v133
    %v774 = vmul.f32 %v772, %v134
    %v775 = vlaneseq
    %v776 = vshrl.u32 %v775, 7
    %v777 = vsub.s32 4, %v776
    %v778 = vrot.slane %v107, %v777
    %v779 = vmul.f32 %v778, %v149
    %v780 = vmul.f32 %v778, %v150
    %v781 = vadd.f32 %v773, %v779
    %v782 = vadd.f32 %v774, %v780
    %v783 = vmul.f32 %v781, 0.70710677
    %v784 = vmul.f32 %v782, 0.70710677
    %v785 = vmax.f32 %v783, %v784
    %v786 = vrot.slane %v785, 4
    %v787 = vmax.f32 %v785, %v786
    %v788 = vrot.slane %v787, 2
    %v789 = vmax.f32 %v787, %v788
    %v790 = vrot.slane %v789, 1
    %v791 = vmax.f32 %v789, %v790
    %v792 = vsub.f32 %v783, %v791
    %v793 = vsub.f32 %v784, %v791
    %v794 = vmul.f32 %v792, 1.442695
    %v795 = vpow.pop %v794
    %v796 = vmul.f32 %v793, 1.442695
    %v797 = vpow.pop %v796
    %v798 = vadd.f32 %v795, %v797
    %v799 = vrot.slane %v798, 4
    %v800 = vadd.f32 %v798, %v799
    %v801 = vrot.slane %v800, 2
    %v802 = vadd.f32 %v800, %v801
    %v803 = vrot.slane %v802, 1
    %v804 = vadd.f32 %v802, %v803
    %v805 = vrcp.pop %v804
    %v806 = vmul.f32 %v795, %v163
    %v807 = vmul.f32 %v797, %v164
    %v808 = vadd.f32 %v806, %v807
    %v809 = vrot.slane %v808, 4
    %v810 = vadd.f32 %v808, %v809
    %v811 = vrot.slane %v810, 2
    %v812 = vadd.f32 %v810, %v811
    %v813 = vrot.slane %v812, 1
    %v814 = vadd.f32 %v812, %v813
    %v815 = vmul.f32 %v814, %v805
    %v816 = vmul.f32 %v815, %v316
    %v817 = vadd.f32 %v816, 0.0
    %v818 = vmul.f32 %v795, %v177
    %v819 = vmul.f32 %v797, %v178
    %v820 = vadd.f32 %v818, %v819
    %v821 = vrot.slane %v820, 4
    %v822 = vadd.f32 %v820, %v821
    %v823 = vrot.slane %v822, 2
    %v824 = vadd.f32 %v822, %v823
    %v825 = vrot.slane %v824, 1
    %v826 = vadd.f32 %v824, %v825
    %v827 = vmul.f32 %v826, %v805
    %v828 = vmul.f32 %v827, %v330
    %v829 = vadd.f32 %v817, %v828
    %v830 = vlaneseq
    %v831 = vshrl.u32 %v830, 7
    %v832 = vsub.s32 4, %v831
    %v833 = vrot.slane %v191, %v832
    %v834 = vmul.f32 %v833, %v221
    %v835 = vmul.f32 %v833, %v222
    %v836 = vlaneseq
    %v837 = vshrl.u32 %v836, 7
    %v838 = vsub.s32 4, %v837
    %v839 = vrot.slane %v205, %v838
    %v840 = vmul.f32 %v839, %v237
    %v841 = vmul.f32 %v839, %v238
    %v842 = vadd.f32 %v834, %v840
    %v843 = vadd.f32 %v835, %v841
    %v844 = vmul.f32 %v842, 0.70710677
    %v845 = vmul.f32 %v843, 0.70710677
    %v846 = vmax.f32 %v844, %v845
    %v847 = vrot.slane %v846, 4
    %v848 = vmax.f32 %v846, %v847
    %v849 = vrot.slane %v848, 2
    %v850 = vmax.f32 %v848, %v849
    %v851 = vrot.slane %v850, 1
    %v852 = vmax.f32 %v850, %v851
    %v853 = vsub.f32 %v844, %v852
    %v854 = vsub.f32 %v845, %v852
    %v855 = vmul.f32 %v853, 1.442695
    %v856 = vpow.pop %v855
    %v857 = vmul.f32 %v854, 1.442695
    %v858 = vpow.pop %v857
    %v859 = vadd.f32 %v856, %v858
    %v860 = vrot.slane %v859, 4
    %v861 = vadd.f32 %v859, %v860
    %v862 = vrot.slane %v861, 2
    %v863 = vadd.f32 %v861, %v862
    %v864 = vrot.slane %v863, 1
    %v865 = vadd.f32 %v863, %v864
    %v866 = vrcp.pop %v865
    %v867 = vmul.f32 %v856, %v251
    %v868 = vmul.f32 %v858, %v252
    %v869 = vadd.f32 %v867, %v868
    %v870 = vrot.slane %v869, 4
    %v871 = vadd.f32 %v869, %v870
    %v872 = vrot.slane %v871, 2
    %v873 = vadd.f32 %v871, %v872
    %v874 = vrot.slane %v873, 1
    %v875 = vadd.f32 %v873, %v874
    %v876 = vmul.f32 %v875, %v866
    %v877 = vmul.f32 %v876, %v381
    %v878 = vadd.f32 %v829, %v877
    %v879 = vmul.f32 %v856, %v265
    %v880 = vmul.f32 %v858, %v266
    %v881 = vadd.f32 %v879, %v880
    %v882 = vrot.slane %v881, 4
    %v883 = vadd.f32 %v881, %v882
    %v884 = vrot.slane %v883, 2
    %v885 = vadd.f32 %v883, %v884
    %v886 = vrot.slane %v885, 1
    %v887 = vadd.f32 %v885, %v886
    %v888 = vmul.f32 %v887, %v866
    %v889 = vmul.f32 %v888, %v395
    %v890 = vadd.f32 %v878, %v889
    %v891 = vadd.f32 %v890, %v398
    %v892 = vlaneseq
    %v893 = vshrl.u32 %v892, 7
    %v894 = vsub.s32 5, %v893
    %v895 = vrot.slane %v93, %v894
    %v896 = vmul.f32 %v895, %v133
    %v897 = vmul.f32 %v895, %v134
    %v898 = vlaneseq
    %v899 = vshrl.u32 %v898, 7
    %v900 = vsub.s32 5, %v899
    %v901 = vrot.slane %v107, %v900
    %v902 = vmul.f32 %v901, %v149
    %v903 = vmul.f32 %v901, %v150
    %v904 = vadd.f32 %v896, %v902
    %v905 = vadd.f32 %v897, %v903
    %v906 = vmul.f32 %v904, 0.70710677
    %v907 = vmul.f32 %v905, 0.70710677
    %v908 = vmax.f32 %v906, %v907
    %v909 = vrot.slane %v908, 4
    %v910 = vmax.f32 %v908, %v909
    %v911 = vrot.slane %v910, 2
    %v912 = vmax.f32 %v910, %v911
    %v913 = vrot.slane %v912, 1
    %v914 = vmax.f32 %v912, %v913
    %v915 = vsub.f32 %v906, %v914
    %v916 = vsub.f32 %v907, %v914
    %v917 = vmul.f32 %v915, 1.442695
    %v918 = vpow.pop %v917
    %v919 = vmul.f32 %v916, 1.442695
    %v920 = vpow.pop %v919
    %v921 = vadd.f32 %v918, %v920
    %v922 = vrot.slane %v921, 4
    %v923 = vadd.f32 %v921, %v922
    %v924 = vrot.slane %v923, 2
    %v925 = vadd.f32 %v923, %v924
    %v926 = vrot.slane %v925, 1
    %v927 = vadd.f32 %v925, %v926
    %v928 = vrcp.pop %v927
    %v929 = vmul.f32 %v918, %v163
    %v930 = vmul.f32 %v920, %v164
    %v931 = vadd.f32 %v929, %v930
    %v932 = vrot.slane %v931, 4
    %v933 = vadd.f32 %v931, %v932
    %v934 = vrot.slane %v933, 2
    %v935 = vadd.f32 %v933, %v934
    %v936 = vrot.slane %v935, 1
    %v937 = vadd.f32 %v935, %v936
    %v938 = vmul.f32 %v937, %v928
    %v939 = vmul.f32 %v938, %v316
    %v940 = vadd.f32 %v939, 0.0
    %v941 = vmul.f32 %v918, %v177
    %v942 = vmul.f32 %v920, %v178
    %v943 = vadd.f32 %v941, %v942
    %v944 = vrot.slane %v943, 4
    %v945 = vadd.f32 %v943, %v944
    %v946 = vrot.slane %v945, 2
    %v947 = vadd.f32 %v945, %v946
    %v948 = vrot.slane %v947, 1
    %v949 = vadd.f32 %v947, %v948
    %v950 = vmul.f32 %v949, %v928
    %v951 = vmul.f32 %v950, %v330
    %v952 = vadd.f32 %v940, %v951
    %v953 = vlaneseq
    %v954 = vshrl.u32 %v953, 7
    %v955 = vsub.s32 5, %v954
    %v956 = vrot.slane %v191, %v955
    %v957 = vmul.f32 %v956, %v221
    %v958 = vmul.f32 %v956, %v222
    %v959 = vlaneseq
    %v960 = vshrl.u32 %v959, 7
    %v961 = vsub.s32 5, %v960
    %v962 = vrot.slane %v205, %v961
    %v963 = vmul.f32 %v962, %v237
    %v964 = vmul.f32 %v962, %v238
    %v965 = vadd.f32 %v957, %v963
    %v966 = vadd.f32 %v958, %v964
    %v967 = vmul.f32 %v965, 0.70710677
    %v968 = vmul.f32 %v966, 0.70710677
    %v969 = vmax.f32 %v967, %v968
    %v970 = vrot.slane %v969, 4
    %v971 = vmax.f32 %v969, %v970
    %v972 = vrot.slane %v971, 2
    %v973 = vmax.f32 %v971, %v972
    %v974 = vrot.slane %v973, 1
    %v975 = vmax.f32 %v973, %v974
    %v976 = vsub.f32 %v967, %v975
    %v977 = vsub.f32 %v968, %v975
    %v978 = vmul.f32 %v976, 1.442695
    %v979 = vpow.pop %v978
    %v980 = vmul.f32 %v977, 1.442695
    %v981 = vpow.pop %v980
    %v982 = vadd.f32 %v979, %v981
    %v983 = vrot.slane %v982, 4
    %v984 = vadd.f32 %v982, %v983
    %v985 = vrot.slane %v984, 2
    %v986 = vadd.f32 %v984, %v985
    %v987 = vrot.slane %v986, 1
    %v988 = vadd.f32 %v986, %v987
    %v989 = vrcp.pop %v988
    %v990 = vmul.f32 %v979, %v251
    %v991 = vmul.f32 %v981, %v252
    %v992 = vadd.f32 %v990, %v991
    %v993 = vrot.slane %v992, 4
    %v994 = vadd.f32 %v992, %v993
    %v995 = vrot.slane %v994, 2
    %v996 = vadd.f32 %v994, %v995
    %v997 = vrot.slane %v996, 1
    %v998 = vadd.f32 %v996, %v997
    %v999 = vmul.f32 %v998, %v989
    %v1000 = vmul.f32 %v999, %v381
    %v1001 = vadd.f32 %v952, %v1000
    %v1002 = vmul.f32 %v979, %v265
    %v1003 = vmul.f32 %v981, %v266
    %v1004 = vadd.f32 %v1002, %v1003
    %v1005 = vrot.slane %v1004, 4
    %v1006 = vadd.f32 %v1004, %v1005
    %v1007 = vrot.slane %v1006, 2
    %v1008 = vadd.f32 %v1006, %v1007
    %v1009 = vrot.slane %v1008, 1
    %v1010 = vadd.f32 %v1008, %v1009
    %v1011 = vmul.f32 %v1010, %v989
    %v1012 = vmul.f32 %v1011, %v395
    %v1013 = vadd.f32 %v1001, %v1012
    %v1014 = vadd.f32 %v1013, %v398
    %v1015 = vlaneseq
    %v1016 = vshrl.u32 %v1015, 7
    %v1017 = vsub.s32 6, %v1016
    %v1018 = vrot.slane %v93, %v1017
    %v1019 = vmul.f32 %v1018, %v133
    %v1020 = vmul.f32 %v1018, %v134
    %v1021 = vlaneseq
    %v1022 = vshrl.u32 %v1021, 7
    %v1023 = vsub.s32 6, %v1022
    %v1024 = vrot.slane %v107, %v1023
    %v1025 = vmul.f32 %v1024, %v149
    %v1026 = vmul.f32 %v1024, %v150
    %v1027 = vadd.f32 %v1019, %v1025
    %v1028 = vadd.f32 %v1020, %v1026
    %v1029 = vmul.f32 %v1027, 0.70710677
    %v1030 = vmul.f32 %v1028, 0.70710677
    %v1031 = vmax.f32 %v1029, %v1030
    %v1032 = vrot.slane %v1031, 4
    %v1033 = vmax.f32 %v1031, %v1032
    %v1034 = vrot.slane %v1033, 2
    %v1035 = vmax.f32 %v1033, %v1034
    %v1036 = vrot.slane %v1035, 1
    %v1037 = vmax.f32 %v1035, %v1036
    %v1038 = vsub.f32 %v1029, %v1037
    %v1039 = vsub.f32 %v1030, %v1037
    %v1040 = vmul.f32 %v1038, 1.442695
    %v1041 = vpow.pop %v1040
    %v1042 = vmul.f32 %v1039, 1.442695
    %v1043 = vpow.pop %v1042
    %v1044 = vadd.f32 %v1041, %v1043
    %v1045 = vrot.slane %v1044, 4
    %v1046 = vadd.f32 %v1044, %v1045
    %v1047 = vrot.slane %v1046, 2
    %v1048 = vadd.f32 %v1046, %v1047
    %v1049 = vrot.slane %v1048, 1
    %v1050 = vadd.f32 %v1048, %v1049
    %v1051 = vrcp.pop %v1050
    %v1052 = vmul.f32 %v1041, %v163
    %v1053 = vmul.f32 %v1043, %v164
    %v1054 = vadd.f32 %v1052, %v1053
    %v1055 = vrot.slane %v1054, 4
    %v1056 = vadd.f32 %v1054, %v1055
    %v1057 = vrot.slane %v1056, 2
    %v1058 = vadd.f32 %v1056, %v1057
    %v1059 = vrot.slane %v1058, 1
    %v1060 = vadd.f32 %v1058, %v1059
    %v1061 = vmul.f32 %v1060, %v1051
    %v1062 = vmul.f32 %v1061, %v316
    %v1063 = vadd.f32 %v1062, 0.0
    %v1064 = vmul.f32 %v1041, %v177
    %v1065 = vmul.f32 %v1043, %v178
    %v1066 = vadd.f32 %v1064, %v1065
    %v1067 = vrot.slane %v1066, 4
    %v1068 = vadd.f32 %v1066, %v1067
    %v1069 = vrot.slane %v1068, 2
    %v1070 = vadd.f32 %v1068, %v1069
    %v1071 = vrot.slane %v1070, 1
    %v1072 = vadd.f32 %v1070, %v1071
    %v1073 = vmul.f32 %v1072, %v1051
    %v1074 = vmul.f32 %v1073, %v330
    %v1075 = vadd.f32 %v1063, %v1074
    %v1076 = vlaneseq
    %v1077 = vshrl.u32 %v1076, 7
    %v1078 = vsub.s32 6, %v1077
    %v1079 = vrot.slane %v191, %v1078
    %v1080 = vmul.f32 %v1079, %v221
    %v1081 = vmul.f32 %v1079, %v222
    %v1082 = vlaneseq
    %v1083 = vshrl.u32 %v1082, 7
    %v1084 = vsub.s32 6, %v1083
    %v1085 = vrot.slane %v205, %v1084
    %v1086 = vmul.f32 %v1085, %v237
    %v1087 = vmul.f32 %v1085, %v238
    %v1088 = vadd.f32 %v1080, %v1086
    %v1089 = vadd.f32 %v1081, %v1087
    %v1090 = vmul.f32 %v1088, 0.70710677
    %v1091 = vmul.f32 %v1089, 0.70710677
    %v1092 = vmax.f32 %v1090, %v1091
    %v1093 = vrot.slane %v1092, 4
    %v1094 = vmax.f32 %v1092, %v1093
    %v1095 = vrot.slane %v1094, 2
    %v1096 = vmax.f32 %v1094, %v1095
    %v1097 = vrot.slane %v1096, 1
    %v1098 = vmax.f32 %v1096, %v1097
    %v1099 = vsub.f32 %v1090, %v1098
    %v1100 = vsub.f32 %v1091, %v1098
    %v1101 = vmul.f32 %v1099, 1.442695
    %v1102 = vpow.pop %v1101
    %v1103 = vmul.f32 %v1100, 1.442695
    %v1104 = vpow.pop %v1103
    %v1105 = vadd.f32 %v1102, %v1104
    %v1106 = vrot.slane %v1105, 4
    %v1107 = vadd.f32 %v1105, %v1106
    %v1108 = vrot.slane %v1107, 2
    %v1109 = vadd.f32 %v1107, %v1108
    %v1110 = vrot.slane %v1109, 1
    %v1111 = vadd.f32 %v1109, %v1110
    %v1112 = vrcp.pop %v1111
    %v1113 = vmul.f32 %v1102, %v251
    %v1114 = vmul.f32 %v1104, %v252
    %v1115 = vadd.f32 %v1113, %v1114
    %v1116 = vrot.slane %v1115, 4
    %v1117 = vadd.f32 %v1115, %v1116
    %v1118 = vrot.slane %v1117, 2
    %v1119 = vadd.f32 %v1117, %v1118
    %v1120 = vrot.slane %v1119, 1
    %v1121 = vadd.f32 %v1119, %v1120
    %v1122 = vmul.f32 %v1121, %v1112
    %v1123 = vmul.f32 %v1122, %v381
    %v1124 = vadd.f32 %v1075, %v1123
    %v1125 = vmul.f32 %v1102, %v265
    %v1126 = vmul.f32 %v1104, %v266
    %v1127 = vadd.f32 %v1125, %v1126
    %v1128 = vrot.slane %v1127, 4
    %v1129 = vadd.f32 %v1127, %v1128
    %v1130 = vrot.slane %v1129, 2
    %v1131 = vadd.f32 %v1129, %v1130
    %v1132 = vrot.slane %v1131, 1
    %v1133 = vadd.f32 %v1131, %v1132
    %v1134 = vmul.f32 %v1133, %v1112
    %v1135 = vmul.f32 %v1134, %v395
    %v1136 = vadd.f32 %v1124, %v1135
    %v1137 = vadd.f32 %v1136, %v398
    %v1138 = vlaneseq
    %v1139 = vshrl.u32 %v1138, 7
    %v1140 = vsub.s32 7, %v1139
    %v1141 = vrot.slane %v93, %v1140
    %v1142 = vmul.f32 %v1141, %v133
    %v1143 = vmul.f32 %v1141, %v134
    %v1144 = vlaneseq
    %v1145 = vshrl.u32 %v1144, 7
    %v1146 = vsub.s32 7, %v1145
    %v1147 = vrot.slane %v107, %v1146
    %v1148 = vmul.f32 %v1147, %v149
    %v1149 = vmul.f32 %v1147, %v150
    %v1150 = vadd.f32 %v1142, %v1148
    %v1151 = vadd.f32 %v1143, %v1149
    %v1152 = vmul.f32 %v1150, 0.70710677
    %v1153 = vmul.f32 %v1151, 0.70710677
    %v1154 = vmax.f32 %v1152, %v1153
    %v1155 = vrot.slane %v1154, 4
    %v1156 = vmax.f32 %v1154, %v1155
    %v1157 = vrot.slane %v1156, 2
    %v1158 = vmax.f32 %v1156, %v1157
    %v1159 = vrot.slane %v1158, 1
    %v1160 = vmax.f32 %v1158, %v1159
    %v1161 = vsub.f32 %v1152, %v1160
    %v1162 = vsub.f32 %v1153, %v1160
    %v1163 = vmul.f32 %v1161, 1.442695
    %v1164 = vpow.pop %v1163
    %v1165 = vmul.f32 %v1162, 1.442695
    %v1166 = vpow.pop %v1165
    %v1167 = vadd.f32 %v1164, %v1166
    %v1168 = vrot.slane %v1167, 4
    %v1169 = vadd.f32 %v1167, %v1168
    %v1170 = vrot.slane %v1169, 2
    %v1171 = vadd.f32 %v1169, %v1170
    %v1172 = vrot.slane %v1171, 1
    %v1173 = vadd.f32 %v1171, %v1172
    %v1174 = vrcp.pop %v1173
    %v1175 = vmul.f32 %v1164, %v163
    %v1176 = vmul.f32 %v1166, %v164
    %v1177 = vadd.f32 %v1175, %v1176
    %v1178 = vrot.slane %v1177, 4
    %v1179 = vadd.f32 %v1177, %v1178
    %v1180 = vrot.slane %v1179, 2
    %v1181 = vadd.f32 %v1179, %v1180
    %v1182 = vrot.slane %v1181, 1
    %v1183 = vadd.f32 %v1181, %v1182
    %v1184 = vmul.f32 %v1183, %v1174
    %v1185 = vmul.f32 %v1184, %v316
    %v1186 = vadd.f32 %v1185, 0.0
    %v1187 = vmul.f32 %v1164, %v177
    %v1188 = vmul.f32 %v1166, %v178
    %v1189 = vadd.f32 %v1187, %v1188
    %v1190 = vrot.slane %v1189, 4
    %v1191 = vadd.f32 %v1189, %v1190
    %v1192 = vrot.slane %v1191, 2
    %v1193 = vadd.f32 %v1191, %v1192
    %v1194 = vrot.slane %v1193, 1
    %v1195 = vadd.f32 %v1193, %v1194
    %v1196 = vmul.f32 %v1195, %v1174
    %v1197 = vmul.f32 %v1196, %v330
    %v1198 = vadd.f32 %v1186, %v1197
    %v1199 = vlaneseq
    %v1200 = vshrl.u32 %v1199, 7
    %v1201 = vsub.s32 7, %v1200
    %v1202 = vrot.slane %v191, %v1201
    %v1203 = vmul.f32 %v1202, %v221
    %v1204 = vmul.f32 %v1202, %v222
    %v1205 = vlaneseq
    %v1206 = vshrl.u32 %v1205, 7
    %v1207 = vsub.s32 7, %v1206
    %v1208 = vrot.slane %v205, %v1207
    %v1209 = vmul.f32 %v1208, %v237
    %v1210 = vmul.f32 %v1208, %v238
    %v1211 = vadd.f32 %v1203, %v1209
    %v1212 = vadd.f32 %v1204, %v1210
    %v1213 = vmul.f32 %v1211, 0.70710677
    %v1214 = vmul.f32 %v1212, 0.70710677
    %v1215 = vmax.f32 %v1213, %v1214
    %v1216 = vrot.slane %v1215, 4
    %v1217 = vmax.f32 %v1215, %v1216
    %v1218 = vrot.slane %v1217, 2
    %v1219 = vmax.f32 %v1217, %v1218
    %v1220 = vrot.slane %v1219, 1
    %v1221 = vmax.f32 %v1219, %v1220
    %v1222 = vsub.f32 %v1213, %v1221
    %v1223 = vsub.f32 %v1214, %v1221
    %v1224 = vmul.f32 %v1222, 1.442695
    %v1225 = vpow.pop %v1224
    %v1226 = vmul.f32 %v1223, 1.442695
    %v1227 = vpow.pop %v1226
    %v1228 = vadd.f32 %v1225, %v1227
    %v1229 = vrot.slane %v1228, 4
    %v1230 = vadd.f32 %v1228, %v1229
    %v1231 = vrot.slane %v1230, 2
    %v1232 = vadd.f32 %v1230, %v1231
    %v1233 = vrot.slane %v1232, 1
    %v1234 = vadd.f32 %v1232, %v1233
    %v1235 = vrcp.pop %v1234
    %v1236 = vmul.f32 %v1225, %v251
    %v1237 = vmul.f32 %v1227, %v252
    %v1238 = vadd.f32 %v1236, %v1237
    %v1239 = vrot.slane %v1238, 4
    %v1240 = vadd.f32 %v1238, %v1239
    %v1241 = vrot.slane %v1240, 2
    %v1242 = vadd.f32 %v1240, %v1241
    %v1243 = vrot.slane %v1242, 1
    %v1244 = vadd.f32 %v1242, %v1243
    %v1245 = vmul.f32 %v1244, %v1235
    %v1246 = vmul.f32 %v1245, %v381
    %v1247 = vadd.f32 %v1198, %v1246
    %v1248 = vmul.f32 %v1225, %v265
    %v1249 = vmul.f32 %v1227, %v266
    %v1250 = vadd.f32 %v1248, %v1249
    %v1251 = vrot.slane %v1250, 4
    %v1252 = vadd.f32 %v1250, %v1251
    %v1253 = vrot.slane %v1252, 2
    %v1254 = vadd.f32 %v1252, %v1253
    %v1255 = vrot.slane %v1254, 1
    %v1256 = vadd.f32 %v1254, %v1255
    %v1257 = vmul.f32 %v1256, %v1235
    %v1258 = vmul.f32 %v1257, %v395
    %v1259 = vadd.f32 %v1247, %v1258
    %v1260 = vadd.f32 %v1259, %v398
    %v1261 = vlaneseq
    %v1262 = vshrl.u32 %v1261, 7
    %v1263 = vsub.s32 0, %v1262
    %v1264 = vrot.slane %v94, %v1263
    %v1265 = vmul.f32 %v1264, %v133
    %v1266 = vmul.f32 %v1264, %v134
    %v1267 = vlaneseq
    %v1268 = vshrl.u32 %v1267, 7
    %v1269 = vsub.s32 0, %v1268
    %v1270 = vrot.slane %v108, %v1269
    %v1271 = vmul.f32 %v1270, %v149
    %v1272 = vmul.f32 %v1270, %v150
    %v1273 = vadd.f32 %v1265, %v1271
    %v1274 = vadd.f32 %v1266, %v1272
    %v1275 = vmul.f32 %v1273, 0.70710677
    %v1276 = vmul.f32 %v1274, 0.70710677
    %v1277 = vmax.f32 %v1275, %v1276
    %v1278 = vrot.slane %v1277, 4
    %v1279 = vmax.f32 %v1277, %v1278
    %v1280 = vrot.slane %v1279, 2
    %v1281 = vmax.f32 %v1279, %v1280
    %v1282 = vrot.slane %v1281, 1
    %v1283 = vmax.f32 %v1281, %v1282
    %v1284 = vsub.f32 %v1275, %v1283
    %v1285 = vsub.f32 %v1276, %v1283
    %v1286 = vmul.f32 %v1284, 1.442695
    %v1287 = vpow.pop %v1286
    %v1288 = vmul.f32 %v1285, 1.442695
    %v1289 = vpow.pop %v1288
    %v1290 = vadd.f32 %v1287, %v1289
    %v1291 = vrot.slane %v1290, 4
    %v1292 = vadd.f32 %v1290, %v1291
    %v1293 = vrot.slane %v1292, 2
    %v1294 = vadd.f32 %v1292, %v1293
    %v1295 = vrot.slane %v1294, 1
    %v1296 = vadd.f32 %v1294, %v1295
    %v1297 = vrcp.pop %v1296
    %v1298 = vmul.f32 %v1287, %v163
    %v1299 = vmul.f32 %v1289, %v164
    %v1300 = vadd.f32 %v1298, %v1299
    %v1301 = vrot.slane %v1300, 4
    %v1302 = vadd.f32 %v1300, %v1301
    %v1303 = vrot.slane %v1302, 2
    %v1304 = vadd.f32 %v1302, %v1303
    %v1305 = vrot.slane %v1304, 1
    %v1306 = vadd.f32 %v1304, %v1305
    %v1307 = vmul.f32 %v1306, %v1297
    %v1308 = vmul.f32 %v1307, %v316
    %v1309 = vadd.f32 %v1308, 0.0
    %v1310 = vmul.f32 %v1287, %v177
    %v1311 = vmul.f32 %v1289, %v178
    %v1312 = vadd.f32 %v1310, %v1311
    %v1313 = vrot.slane %v1312, 4
    %v1314 = vadd.f32 %v1312, %v1313
    %v1315 = vrot.slane %v1314, 2
    %v1316 = vadd.f32 %v1314, %v1315
    %v1317 = vrot.slane %v1316, 1
    %v1318 = vadd.f32 %v1316, %v1317
    %v1319 = vmul.f32 %v1318, %v1297
    %v1320 = vmul.f32 %v1319, %v330
    %v1321 = vadd.f32 %v1309, %v1320
    %v1322 = vlaneseq
    %v1323 = vshrl.u32 %v1322, 7
    %v1324 = vsub.s32 0, %v1323
    %v1325 = vrot.slane %v192, %v1324
    %v1326 = vmul.f32 %v1325, %v221
    %v1327 = vmul.f32 %v1325, %v222
    %v1328 = vlaneseq
    %v1329 = vshrl.u32 %v1328, 7
    %v1330 = vsub.s32 0, %v1329
    %v1331 = vrot.slane %v206, %v1330
    %v1332 = vmul.f32 %v1331, %v237
    %v1333 = vmul.f32 %v1331, %v238
    %v1334 = vadd.f32 %v1326, %v1332
    %v1335 = vadd.f32 %v1327, %v1333
    %v1336 = vmul.f32 %v1334, 0.70710677
    %v1337 = vmul.f32 %v1335, 0.70710677
    %v1338 = vmax.f32 %v1336, %v1337
    %v1339 = vrot.slane %v1338, 4
    %v1340 = vmax.f32 %v1338, %v1339
    %v1341 = vrot.slane %v1340, 2
    %v1342 = vmax.f32 %v1340, %v1341
    %v1343 = vrot.slane %v1342, 1
    %v1344 = vmax.f32 %v1342, %v1343
    %v1345 = vsub.f32 %v1336, %v1344
    %v1346 = vsub.f32 %v1337, %v1344
    %v1347 = vmul.f32 %v1345, 1.442695
    %v1348 = vpow.pop %v1347
    %v1349 = vmul.f32 %v1346, 1.442695
    %v1350 = vpow.pop %v1349
    %v1351 = vadd.f32 %v1348, %v1350
    %v1352 = vrot.slane %v1351, 4
    %v1353 = vadd.f32 %v1351, %v1352
    %v1354 = vrot.slane %v1353, 2
    %v1355 = vadd.f32 %v1353, %v1354
    %v1356 = vrot.slane %v1355, 1
    %v1357 = vadd.f32 %v1355, %v1356
    %v1358 = vrcp.pop %v1357
    %v1359 = vmul.f32 %v1348, %v251
    %v1360 = vmul.f32 %v1350, %v252
    %v1361 = vadd.f32 %v1359, %v1360
    %v1362 = vrot.slane %v1361, 4
    %v1363 = vadd.f32 %v1361, %v1362
    %v1364 = vrot.slane %v1363, 2
    %v1365 = vadd.f32 %v1363, %v1364
    %v1366 = vrot.slane %v1365, 1
    %v1367 = vadd.f32 %v1365, %v1366
    %v1368 = vmul.f32 %v1367, %v1358
    %v1369 = vmul.f32 %v1368, %v381
    %v1370 = vadd.f32 %v1321, %v1369
    %v1371 = vmul.f32 %v1348, %v265
    %v1372 = vmul.f32 %v1350, %v266
    %v1373 = vadd.f32 %v1371, %v1372
    %v1374 = vrot.slane %v1373, 4
    %v1375 = vadd.f32 %v1373, %v1374
    %v1376 = vrot.slane %v1375, 2
    %v1377 = vadd.f32 %v1375, %v1376
    %v1378 = vrot.slane %v1377, 1
    %v1379 = vadd.f32 %v1377, %v1378
    %v1380 = vmul.f32 %v1379, %v1358
    %v1381 = vmul.f32 %v1380, %v395
    %v1382 = vadd.f32 %v1370, %v1381
    %v1383 = vadd.f32 %v1382, %v398
    %v1384 = vlaneseq
    %v1385 = vshrl.u32 %v1384, 7
    %v1386 = vsub.s32 1, %v1385
    %v1387 = vrot.slane %v94, %v1386
    %v1388 = vmul.f32 %v1387, %v133
    %v1389 = vmul.f32 %v1387, %v134
    %v1390 = vlaneseq
    %v1391 = vshrl.u32 %v1390, 7
    %v1392 = vsub.s32 1, %v1391
    %v1393 = vrot.slane %v108, %v1392
    %v1394 = vmul.f32 %v1393, %v149
    %v1395 = vmul.f32 %v1393, %v150
    %v1396 = vadd.f32 %v1388, %v1394
    %v1397 = vadd.f32 %v1389, %v1395
    %v1398 = vmul.f32 %v1396, 0.70710677
    %v1399 = vmul.f32 %v1397, 0.70710677
    %v1400 = vmax.f32 %v1398, %v1399
    %v1401 = vrot.slane %v1400, 4
    %v1402 = vmax.f32 %v1400, %v1401
    %v1403 = vrot.slane %v1402, 2
    %v1404 = vmax.f32 %v1402, %v1403
    %v1405 = vrot.slane %v1404, 1
    %v1406 = vmax.f32 %v1404, %v1405
    %v1407 = vsub.f32 %v1398, %v1406
    %v1408 = vsub.f32 %v1399, %v1406
    %v1409 = vmul.f32 %v1407, 1.442695
    %v1410 = vpow.pop %v1409
    %v1411 = vmul.f32 %v1408, 1.442695
    %v1412 = vpow.pop %v1411
    %v1413 = vadd.f32 %v1410, %v1412
    %v1414 = vrot.slane %v1413, 4
    %v1415 = vadd.f32 %v1413, %v1414
    %v1416 = vrot.slane %v1415, 2
    %v1417 = vadd.f32 %v1415, %v1416
    %v1418 = vrot.slane %v1417, 1
    %v1419 = vadd.f32 %v1417, %v1418
    %v1420 = vrcp.pop %v1419
    %v1421 = vmul.f32 %v1410, %v163
    %v1422 = vmul.f32 %v1412, %v164
    %v1423 = vadd.f32 %v1421, %v1422
    %v1424 = vrot.slane %v1423, 4
    %v1425 = vadd.f32 %v1423, %v1424
    %v1426 = vrot.slane %v1425, 2
    %v1427 = vadd.f32 %v1425, %v1426
    %v1428 = vrot.slane %v1427, 1
    %v1429 = vadd.f32 %v1427, %v1428
    %v1430 = vmul.f32 %v1429, %v1420
    %v1431 = vmul.f32 %v1430, %v316
    %v1432 = vadd.f32 %v1431, 0.0
    %v1433 = vmul.f32 %v1410, %v177
    %v1434 = vmul.f32 %v1412, %v178
    %v1435 = vadd.f32 %v1433, %v1434
    %v1436 = vrot.slane %v1435, 4
    %v1437 = vadd.f32 %v1435, %v1436
    %v1438 = vrot.slane %v1437, 2
    %v1439 = vadd.f32 %v1437, %v1438
    %v1440 = vrot.slane %v1439, 1
    %v1441 = vadd.f32 %v1439, %v1440
    %v1442 = vmul.f32 %v1441, %v1420
    %v1443 = vmul.f32 %v1442, %v330
    %v1444 = vadd.f32 %v1432, %v1443
    %v1445 = vlaneseq
    %v1446 = vshrl.u32 %v1445, 7
    %v1447 = vsub.s32 1, %v1446
    %v1448 = vrot.slane %v192, %v1447
    %v1449 = vmul.f32 %v1448, %v221
    %v1450 = vmul.f32 %v1448, %v222
    %v1451 = vlaneseq
    %v1452 = vshrl.u32 %v1451, 7
    %v1453 = vsub.s32 1, %v1452
    %v1454 = vrot.slane %v206, %v1453
    %v1455 = vmul.f32 %v1454, %v237
    %v1456 = vmul.f32 %v1454, %v238
    %v1457 = vadd.f32 %v1449, %v1455
    %v1458 = vadd.f32 %v1450, %v1456
    %v1459 = vmul.f32 %v1457, 0.70710677
    %v1460 = vmul.f32 %v1458, 0.70710677
    %v1461 = vmax.f32 %v1459, %v1460
    %v1462 = vrot.slane %v1461, 4
    %v1463 = vmax.f32 %v1461, %v1462
    %v1464 = vrot.slane %v1463, 2
    %v1465 = vmax.f32 %v1463, %v1464
    %v1466 = vrot.slane %v1465, 1
    %v1467 = vmax.f32 %v1465, %v1466
    %v1468 = vsub.f32 %v1459, %v1467
    %v1469 = vsub.f32 %v1460, %v1467
    %v1470 = vmul.f32 %v1468, 1.442695
    %v1471 = vpow.pop %v1470
    %v1472 = vmul.f32 %v1469, 1.442695
    %v1473 = vpow.pop %v1472
    %v1474 = vadd.f32 %v1471, %v1473
    %v1475 = vrot.slane %v1474, 4
    %v1476 = vadd.f32 %v1474, %v1475
    %v1477 = vrot.slane %v1476, 2
    %v1478 = vadd.f32 %v1476, %v1477
    %v1479 = vrot.slane %v1478, 1
    %v1480 = vadd.f32 %v1478, %v1479
    %v1481 = vrcp.pop %v1480
    %v1482 = vmul.f32 %v1471, %v251
    %v1483 = vmul.f32 %v1473, %v252
    %v1484 = vadd.f32 %v1482, %v1483
    %v1485 = vrot.slane %v1484, 4
    %v1486 = vadd.f32 %v1484, %v1485
    %v1487 = vrot.slane %v1486, 2
    %v1488 = vadd.f32 %v1486, %v1487
    %v1489 = vrot.slane %v1488, 1
    %v1490 = vadd.f32 %v1488, %v1489
    %v1491 = vmul.f32 %v1490, %v1481
    %v1492 = vmul.f32 %v1491, %v381
    %v1493 = vadd.f32 %v1444, %v1492
    %v1494 = vmul.f32 %v1471, %v265
    %v1495 = vmul.f32 %v1473, %v266
    %v1496 = vadd.f32 %v1494, %v1495
    %v1497 = vrot.slane %v1496, 4
    %v1498 = vadd.f32 %v1496, %v1497
    %v1499 = vrot.slane %v1498, 2
    %v1500 = vadd.f32 %v1498, %v1499
    %v1501 = vrot.slane %v1500, 1
    %v1502 = vadd.f32 %v1500, %v1501
    %v1503 = vmul.f32 %v1502, %v1481
    %v1504 = vmul.f32 %v1503, %v395
    %v1505 = vadd.f32 %v1493, %v1504
    %v1506 = vadd.f32 %v1505, %v398
    %v1507 = vlaneseq
    %v1508 = vshrl.u32 %v1507, 7
    %v1509 = vsub.s32 2, %v1508
    %v1510 = vrot.slane %v94, %v1509
    %v1511 = vmul.f32 %v1510, %v133
    %v1512 = vmul.f32 %v1510, %v134
    %v1513 = vlaneseq
    %v1514 = vshrl.u32 %v1513, 7
    %v1515 = vsub.s32 2, %v1514
    %v1516 = vrot.slane %v108, %v1515
    %v1517 = vmul.f32 %v1516, %v149
    %v1518 = vmul.f32 %v1516, %v150
    %v1519 = vadd.f32 %v1511, %v1517
    %v1520 = vadd.f32 %v1512, %v1518
    %v1521 = vmul.f32 %v1519, 0.70710677
    %v1522 = vmul.f32 %v1520, 0.70710677
    %v1523 = vmax.f32 %v1521, %v1522
    %v1524 = vrot.slane %v1523, 4
    %v1525 = vmax.f32 %v1523, %v1524
    %v1526 = vrot.slane %v1525, 2
    %v1527 = vmax.f32 %v1525, %v1526
    %v1528 = vrot.slane %v1527, 1
    %v1529 = vmax.f32 %v1527, %v1528
    %v1530 = vsub.f32 %v1521, %v1529
    %v1531 = vsub.f32 %v1522, %v1529
    %v1532 = vmul.f32 %v1530, 1.442695
    %v1533 = vpow.pop %v1532
    %v1534 = vmul.f32 %v1531, 1.442695
    %v1535 = vpow.pop %v1534
    %v1536 = vadd.f32 %v1533, %v1535
    %v1537 = vrot.slane %v1536, 4
    %v1538 = vadd.f32 %v1536, %v1537
    %v1539 = vrot.slane %v1538, 2
    %v1540 = vadd.f32 %v1538, %v1539
    %v1541 = vrot.slane %v1540, 1
    %v1542 = vadd.f32 %v1540, %v1541
    %v1543 = vrcp.pop %v1542
    %v1544 = vmul.f32 %v1533, %v163
    %v1545 = vmul.f32 %v1535, %v164
    %v1546 = vadd.f32 %v1544, %v1545
    %v1547 = vrot.slane %v1546, 4
    %v1548 = vadd.f32 %v1546, %v1547
    %v1549 = vrot.slane %v1548, 2
    %v1550 = vadd.f32 %v1548, %v1549
    %v1551 = vrot.slane %v1550, 1
    %v1552 = vadd.f32 %v1550, %v1551
    %v1553 = vmul.f32 %v1552, %v1543
    %v1554 = vmul.f32 %v1553, %v316
    %v1555 = vadd.f32 %v1554, 0.0
    %v1556 = vmul.f32 %v1533, %v177
    %v1557 = vmul.f32 %v1535, %v178
    %v1558 = vadd.f32 %v1556, %v1557
    %v1559 = vrot.slane %v1558, 4
    %v1560 = vadd.f32 %v1558, %v1559
    %v1561 = vrot.slane %v1560, 2
    %v1562 = vadd.f32 %v1560, %v1561
    %v1563 = vrot.slane %v1562, 1
    %v1564 = vadd.f32 %v1562, %v1563
    %v1565 = vmul.f32 %v1564, %v1543
    %v1566 = vmul.f32 %v1565, %v330
    %v1567 = vadd.f32 %v1555, %v1566
    %v1568 = vlaneseq
    %v1569 = vshrl.u32 %v1568, 7
    %v1570 = vsub.s32 2, %v1569
    %v1571 = vrot.slane %v192, %v1570
    %v1572 = vmul.f32 %v1571, %v221
    %v1573 = vmul.f32 %v1571, %v222
    %v1574 = vlaneseq
    %v1575 = vshrl.u32 %v1574, 7
    %v1576 = vsub.s32 2, %v1575
    %v1577 = vrot.slane %v206, %v1576
    %v1578 = vmul.f32 %v1577, %v237
    %v1579 = vmul.f32 %v1577, %v238
    %v1580 = vadd.f32 %v1572, %v1578
    %v1581 = vadd.f32 %v1573, %v1579
    %v1582 = vmul.f32 %v1580, 0.70710677
    %v1583 = vmul.f32 %v1581, 0.70710677
    %v1584 = vmax.f32 %v1582, %v1583
    %v1585 = vrot.slane %v1584, 4
    %v1586 = vmax.f32 %v1584, %v1585
    %v1587 = vrot.slane %v1586, 2
    %v1588 = vmax.f32 %v1586, %v1587
    %v1589 = vrot.slane %v1588, 1
    %v1590 = vmax.f32 %v1588, %v1589
    %v1591 = vsub.f32 %v1582, %v1590
    %v1592 = vsub.f32 %v1583, %v1590
    %v1593 = vmul.f32 %v1591, 1.442695
    %v1594 = vpow.pop %v1593
    %v1595 = vmul.f32 %v1592, 1.442695
    %v1596 = vpow.pop %v1595
    %v1597 = vadd.f32 %v1594, %v1596
    %v1598 = vrot.slane %v1597, 4
    %v1599 = vadd.f32 %v1597, %v1598
    %v1600 = vrot.slane %v1599, 2
    %v1601 = vadd.f32 %v1599, %v1600
    %v1602 = vrot.slane %v1601, 1
    %v1603 = vadd.f32 %v1601, %v1602
    %v1604 = vrcp.pop %v1603
    %v1605 = vmul.f32 %v1594, %v251
    %v1606 = vmul.f32 %v1596, %v252
    %v1607 = vadd.f32 %v1605, %v1606
    %v1608 = vrot.slane %v1607, 4
    %v1609 = vadd.f32 %v1607, %v1608
    %v1610 = vrot.slane %v1609, 2
    %v1611 = vadd.f32 %v1609, %v1610
    %v1612 = vrot.slane %v1611, 1
    %v1613 = vadd.f32 %v1611, %v1612
    %v1614 = vmul.f32 %v1613, %v1604
    %v1615 = vmul.f32 %v1614, %v381
    %v1616 = vadd.f32 %v1567, %v1615
    %v1617 = vmul.f32 %v1594, %v265
    %v1618 = vmul.f32 %v1596, %v266
    %v1619 = vadd.f32 %v1617, %v1618
    %v1620 = vrot.slane %v1619, 4
    %v1621 = vadd.f32 %v1619, %v1620
    %v1622 = vrot.slane %v1621, 2
    %v1623 = vadd.f32 %v1621, %v1622
    %v1624 = vrot.slane %v1623, 1
    %v1625 = vadd.f32 %v1623, %v1624
    %v1626 = vmul.f32 %v1625, %v1604
    %v1627 = vmul.f32 %v1626, %v395
    %v1628 = vadd.f32 %v1616, %v1627
    %v1629 = vadd.f32 %v1628, %v398
    %v1630 = vlaneseq
    %v1631 = vshrl.u32 %v1630, 7
    %v1632 = vsub.s32 3, %v1631
    %v1633 = vrot.slane %v94, %v1632
    %v1634 = vmul.f32 %v1633, %v133
    %v1635 = vmul.f32 %v1633, %v134
    %v1636 = vlaneseq
    %v1637 = vshrl.u32 %v1636, 7
    %v1638 = vsub.s32 3, %v1637
    %v1639 = vrot.slane %v108, %v1638
    %v1640 = vmul.f32 %v1639, %v149
    %v1641 = vmul.f32 %v1639, %v150
    %v1642 = vadd.f32 %v1634, %v1640
    %v1643 = vadd.f32 %v1635, %v1641
    %v1644 = vmul.f32 %v1642, 0.70710677
    %v1645 = vmul.f32 %v1643, 0.70710677
    %v1646 = vmax.f32 %v1644, %v1645
    %v1647 = vrot.slane %v1646, 4
    %v1648 = vmax.f32 %v1646, %v1647
    %v1649 = vrot.slane %v1648, 2
    %v1650 = vmax.f32 %v1648, %v1649
    %v1651 = vrot.slane %v1650, 1
    %v1652 = vmax.f32 %v1650, %v1651
    %v1653 = vsub.f32 %v1644, %v1652
    %v1654 = vsub.f32 %v1645, %v1652
    %v1655 = vmul.f32 %v1653, 1.442695
    %v1656 = vpow.pop %v1655
    %v1657 = vmul.f32 %v1654, 1.442695
    %v1658 = vpow.pop %v1657
    %v1659 = vadd.f32 %v1656, %v1658
    %v1660 = vrot.slane %v1659, 4
    %v1661 = vadd.f32 %v1659, %v1660
    %v1662 = vrot.slane %v1661, 2
    %v1663 = vadd.f32 %v1661, %v1662
    %v1664 = vrot.slane %v1663, 1
    %v1665 = vadd.f32 %v1663, %v1664
    %v1666 = vrcp.pop %v1665
    %v1667 = vmul.f32 %v1656, %v163
    %v1668 = vmul.f32 %v1658, %v164
    %v1669 = vadd.f32 %v1667, %v1668
    %v1670 = vrot.slane %v1669, 4
    %v1671 = vadd.f32 %v1669, %v1670
    %v1672 = vrot.slane %v1671, 2
    %v1673 = vadd.f32 %v1671, %v1672
    %v1674 = vrot.slane %v1673, 1
    %v1675 = vadd.f32 %v1673, %v1674
    %v1676 = vmul.f32 %v1675, %v1666
    %v1677 = vmul.f32 %v1676, %v316
    %v1678 = vadd.f32 %v1677, 0.0
    %v1679 = vmul.f32 %v1656, %v177
    %v1680 = vmul.f32 %v1658, %v178
    %v1681 = vadd.f32 %v1679, %v1680
    %v1682 = vrot.slane %v1681, 4
    %v1683 = vadd.f32 %v1681, %v1682
    %v1684 = vrot.slane %v1683, 2
    %v1685 = vadd.f32 %v1683, %v1684
    %v1686 = vrot.slane %v1685, 1
    %v1687 = vadd.f32 %v1685, %v1686
    %v1688 = vmul.f32 %v1687, %v1666
    %v1689 = vmul.f32 %v1688, %v330
    %v1690 = vadd.f32 %v1678, %v1689
    %v1691 = vlaneseq
    %v1692 = vshrl.u32 %v1691, 7
    %v1693 = vsub.s32 3, %v1692
    %v1694 = vrot.slane %v192, %v1693
    %v1695 = vmul.f32 %v1694, %v221
    %v1696 = vmul.f32 %v1694, %v222
    %v1697 = vlaneseq
    %v1698 = vshrl.u32 %v1697, 7
    %v1699 = vsub.s32 3, %v1698
    %v1700 = vrot.slane %v206, %v1699
    %v1701 = vmul.f32 %v1700, %v237
    %v1702 = vmul.f32 %v1700, %v238
    %v1703 = vadd.f32 %v1695, %v1701
    %v1704 = vadd.f32 %v1696, %v1702
    %v1705 = vmul.f32 %v1703, 0.70710677
    %v1706 = vmul.f32 %v1704, 0.70710677
    %v1707 = vmax.f32 %v1705, %v1706
    %v1708 = vrot.slane %v1707, 4
    %v1709 = vmax.f32 %v1707, %v1708
    %v1710 = vrot.slane %v1709, 2
    %v1711 = vmax.f32 %v1709, %v1710
    %v1712 = vrot.slane %v1711, 1
    %v1713 = vmax.f32 %v1711, %v1712
    %v1714 = vsub.f32 %v1705, %v1713
    %v1715 = vsub.f32 %v1706, %v1713
    %v1716 = vmul.f32 %v1714, 1.442695
    %v1717 = vpow.pop %v1716
    %v1718 = vmul.f32 %v1715, 1.442695
    %v1719 = vpow.pop %v1718
    %v1720 = vadd.f32 %v1717, %v1719
    %v1721 = vrot.slane %v1720, 4
    %v1722 = vadd.f32 %v1720, %v1721
    %v1723 = vrot.slane %v1722, 2
    %v1724 = vadd.f32 %v1722, %v1723
    %v1725 = vrot.slane %v1724, 1
    %v1726 = vadd.f32 %v1724, %v1725
    %v1727 = vrcp.pop %v1726
    %v1728 = vmul.f32 %v1717, %v251
    %v1729 = vmul.f32 %v1719, %v252
    %v1730 = vadd.f32 %v1728, %v1729
    %v1731 = vrot.slane %v1730, 4
    %v1732 = vadd.f32 %v1730, %v1731
    %v1733 = vrot.slane %v1732, 2
    %v1734 = vadd.f32 %v1732, %v1733
    %v1735 = vrot.slane %v1734, 1
    %v1736 = vadd.f32 %v1734, %v1735
    %v1737 = vmul.f32 %v1736, %v1727
    %v1738 = vmul.f32 %v1737, %v381
    %v1739 = vadd.f32 %v1690, %v1738
    %v1740 = vmul.f32 %v1717, %v265
    %v1741 = vmul.f32 %v1719, %v266
    %v1742 = vadd.f32 %v1740, %v1741
    %v1743 = vrot.slane %v1742, 4
    %v1744 = vadd.f32 %v1742, %v1743
    %v1745 = vrot.slane %v1744, 2
    %v1746 = vadd.f32 %v1744, %v1745
    %v1747 = vrot.slane %v1746, 1
    %v1748 = vadd.f32 %v1746, %v1747
    %v1749 = vmul.f32 %v1748, %v1727
    %v1750 = vmul.f32 %v1749, %v395
    %v1751 = vadd.f32 %v1739, %v1750
    %v1752 = vadd.f32 %v1751, %v398
    %v1753 = vlaneseq
    %v1754 = vshrl.u32 %v1753, 7
    %v1755 = vsub.s32 4, %v1754
    %v1756 = vrot.slane %v94, %v1755
    %v1757 = vmul.f32 %v1756, %v133
    %v1758 = vmul.f32 %v1756, %v134
    %v1759 = vlaneseq
    %v1760 = vshrl.u32 %v1759, 7
    %v1761 = vsub.s32 4, %v1760
    %v1762 = vrot.slane %v108, %v1761
    %v1763 = vmul.f32 %v1762, %v149
    %v1764 = vmul.f32 %v1762, %v150
    %v1765 = vadd.f32 %v1757, %v1763
    %v1766 = vadd.f32 %v1758, %v1764
    %v1767 = vmul.f32 %v1765, 0.70710677
    %v1768 = vmul.f32 %v1766, 0.70710677
    %v1769 = vmax.f32 %v1767, %v1768
    %v1770 = vrot.slane %v1769, 4
    %v1771 = vmax.f32 %v1769, %v1770
    %v1772 = vrot.slane %v1771, 2
    %v1773 = vmax.f32 %v1771, %v1772
    %v1774 = vrot.slane %v1773, 1
    %v1775 = vmax.f32 %v1773, %v1774
    %v1776 = vsub.f32 %v1767, %v1775
    %v1777 = vsub.f32 %v1768, %v1775
    %v1778 = vmul.f32 %v1776, 1.442695
    %v1779 = vpow.pop %v1778
    %v1780 = vmul.f32 %v1777, 1.442695
    %v1781 = vpow.pop %v1780
    %v1782 = vadd.f32 %v1779, %v1781
    %v1783 = vrot.slane %v1782, 4
    %v1784 = vadd.f32 %v1782, %v1783
    %v1785 = vrot.slane %v1784, 2
    %v1786 = vadd.f32 %v1784, %v1785
    %v1787 = vrot.slane %v1786, 1
    %v1788 = vadd.f32 %v1786, %v1787
    %v1789 = vrcp.pop %v1788
    %v1790 = vmul.f32 %v1779, %v163
    %v1791 = vmul.f32 %v1781, %v164
    %v1792 = vadd.f32 %v1790, %v1791
    %v1793 = vrot.slane %v1792, 4
    %v1794 = vadd.f32 %v1792, %v1793
    %v1795 = vrot.slane %v1794, 2
    %v1796 = vadd.f32 %v1794, %v1795
    %v1797 = vrot.slane %v1796, 1
    %v1798 = vadd.f32 %v1796, %v1797
    %v1799 = vmul.f32 %v1798, %v1789
    %v1800 = vmul.f32 %v1799, %v316
    %v1801 = vadd.f32 %v1800, 0.0
    %v1802 = vmul.f32 %v1779, %v177
    %v1803 = vmul.f32 %v1781, %v178
    %v1804 = vadd.f32 %v1802, %v1803
    %v1805 = vrot.slane %v1804, 4
    %v1806 = vadd.f32 %v1804, %v1805
    %v1807 = vrot.slane %v1806, 2
    %v1808 = vadd.f32 %v1806, %v1807
    %v1809 = vrot.slane %v1808, 1
    %v1810 = vadd.f32 %v1808, %v1809
    %v1811 = vmul.f32 %v1810, %v1789
    %v1812 = vmul.f32 %v1811, %v330
    %v1813 = vadd.f32 %v1801, %v1812
    %v1814 = vlaneseq
    %v1815 = vshrl.u32 %v1814, 7
    %v1816 = vsub.s32 4, %v1815
    %v1817 = vrot.slane %v192, %v1816
    %v1818 = vmul.f32 %v1817, %v221
    %v1819 = vmul.f32 %v1817, %v222
    %v1820 = vlaneseq
    %v1821 = vshrl.u32 %v1820, 7
    %v1822 = vsub.s32 4, %v1821
    %v1823 = vrot.slane %v206, %v1822
    %v1824 = vmul.f32 %v1823, %v237
    %v1825 = vmul.f32 %v1823, %v238
    %v1826 = vadd.f32 %v1818, %v1824
    %v1827 = vadd.f32 %v1819, %v1825
    %v1828 = vmul.f32 %v1826, 0.70710677
    %v1829 = vmul.f32 %v1827, 0.70710677
    %v1830 = vmax.f32 %v1828, %v1829
    %v1831 = vrot.slane %v1830, 4
    %v1832 = vmax.f32 %v1830, %v1831
    %v1833 = vrot.slane %v1832, 2
    %v1834 = vmax.f32 %v1832, %v1833
    %v1835 = vrot.slane %v1834, 1
    %v1836 = vmax.f32 %v1834, %v1835
    %v1837 = vsub.f32 %v1828, %v1836
    %v1838 = vsub.f32 %v1829, %v1836
    %v1839 = vmul.f32 %v1837, 1.442695
    %v1840 = vpow.pop %v1839
    %v1841 = vmul.f32 %v1838, 1.442695
    %v1842 = vpow.pop %v1841
    %v1843 = vadd.f32 %v1840, %v1842
    %v1844 = vrot.slane %v1843, 4
    %v1845 = vadd.f32 %v1843, %v1844
    %v1846 = vrot.slane %v1845, 2
    %v1847 = vadd.f32 %v1845, %v1846
    %v1848 = vrot.slane %v1847, 1
    %v1849 = vadd.f32 %v1847, %v1848
    %v1850 = vrcp.pop %v1849
    %v1851 = vmul.f32 %v1840, %v251
    %v1852 = vmul.f32 %v1842, %v252
    %v1853 = vadd.f32 %v1851, %v1852
    %v1854 = vrot.slane %v1853, 4
    %v1855 = vadd.f32 %v1853, %v1854
    %v1856 = vrot.slane %v1855, 2
    %v1857 = vadd.f32 %v1855, %v1856
    %v1858 = vrot.slane %v1857, 1
    %v1859 = vadd.f32 %v1857, %v1858
    %v1860 = vmul.f32 %v1859, %v1850
    %v1861 = vmul.f32 %v1860, %v381
    %v1862 = vadd.f32 %v1813, %v1861
    %v1863 = vmul.f32 %v1840, %v265
    %v1864 = vmul.f32 %v1842, %v266
    %v1865 = vadd.f32 %v1863, %v1864
    %v1866 = vrot.slane %v1865, 4
    %v1867 = vadd.f32 %v1865, %v1866
    %v1868 = vrot.slane %v1867, 2
    %v1869 = vadd.f32 %v1867, %v1868
    %v1870 = vrot.slane %v1869, 1
    %v1871 = vadd.f32 %v1869, %v1870
    %v1872 = vmul.f32 %v1871, %v1850
    %v1873 = vmul.f32 %v1872, %v395
    %v1874 = vadd.f32 %v1862, %v1873
    %v1875 = vadd.f32 %v1874, %v398
    %v1876 = vlaneseq
    %v1877 = vshrl.u32 %v1876, 7
    %v1878 = vsub.s32 5, %v1877
    %v1879 = vrot.slane %v94, %v1878
    %v1880 = vmul.f32 %v1879, %v133
    %v1881 = vmul.f32 %v1879, %v134
    %v1882 = vlaneseq
    %v1883 = vshrl.u32 %v1882, 7
    %v1884 = vsub.s32 5, %v1883
    %v1885 = vrot.slane %v108, %v1884
    %v1886 = vmul.f32 %v1885, %v149
    %v1887 = vmul.f32 %v1885, %v150
    %v1888 = vadd.f32 %v1880, %v1886
    %v1889 = vadd.f32 %v1881, %v1887
    %v1890 = vmul.f32 %v1888, 0.70710677
    %v1891 = vmul.f32 %v1889, 0.70710677
    %v1892 = vmax.f32 %v1890, %v1891
    %v1893 = vrot.slane %v1892, 4
    %v1894 = vmax.f32 %v1892, %v1893
    %v1895 = vrot.slane %v1894, 2
    %v1896 = vmax.f32 %v1894, %v1895
    %v1897 = vrot.slane %v1896, 1
    %v1898 = vmax.f32 %v1896, %v1897
    %v1899 = vsub.f32 %v1890, %v1898
    %v1900 = vsub.f32 %v1891, %v1898
    %v1901 = vmul.f32 %v1899, 1.442695
    %v1902 = vpow.pop %v1901
    %v1903 = vmul.f32 %v1900, 1.442695
    %v1904 = vpow.pop %v1903
    %v1905 = vadd.f32 %v1902, %v1904
    %v1906 = vrot.slane %v1905, 4
    %v1907 = vadd.f32 %v1905, %v1906
    %v1908 = vrot.slane %v1907, 2
    %v1909 = vadd.f32 %v1907, %v1908
    %v1910 = vrot.slane %v1909, 1
    %v1911 = vadd.f32 %v1909, %v1910
    %v1912 = vrcp.pop %v1911
    %v1913 = vmul.f32 %v1902, %v163
    %v1914 = vmul.f32 %v1904, %v164
    %v1915 = vadd.f32 %v1913, %v1914
    %v1916 = vrot.slane %v1915, 4
    %v1917 = vadd.f32 %v1915, %v1916
    %v1918 = vrot.slane %v1917, 2
    %v1919 = vadd.f32 %v1917, %v1918
    %v1920 = vrot.slane %v1919, 1
    %v1921 = vadd.f32 %v1919, %v1920
    %v1922 = vmul.f32 %v1921, %v1912
    %v1923 = vmul.f32 %v1922, %v316
    %v1924 = vadd.f32 %v1923, 0.0
    %v1925 = vmul.f32 %v1902, %v177
    %v1926 = vmul.f32 %v1904, %v178
    %v1927 = vadd.f32 %v1925, %v1926
    %v1928 = vrot.slane %v1927, 4
    %v1929 = vadd.f32 %v1927, %v1928
    %v1930 = vrot.slane %v1929, 2
    %v1931 = vadd.f32 %v1929, %v1930
    %v1932 = vrot.slane %v1931, 1
    %v1933 = vadd.f32 %v1931, %v1932
    %v1934 = vmul.f32 %v1933, %v1912
    %v1935 = vmul.f32 %v1934, %v330
    %v1936 = vadd.f32 %v1924, %v1935
    %v1937 = vlaneseq
    %v1938 = vshrl.u32 %v1937, 7
    %v1939 = vsub.s32 5, %v1938
    %v1940 = vrot.slane %v192, %v1939
    %v1941 = vmul.f32 %v1940, %v221
    %v1942 = vmul.f32 %v1940, %v222
    %v1943 = vlaneseq
    %v1944 = vshrl.u32 %v1943, 7
    %v1945 = vsub.s32 5, %v1944
    %v1946 = vrot.slane %v206, %v1945
    %v1947 = vmul.f32 %v1946, %v237
    %v1948 = vmul.f32 %v1946, %v238
    %v1949 = vadd.f32 %v1941, %v1947
    %v1950 = vadd.f32 %v1942, %v1948
    %v1951 = vmul.f32 %v1949, 0.70710677
    %v1952 = vmul.f32 %v1950, 0.70710677
    %v1953 = vmax.f32 %v1951, %v1952
    %v1954 = vrot.slane %v1953, 4
    %v1955 = vmax.f32 %v1953, %v1954
    %v1956 = vrot.slane %v1955, 2
    %v1957 = vmax.f32 %v1955, %v1956
    %v1958 = vrot.slane %v1957, 1
    %v1959 = vmax.f32 %v1957, %v1958
    %v1960 = vsub.f32 %v1951, %v1959
    %v1961 = vsub.f32 %v1952, %v1959
    %v1962 = vmul.f32 %v1960, 1.442695
    %v1963 = vpow.pop %v1962
    %v1964 = vmul.f32 %v1961, 1.442695
    %v1965 = vpow.pop %v1964
    %v1966 = vadd.f32 %v1963, %v1965
    %v1967 = vrot.slane %v1966, 4
    %v1968 = vadd.f32 %v1966, %v1967
    %v1969 = vrot.slane %v1968, 2
    %v1970 = vadd.f32 %v1968, %v1969
    %v1971 = vrot.slane %v1970, 1
    %v1972 = vadd.f32 %v1970, %v1971
    %v1973 = vrcp.pop %v1972
    %v1974 = vmul.f32 %v1963, %v251
    %v1975 = vmul.f32 %v1965, %v252
    %v1976 = vadd.f32 %v1974, %v1975
    %v1977 = vrot.slane %v1976, 4
    %v1978 = vadd.f32 %v1976, %v1977
    %v1979 = vrot.slane %v1978, 2
    %v1980 = vadd.f32 %v1978, %v1979
    %v1981 = vrot.slane %v1980, 1
    %v1982 = vadd.f32 %v1980, %v1981
    %v1983 = vmul.f32 %v1982, %v1973
    %v1984 = vmul.f32 %v1983, %v381
    %v1985 = vadd.f32 %v1936, %v1984
    %v1986 = vmul.f32 %v1963, %v265
    %v1987 = vmul.f32 %v1965, %v266
    %v1988 = vadd.f32 %v1986, %v1987
    %v1989 = vrot.slane %v1988, 4
    %v1990 = vadd.f32 %v1988, %v1989
    %v1991 = vrot.slane %v1990, 2
    %v1992 = vadd.f32 %v1990, %v1991
    %v1993 = vrot.slane %v1992, 1
    %v1994 = vadd.f32 %v1992, %v1993
    %v1995 = vmul.f32 %v1994, %v1973
    %v1996 = vmul.f32 %v1995, %v395
    %v1997 = vadd.f32 %v1985, %v1996
    %v1998 = vadd.f32 %v1997, %v398
    %v1999 = vlaneseq
    %v2000 = vshrl.u32 %v1999, 7
    %v2001 = vsub.s32 6, %v2000
    %v2002 = vrot.slane %v94, %v2001
    %v2003 = vmul.f32 %v2002, %v133
    %v2004 = vmul.f32 %v2002, %v134
    %v2005 = vlaneseq
    %v2006 = vshrl.u32 %v2005, 7
    %v2007 = vsub.s32 6, %v2006
    %v2008 = vrot.slane %v108, %v2007
    %v2009 = vmul.f32 %v2008, %v149
    %v2010 = vmul.f32 %v2008, %v150
    %v2011 = vadd.f32 %v2003, %v2009
    %v2012 = vadd.f32 %v2004, %v2010
    %v2013 = vmul.f32 %v2011, 0.70710677
    %v2014 = vmul.f32 %v2012, 0.70710677
    %v2015 = vmax.f32 %v2013, %v2014
    %v2016 = vrot.slane %v2015, 4
    %v2017 = vmax.f32 %v2015, %v2016
    %v2018 = vrot.slane %v2017, 2
    %v2019 = vmax.f32 %v2017, %v2018
    %v2020 = vrot.slane %v2019, 1
    %v2021 = vmax.f32 %v2019, %v2020
    %v2022 = vsub.f32 %v2013, %v2021
    %v2023 = vsub.f32 %v2014, %v2021
    %v2024 = vmul.f32 %v2022, 1.442695
    %v2025 = vpow.pop %v2024
    %v2026 = vmul.f32 %v2023, 1.442695
    %v2027 = vpow.pop %v2026
    %v2028 = vadd.f32 %v2025, %v2027
    %v2029 = vrot.slane %v2028, 4
    %v2030 = vadd.f32 %v2028, %v2029
    %v2031 = vrot.slane %v2030, 2
    %v2032 = vadd.f32 %v2030, %v2031
    %v2033 = vrot.slane %v2032, 1
    %v2034 = vadd.f32 %v2032, %v2033
    %v2035 = vrcp.pop %v2034
    %v2036 = vmul.f32 %v2025, %v163
    %v2037 = vmul.f32 %v2027, %v164
    %v2038 = vadd.f32 %v2036, %v2037
    %v2039 = vrot.slane %v2038, 4
    %v2040 = vadd.f32 %v2038, %v2039
    %v2041 = vrot.slane %v2040, 2
    %v2042 = vadd.f32 %v2040, %v2041
    %v2043 = vrot.slane %v2042, 1
    %v2044 = vadd.f32 %v2042, %v2043
    %v2045 = vmul.f32 %v2044, %v2035
    %v2046 = vmul.f32 %v2045, %v316
    %v2047 = vadd.f32 %v2046, 0.0
    %v2048 = vmul.f32 %v2025, %v177
    %v2049 = vmul.f32 %v2027, %v178
    %v2050 = vadd.f32 %v2048, %v2049
    %v2051 = vrot.slane %v2050, 4
    %v2052 = vadd.f32 %v2050, %v2051
    %v2053 = vrot.slane %v2052, 2
    %v2054 = vadd.f32 %v2052, %v2053
    %v2055 = vrot.slane %v2054, 1
    %v2056 = vadd.f32 %v2054, %v2055
    %v2057 = vmul.f32 %v2056, %v2035
    %v2058 = vmul.f32 %v2057, %v330
    %v2059 = vadd.f32 %v2047, %v2058
    %v2060 = vlaneseq
    %v2061 = vshrl.u32 %v2060, 7
    %v2062 = vsub.s32 6, %v2061
    %v2063 = vrot.slane %v192, %v2062
    %v2064 = vmul.f32 %v2063, %v221
    %v2065 = vmul.f32 %v2063, %v222
    %v2066 = vlaneseq
    %v2067 = vshrl.u32 %v2066, 7
    %v2068 = vsub.s32 6, %v2067
    %v2069 = vrot.slane %v206, %v2068
    %v2070 = vmul.f32 %v2069, %v237
    %v2071 = vmul.f32 %v2069, %v238
    %v2072 = vadd.f32 %v2064, %v2070
    %v2073 = vadd.f32 %v2065, %v2071
    %v2074 = vmul.f32 %v2072, 0.70710677
    %v2075 = vmul.f32 %v2073, 0.70710677
    %v2076 = vmax.f32 %v2074, %v2075
    %v2077 = vrot.slane %v2076, 4
    %v2078 = vmax.f32 %v2076, %v2077
    %v2079 = vrot.slane %v2078, 2
    %v2080 = vmax.f32 %v2078, %v2079
    %v2081 = vrot.slane %v2080, 1
    %v2082 = vmax.f32 %v2080, %v2081
    %v2083 = vsub.f32 %v2074, %v2082
    %v2084 = vsub.f32 %v2075, %v2082
    %v2085 = vmul.f32 %v2083, 1.442695
    %v2086 = vpow.pop %v2085
    %v2087 = vmul.f32 %v2084, 1.442695
    %v2088 = vpow.pop %v2087
    %v2089 = vadd.f32 %v2086, %v2088
    %v2090 = vrot.slane %v2089, 4
    %v2091 = vadd.f32 %v2089, %v2090
    %v2092 = vrot.slane %v2091, 2
    %v2093 = vadd.f32 %v2091, %v2092
    %v2094 = vrot.slane %v2093, 1
    %v2095 = vadd.f32 %v2093, %v2094
    %v2096 = vrcp.pop %v2095
    %v2097 = vmul.f32 %v2086, %v251
    %v2098 = vmul.f32 %v2088, %v252
    %v2099 = vadd.f32 %v2097, %v2098
    %v2100 = vrot.slane %v2099, 4
    %v2101 = vadd.f32 %v2099, %v2100
    %v2102 = vrot.slane %v2101, 2
    %v2103 = vadd.f32 %v2101, %v2102
    %v2104 = vrot.slane %v2103, 1
    %v2105 = vadd.f32 %v2103, %v2104
    %v2106 = vmul.f32 %v2105, %v2096
    %v2107 = vmul.f32 %v2106, %v381
    %v2108 = vadd.f32 %v2059, %v2107
    %v2109 = vmul.f32 %v2086, %v265
    %v2110 = vmul.f32 %v2088, %v266
    %v2111 = vadd.f32 %v2109, %v2110
    %v2112 = vrot.slane %v2111, 4
    %v2113 = vadd.f32 %v2111, %v2112
    %v2114 = vrot.slane %v2113, 2
    %v2115 = vadd.f32 %v2113, %v2114
    %v2116 = vrot.slane %v2115, 1
    %v2117 = vadd.f32 %v2115, %v2116
    %v2118 = vmul.f32 %v2117, %v2096
    %v2119 = vmul.f32 %v2118, %v395
    %v2120 = vadd.f32 %v2108, %v2119
    %v2121 = vadd.f32 %v2120, %v398
    %v2122 = vlaneseq
    %v2123 = vshrl.u32 %v2122, 7
    %v2124 = vsub.s32 7, %v2123
    %v2125 = vrot.slane %v94, %v2124
    %v2126 = vmul.f32 %v2125, %v133
    %v2127 = vmul.f32 %v2125, %v134
    %v2128 = vlaneseq
    %v2129 = vshrl.u32 %v2128, 7
    %v2130 = vsub.s32 7, %v2129
    %v2131 = vrot.slane %v108, %v2130
    %v2132 = vmul.f32 %v2131, %v149
    %v2133 = vmul.f32 %v2131, %v150
    %v2134 = vadd.f32 %v2126, %v2132
    %v2135 = vadd.f32 %v2127, %v2133
    %v2136 = vmul.f32 %v2134, 0.70710677
    %v2137 = vmul.f32 %v2135, 0.70710677
    %v2138 = vmax.f32 %v2136, %v2137
    %v2139 = vrot.slane %v2138, 4
    %v2140 = vmax.f32 %v2138, %v2139
    %v2141 = vrot.slane %v2140, 2
    %v2142 = vmax.f32 %v2140, %v2141
    %v2143 = vrot.slane %v2142, 1
    %v2144 = vmax.f32 %v2142, %v2143
    %v2145 = vsub.f32 %v2136, %v2144
    %v2146 = vsub.f32 %v2137, %v2144
    %v2147 = vmul.f32 %v2145, 1.442695
    %v2148 = vpow.pop %v2147
    %v2149 = vmul.f32 %v2146, 1.442695
    %v2150 = vpow.pop %v2149
    %v2151 = vadd.f32 %v2148, %v2150
    %v2152 = vrot.slane %v2151, 4
    %v2153 = vadd.f32 %v2151, %v2152
    %v2154 = vrot.slane %v2153, 2
    %v2155 = vadd.f32 %v2153, %v2154
    %v2156 = vrot.slane %v2155, 1
    %v2157 = vadd.f32 %v2155, %v2156
    %v2158 = vrcp.pop %v2157
    %v2159 = vmul.f32 %v2148, %v163
    %v2160 = vmul.f32 %v2150, %v164
    %v2161 = vadd.f32 %v2159, %v2160
    %v2162 = vrot.slane %v2161, 4
    %v2163 = vadd.f32 %v2161, %v2162
    %v2164 = vrot.slane %v2163, 2
    %v2165 = vadd.f32 %v2163, %v2164
    %v2166 = vrot.slane %v2165, 1
    %v2167 = vadd.f32 %v2165, %v2166
    %v2168 = vmul.f32 %v2167, %v2158
    %v2169 = vmul.f32 %v2168, %v316
    %v2170 = vadd.f32 %v2169, 0.0
    %v2171 = vmul.f32 %v2148, %v177
    %v2172 = vmul.f32 %v2150, %v178
    %v2173 = vadd.f32 %v2171, %v2172
    %v2174 = vrot.slane %v2173, 4
    %v2175 = vadd.f32 %v2173, %v2174
    %v2176 = vrot.slane %v2175, 2
    %v2177 = vadd.f32 %v2175, %v2176
    %v2178 = vrot.slane %v2177, 1
    %v2179 = vadd.f32 %v2177, %v2178
    %v2180 = vmul.f32 %v2179, %v2158
    %v2181 = vmul.f32 %v2180, %v330
    %v2182 = vadd.f32 %v2170, %v2181
    %v2183 = vlaneseq
    %v2184 = vshrl.u32 %v2183, 7
    %v2185 = vsub.s32 7, %v2184
    %v2186 = vrot.slane %v192, %v2185
    %v2187 = vmul.f32 %v2186, %v221
    %v2188 = vmul.f32 %v2186, %v222
    %v2189 = vlaneseq
    %v2190 = vshrl.u32 %v2189, 7
    %v2191 = vsub.s32 7, %v2190
    %v2192 = vrot.slane %v206, %v2191
    %v2193 = vmul.f32 %v2192, %v237
    %v2194 = vmul.f32 %v2192, %v238
    %v2195 = vadd.f32 %v2187, %v2193
    %v2196 = vadd.f32 %v2188, %v2194
    %v2197 = vmul.f32 %v2195, 0.70710677
    %v2198 = vmul.f32 %v2196, 0.70710677
    %v2199 = vmax.f32 %v2197, %v2198
    %v2200 = vrot.slane %v2199, 4
    %v2201 = vmax.f32 %v2199, %v2200
    %v2202 = vrot.slane %v2201, 2
    %v2203 = vmax.f32 %v2201, %v2202
    %v2204 = vrot.slane %v2203, 1
    %v2205 = vmax.f32 %v2203, %v2204
    %v2206 = vsub.f32 %v2197, %v2205
    %v2207 = vsub.f32 %v2198, %v2205
    %v2208 = vmul.f32 %v2206, 1.442695
    %v2209 = vpow.pop %v2208
    %v2210 = vmul.f32 %v2207, 1.442695
    %v2211 = vpow.pop %v2210
    %v2212 = vadd.f32 %v2209, %v2211
    %v2213 = vrot.slane %v2212, 4
    %v2214 = vadd.f32 %v2212, %v2213
    %v2215 = vrot.slane %v2214, 2
    %v2216 = vadd.f32 %v2214, %v2215
    %v2217 = vrot.slane %v2216, 1
    %v2218 = vadd.f32 %v2216, %v2217
    %v2219 = vrcp.pop %v2218
    %v2220 = vmul.f32 %v2209, %v251
    %v2221 = vmul.f32 %v2211, %v252
    %v2222 = vadd.f32 %v2220, %v2221
    %v2223 = vrot.slane %v2222, 4
    %v2224 = vadd.f32 %v2222, %v2223
    %v2225 = vrot.slane %v2224, 2
    %v2226 = vadd.f32 %v2224, %v2225
    %v2227 = vrot.slane %v2226, 1
    %v2228 = vadd.f32 %v2226, %v2227
    %v2229 = vmul.f32 %v2228, %v2219
    %v2230 = vmul.f32 %v2229, %v381
    %v2231 = vadd.f32 %v2182, %v2230
    %v2232 = vmul.f32 %v2209, %v265
    %v2233 = vmul.f32 %v2211, %v266
    %v2234 = vadd.f32 %v2232, %v2233
    %v2235 = vrot.slane %v2234, 4
    %v2236 = vadd.f32 %v2234, %v2235
    %v2237 = vrot.slane %v2236, 2
    %v2238 = vadd.f32 %v2236, %v2237
    %v2239 = vrot.slane %v2238, 1
    %v2240 = vadd.f32 %v2238, %v2239
    %v2241 = vmul.f32 %v2240, %v2219
    %v2242 = vmul.f32 %v2241, %v395
    %v2243 = vadd.f32 %v2231, %v2242
    %v2244 = vadd.f32 %v2243, %v398
    %vm2245 = vcmask 1040384
    %v2246 = vsel %vm2245, %v399, %v522
    %vm2247 = vcmask 1041408
    %v2248 = vsel %vm2247, %v2246, %v645
    %vm2249 = vcmask 1042432
    %v2250 = vsel %vm2249, %v2248, %v768
    %vm2251 = vcmask 1043456
    %v2252 = vsel %vm2251, %v2250, %v891
    %vm2253 = vcmask 1044480
    %v2254 = vsel %vm2253, %v2252, %v1014
    %vm2255 = vcmask 1045504
    %v2256 = vsel %vm2255, %v2254, %v1137
    %vm2257 = vcmask 1046528
    %v2258 = vsel %vm2257, %v2256, %v1260
    %v2259 = vsel %vm2245, %v1383, %v1506
    %v2260 = vsel %vm2247, %v2259, %v1629
    %v2261 = vsel %vm2249, %v2260, %v1752
    %v2262 = vsel %vm2251, %v2261, %v1875
    %v2263 = vsel %vm2253, %v2262, %v1998
    %v2264 = vsel %vm2255, %v2263, %v2121
    %v2265 = vsel %vm2257, %v2264, %v2244
    %2266 = vst [vmem:[#allocation11] sm:$0xff] %v2258
    %2267 = vst [vmem:[#allocation11 + $0x8] sm:$0xff] %v2265
    // Predicated region
    $region42: #{tpu_custom_call.1} parent=1 // pred_check
      _
    $region43: #{tpu_custom_call.1} parent=1 // pred_check_branch
      %2269 = sbr.rel (0) target = $region45
    $region44: #{tpu_custom_call.1} parent=1 // pred_region
      %s2271 = ssub.s32 256, 256
      %2272 = vsyncadd [#allocation5], %s2271
      %s2273 = sshll.u32 [#allocation11], 4
      %s2274 = int_to_ptr.vmem [resolvable:$true] %s2273
      %2279 = dma.vmem_to_hbm [thread:$0]  %s2274, 256, %s6, [#allocation5], 128, 128, 8
    $region45: #{tpu_custom_call.1} parent=1 // pred_fallthru
      _
    // Predicated region
    $region46: #{tpu_custom_call.1} parent=1 // pred_check
      _
    $region47: #{tpu_custom_call.1} parent=1 // pred_check_branch
      %2281 = sbr.rel (0) target = $region49
    $region48: #{tpu_custom_call.1} parent=1 // pred_region
      %2282 = dma.done [#allocation5], 256
    $region49: #{tpu_custom_call.1} parent=1 // pred_fallthru
      _
    %2283 = vsyncpa [#allocation4], 1
    %2284 = vsyncpa [#allocation5], 1
    %2285 = vsyncpa [#allocation6], 1
    %2286 = vsyncpa [#allocation9], 1

</llo_original>
